<compile_context>
chip_gen: v7x
topology: tpu7x:2x2x1
jax: 0.10.0
libtpu: 0.0.40
codegen_flags: <defaults>
</compile_context>

<pallas_src>
import functools

import jax
import jax.numpy as jnp
from jax.experimental import pallas as pl
from jax.experimental.pallas import tpu as pltpu


def _gaussian_smearing_kernel(dist_ref, expand_ref, offset_ref, out_ref, *, coeff):
    # dist_ref:   (TILE_G, G)      f32  -- G distances per packed row
    # expand_ref: (G, G*R)         f32  -- one-hot: expand[i, i*R:(i+1)*R] = 1
    # offset_ref: (1, G*R)         f32  -- Gaussian centers, tiled G times
    # out_ref:    (TILE_G, G*R)    f32
    d = dist_ref[...]
    # Repeat each distance R times along lanes via the (idle) MXU. Exact in f32
    # because the one-hot entries are 0.0/1.0 and each output has one term.
    d_rep = jnp.dot(d, expand_ref[...], preferred_element_type=jnp.float32)
    diff = d_rep - offset_ref[...]
    out_ref[...] = jnp.exp(coeff * (diff * diff))


def _round_up(x, m):
    return ((x + m - 1) // m) * m


def _choose_tiling(n_groups, max_groups):
    """Pick (groups_per_step, padded_group_count)."""
    # Single step covering everything: block == full array extent (always legal).
    if n_groups <= max_groups:
        return n_groups, n_groups
    # Largest multiple-of-8 divisor of n_groups: no padding, no output copy.
    t = (max_groups // 8) * 8
    while t >= 8:
        if n_groups % t == 0:
            return t, n_groups
        t -= 8
    # Ragged: pad the group count to a multiple of 64 (<= 63 extra groups) and
    # retry (64 always divides the padded count).
    n_pad = _round_up(n_groups, 64)
    t = (max_groups // 8) * 8
    while t >= 8:
        if n_pad % t == 0:
            return t, n_pad
        t -= 8
    return 64, n_pad  # defensive; unreachable


def gaussian_smearing(dist, *, start=0.0, stop=5.0, resolution=50, width=0.05,
                      group=128, max_groups_per_step=256):
    """Pallas implementation of GaussianSmearing.forward.

    dist: float32 array of arbitrary shape.
    returns: float32 array of shape dist.shape + (resolution,).
    """
    dist = jnp.asarray(dist, jnp.float32)
    orig_shape = dist.shape
    n = int(dist.size)

    R = int(resolution)
    G = int(group)

    coeff = -0.5 / ((stop - start) * width) ** 2

    # Gaussian centers, packed to match lane l = i*R + r  (r = l % R).
    offset = jnp.linspace(start, stop, R, dtype=jnp.float32)            # (R,)
    offset_packed = jnp.tile(offset, (G,)).reshape(1, G * R)            # (1, G*R)

    # One-hot expansion matrix: expand[i, l] = 1.0 iff l // R == i.
    rows = jnp.arange(G, dtype=jnp.int32)[:, None]
    cols = (jnp.arange(G * R, dtype=jnp.int32) // R)[None, :]
    expand = (rows == cols).astype(jnp.float32)                         # (G, G*R)

    n_groups = -(-n // G)                                               # cdiv
    tile_g, n_groups_pad = _choose_tiling(n_groups, max_groups_per_step)
    n_pad = n_groups_pad * G

    flat = dist.reshape(n)
    if n_pad != n:
        # <= 127 extra distances in the common case (plus group padding for
        # rare ragged group counts); padded rows are finite and discarded.
        flat = jnp.zeros((n_pad,), jnp.float32).at[:n].set(flat)
    dist_packed = flat.reshape(n_groups_pad, G)                         # free reshape

    grid = (n_groups_pad // tile_g,)

    out = pl.pallas_call(
        functools.partial(_gaussian_smearing_kernel, coeff=float(coeff)),
        out_shape=jax.ShapeDtypeStruct((n_groups_pad, G * R), jnp.float32),
        grid_spec=pltpu.PrefetchScalarGridSpec(
            num_scalar_prefetch=0,
            grid=grid,
            in_specs=[
                pl.BlockSpec((tile_g, G), lambda i: (i, 0)),          # distances
                pl.BlockSpec((G, G * R), lambda i: (0, 0)),           # one-hot (resident)
                pl.BlockSpec((1, G * R), lambda i: (0, 0)),           # offsets (resident)
            ],
            out_specs=pl.BlockSpec((tile_g, G * R), lambda i: (i, 0)),
        ),
        compiler_params=pltpu.CompilerParams(
            dimension_semantics=("parallel",),
            # ~32 MiB working set at tile_g=256 incl. matmul temporaries;
            # 48 MiB keeps headroom and stays under v7x's 64 MiB physical VMEM.
            vmem_limit_bytes=48 * 1024 * 1024),
    )(dist_packed, expand, offset_packed)

    # (n_groups_pad, G*R) and (n_pad, R) have identical row-major bytes.
    out = out.reshape(n_pad, R)
    if n_pad != n:
        out = out[:n]   # TODO(synk): this slice copies; only hit when n % 128 != 0.
    return out.reshape(orig_shape + (R,))


def _reference(dist, *, start=0.0, stop=5.0, resolution=50, width=0.05):
    offset = jnp.linspace(start, stop, resolution, dtype=jnp.float32)
    coeff = -0.5 / ((stop - start) * width) ** 2
    d = dist[..., None] - offset.reshape((1,) * dist.ndim + (resolution,))
    return jnp.exp(coeff * d * d)


if __name__ == "__main__":
    key = jax.random.PRNGKey(0)
    k1, k2, k3 = jax.random.split(key, 3)

    # Case 1: n = 128 exactly one lane-group -> no padding, no output copy.
    dist1 = jax.random.uniform(k1, (2, 64), dtype=jnp.float32, minval=0.0, maxval=5.0)
    out1 = jax.block_until_ready(gaussian_smearing(dist1))
    ref1 = _reference(dist1)
    assert out1.shape == (2, 64, 50), out1.shape
    assert jnp.allclose(out1, ref1, atol=2e-5, rtol=1e-5), float(jnp.abs(out1 - ref1).max())

    # Case 2: ragged size (n = 111) -> pad-to-group + slice fallback path.
    dist2 = jax.random.uniform(k2, (3, 37), dtype=jnp.float32, minval=0.0, maxval=5.0)
    out2 = jax.block_until_ready(gaussian_smearing(dist2))
    ref2 = _reference(dist2)
    assert out2.shape == (3, 37, 50), out2.shape
    assert jnp.allclose(out2, ref2, atol=2e-5, rtol=1e-5), float(jnp.abs(out2 - ref2).max())

    # Case 3: multi-step grid (n = 2048 -> 16 groups, 8 groups/step -> 2 steps).
    dist3 = jax.random.uniform(k3, (8, 256), dtype=jnp.float32, minval=0.0, maxval=5.0)
    out3 = jax.block_until_ready(gaussian_smearing(dist3, max_groups_per_step=8))
    ref3 = _reference(dist3)
    assert out3.shape == (8, 256, 50), out3.shape
    assert jnp.allclose(out3, ref3, atol=2e-5, rtol=1e-5), float(jnp.abs(out3 - ref3).max())

    print("KERNEL_OK")
</pallas_src>

<mosaic_0001>
module attributes {stable_mosaic.version = 11 : i64} {
  func.func @_gaussian_smearing_kernel(%arg0: i32, %arg1: memref<1x128xf32, #tpu.memory_space<vmem>>, %arg2: memref<128x6400xf32, #tpu.memory_space<vmem>>, %arg3: memref<1x6400xf32, #tpu.memory_space<vmem>>, %arg4: memref<1x6400xf32, #tpu.memory_space<vmem>>) attributes {dimension_semantics = [#tpu.dimension_semantics<parallel>], iteration_bounds = array<i64: 1>, scalar_prefetch = 0 : i64, scratch_operands = 0 : i64, tpu.core_type = #tpu.core_type<tc>, window_params = [{transform_indices = @transform_0, window_bounds = array<i64: 1, 128>}, {pipeline_mode = #tpu.pipeline_mode<synchronous>, transform_indices = @transform_1, window_bounds = array<i64: 128, 6400>}, {pipeline_mode = #tpu.pipeline_mode<synchronous>, transform_indices = @transform_2, window_bounds = array<i64: 1, 6400>}, {transform_indices = @transform_3, window_bounds = array<i64: 1, 6400>}]} {
    %c0 = arith.constant 0 : index
    %c0_0 = arith.constant 0 : index
    %0 = vector.load %arg1[%c0, %c0_0] : memref<1x128xf32, #tpu.memory_space<vmem>>, vector<1x128xf32>
    %c0_1 = arith.constant 0 : index
    %c0_2 = arith.constant 0 : index
    %1 = vector.load %arg2[%c0_1, %c0_2] : memref<128x6400xf32, #tpu.memory_space<vmem>>, vector<128x6400xf32>
    %cst = arith.constant dense<0.000000e+00> : vector<1x6400xf32>
    %2 = tpu.matmul %0, %1, %cst {dimension_numbers = #tpu.dot_dimension_numbers<[1], [0], [0], [1], [0, 0, 1, 1], [], []>} : vector<1x128xf32>, vector<128x6400xf32>, vector<1x6400xf32> -> vector<1x6400xf32>
    %c0_3 = arith.constant 0 : index
    %c0_4 = arith.constant 0 : index
    %3 = vector.load %arg3[%c0_3, %c0_4] : memref<1x6400xf32, #tpu.memory_space<vmem>>, vector<1x6400xf32>
    %4 = arith.subf %2, %3 : vector<1x6400xf32>
    %5 = arith.mulf %4, %4 : vector<1x6400xf32>
    %cst_5 = arith.constant -8.000000e+00 : f32
    %6 = vector.broadcast %cst_5 : f32 to vector<1x6400xf32>
    %7 = arith.mulf %6, %5 : vector<1x6400xf32>
    %8 = math.exp %7 : vector<1x6400xf32>
    %c0_6 = arith.constant 0 : index
    %c0_7 = arith.constant 0 : index
    %9 = vector.load %arg4[%c0_6, %c0_7] : memref<1x6400xf32, #tpu.memory_space<vmem>>, vector<1x6400xf32>
    tpu.vector_store %arg4[%c0_6, %c0_7], %8 {strides = array<i32>} : memref<1x6400xf32, #tpu.memory_space<vmem>>, vector<1x6400xf32>,
    return
  }
  func.func @transform_0(%arg0: i32) -> (i32, i32) {
    %c0_i32 = arith.constant 0 : i32
    %c0_i32_0 = arith.constant 0 : i32
    return %arg0, %c0_i32 : i32, i32
  }
  func.func @transform_1(%arg0: i32) -> (i32, i32) {
    %c0_i32 = arith.constant 0 : i32
    %c0_i32_0 = arith.constant 0 : i32
    %c0_i32_1 = arith.constant 0 : i32
    return %c0_i32, %c0_i32_0 : i32, i32
  }
  func.func @transform_2(%arg0: i32) -> (i32, i32) {
    %c0_i32 = arith.constant 0 : i32
    %c0_i32_0 = arith.constant 0 : i32
    %c0_i32_1 = arith.constant 0 : i32
    return %c0_i32, %c0_i32_0 : i32, i32
  }
  func.func @transform_3(%arg0: i32) -> (i32, i32) {
    %c0_i32 = arith.constant 0 : i32
    %c0_i32_0 = arith.constant 0 : i32
    return %arg0, %c0_i32 : i32, i32
  }
}

</mosaic_0001>

<llo_original>
// kernel: tpu_custom_call.1
$region0: #{tpu_custom_call.1}
  #allocation0 [shape = 'u32[]', space=smem, size = 0x4, offset = 0x4, fixed_abs, tag = 'smem constant byte address 0x4 - core index']
  #allocation1 [shape = 'u32[144,128]{1,0:T(1,128)}', space=vmem, size = 0x12000, scoped, tag = 'internal scratch']
  %s0 = inlined_call_operand.hbm [shape: f32[1,128], index: 0, kind: input, shape index: {}]
  %s1 = inlined_call_operand.hbm [shape: f32[128,6400], index: 1, kind: input, shape index: {}]
  %s2 = inlined_call_operand.hbm [shape: f32[1,6400], index: 2, kind: input, shape index: {}]
  %s3 = inlined_call_operand.hbm [shape: f32[1,6400], index: 3, kind: output, shape index: {}]
  %s4 = sld [smem:[#allocation0]]
  $region34: #{tpu_custom_call.1} parent=0
    _
  %s6 = ssub.s32 1, %s4
  %s7 = scalar_select 0, %s6, %s4
  $region1: #{tpu_custom_call.1} parent=0
    #allocation2 [shape = 'u8[512]{0}', space=vmem, size = 0x400, scoped, tag = 'input window, operand 0, single buffered']
    #allocation3 [shape = 's32[1]{0}', space=sflag, size = 0x4, scoped, tag = 'scoped memory for tpu_custom_call.1']
    #allocation4 [shape = 's32[1]{0}', space=sflag, size = 0x4, scoped, tag = 'scoped memory for tpu_custom_call.1']
    #allocation5 [shape = 'u8[3276800]{0}', space=vmem, size = 0x320000, scoped, tag = 'input window, operand 1, single buffered']
    #allocation6 [shape = 's32[1]{0}', space=sflag, size = 0x4, scoped, tag = 'scoped memory for tpu_custom_call.1']
    #allocation7 [shape = 'u8[25600]{0}', space=vmem, size = 0x6400, scoped, tag = 'input window, operand 2, single buffered']
    #allocation8 [shape = 'u8[25600]{0}', space=vmem, size = 0x6400, scoped, tag = 'output window, operand 0, single buffered']
    %8 = vsyncpa [#allocation3], 0
    %9 = vsyncpa [#allocation6], 0
    %10 = vsyncpa [#allocation4], 0
    // Predicated region
    $region2: #{tpu_custom_call.1} parent=1 // pred_check
      _
    $region3: #{tpu_custom_call.1} parent=1 // pred_check_branch
      %12 = sbr.rel (0) target = $region5
    $region4: #{tpu_custom_call.1} parent=1 // pred_region
      %s14 = ssub.s32 16, 16
      %15 = vsyncadd [#allocation3], %s14
      %s17 = sshll.u32 [#allocation2], 4
      %s18 = int_to_ptr.vmem [resolvable:$true] %s17
      %20 = dma.hbm_to_vmem [thread:$0]  %s0, 16, %s18, [#allocation3]
    $region5: #{tpu_custom_call.1} parent=1 // pred_fallthru
      _
    // Predicated region
    $region6: #{tpu_custom_call.1} parent=1 // pred_check
      _
    $region7: #{tpu_custom_call.1} parent=1 // pred_check_branch
      %22 = sbr.rel (0) target = $region9
    $region8: #{tpu_custom_call.1} parent=1 // pred_region
      %s24 = ssub.s32 102400, 102400
      %25 = vsyncadd [#allocation6], %s24
      %s26 = sshll.u32 [#allocation5], 4
      %s27 = int_to_ptr.vmem [resolvable:$true] %s26
      %32 = dma.hbm_to_vmem [thread:$0]  %s1, 102400, %s27, [#allocation6], 6400, 6400, 400
    $region9: #{tpu_custom_call.1} parent=1 // pred_fallthru
      _
    // Predicated region
    $region10: #{tpu_custom_call.1} parent=1 // pred_check
      _
    $region11: #{tpu_custom_call.1} parent=1 // pred_check_branch
      %34 = sbr.rel (0) target = $region13
    $region12: #{tpu_custom_call.1} parent=1 // pred_region
      %s36 = ssub.s32 800, 800
      %37 = vsyncadd [#allocation6], %s36
      %s39 = sshll.u32 [#allocation7], 4
      %s40 = int_to_ptr.vmem [resolvable:$true] %s39
      %42 = dma.hbm_to_vmem [thread:$0]  %s2, 800, %s40, [#allocation6]
    $region13: #{tpu_custom_call.1} parent=1 // pred_fallthru
      _
    // Predicated region
    $region14: #{tpu_custom_call.1} parent=1 // pred_check
      _
    $region15: #{tpu_custom_call.1} parent=1 // pred_check_branch
      %44 = sbr.rel (0) target = $region17
    $region16: #{tpu_custom_call.1} parent=1 // pred_region
      %45 = dma.done [#allocation3], 16
    $region17: #{tpu_custom_call.1} parent=1 // pred_fallthru
      _
    // Predicated region
    $region18: #{tpu_custom_call.1} parent=1 // pred_check
      _
    $region19: #{tpu_custom_call.1} parent=1 // pred_check_branch
      %47 = sbr.rel (0) target = $region21
    $region20: #{tpu_custom_call.1} parent=1 // pred_region
      %48 = dma.done [#allocation6], 102400
    $region21: #{tpu_custom_call.1} parent=1 // pred_fallthru
      _
    // Predicated region
    $region22: #{tpu_custom_call.1} parent=1 // pred_check
      _
    $region23: #{tpu_custom_call.1} parent=1 // pred_check_branch
      %50 = sbr.rel (0) target = $region25
    $region24: #{tpu_custom_call.1} parent=1 // pred_region
      %51 = dma.done [#allocation6], 800
    $region25: #{tpu_custom_call.1} parent=1 // pred_fallthru
      _
    %v52 = vld [vmem:[#allocation2] sm:$0x1]
    %v53 = vld [vmem:[#allocation5] sm:$0xff]
    %v54 = vld [vmem:[#allocation5 + $0x8] sm:$0xff]
    %v55 = vld [vmem:[#allocation5 + $0x10] sm:$0xff]
    %v56 = vld [vmem:[#allocation5 + $0x18] sm:$0xff]
    %v57 = vld [vmem:[#allocation5 + $0x20] sm:$0xff]
    %v58 = vld [vmem:[#allocation5 + $0x28] sm:$0xff]
    %v59 = vld [vmem:[#allocation5 + $0x30] sm:$0xff]
    %v60 = vld [vmem:[#allocation5 + $0x38] sm:$0xff]
    %v61 = vld [vmem:[#allocation5 + $0x40] sm:$0xff]
    %v62 = vld [vmem:[#allocation5 + $0x48] sm:$0xff]
    %v63 = vld [vmem:[#allocation5 + $0x50] sm:$0xff]
    %v64 = vld [vmem:[#allocation5 + $0x58] sm:$0xff]
    %v65 = vld [vmem:[#allocation5 + $0x60] sm:$0xff]
    %v66 = vld [vmem:[#allocation5 + $0x68] sm:$0xff]
    %v67 = vld [vmem:[#allocation5 + $0x70] sm:$0xff]
    %v68 = vld [vmem:[#allocation5 + $0x78] sm:$0xff]
    %v69 = vld [vmem:[#allocation5 + $0x80] sm:$0xff]
    %v70 = vld [vmem:[#allocation5 + $0x88] sm:$0xff]
    %v71 = vld [vmem:[#allocation5 + $0x90] sm:$0xff]
    %v72 = vld [vmem:[#allocation5 + $0x98] sm:$0xff]
    %v73 = vld [vmem:[#allocation5 + $0xa0] sm:$0xff]
    %v74 = vld [vmem:[#allocation5 + $0xa8] sm:$0xff]
    %v75 = vld [vmem:[#allocation5 + $0xb0] sm:$0xff]
    %v76 = vld [vmem:[#allocation5 + $0xb8] sm:$0xff]
    %v77 = vld [vmem:[#allocation5 + $0xc0] sm:$0xff]
    %v78 = vld [vmem:[#allocation5 + $0xc8] sm:$0xff]
    %v79 = vld [vmem:[#allocation5 + $0xd0] sm:$0xff]
    %v80 = vld [vmem:[#allocation5 + $0xd8] sm:$0xff]
    %v81 = vld [vmem:[#allocation5 + $0xe0] sm:$0xff]
    %v82 = vld [vmem:[#allocation5 + $0xe8] sm:$0xff]
    %v83 = vld [vmem:[#allocation5 + $0xf0] sm:$0xff]
    %v84 = vld [vmem:[#allocation5 + $0xf8] sm:$0xff]
    %v85 = vld [vmem:[#allocation5 + $0x100] sm:$0xff]
    %v86 = vld [vmem:[#allocation5 + $0x108] sm:$0xff]
    %v87 = vld [vmem:[#allocation5 + $0x110] sm:$0xff]
    %v88 = vld [vmem:[#allocation5 + $0x118] sm:$0xff]
    %v89 = vld [vmem:[#allocation5 + $0x120] sm:$0xff]
    %v90 = vld [vmem:[#allocation5 + $0x128] sm:$0xff]
    %v91 = vld [vmem:[#allocation5 + $0x130] sm:$0xff]
    %v92 = vld [vmem:[#allocation5 + $0x138] sm:$0xff]
    %v93 = vld [vmem:[#allocation5 + $0x140] sm:$0xff]
    %v94 = vld [vmem:[#allocation5 + $0x148] sm:$0xff]
    %v95 = vld [vmem:[#allocation5 + $0x150] sm:$0xff]
    %v96 = vld [vmem:[#allocation5 + $0x158] sm:$0xff]
    %v97 = vld [vmem:[#allocation5 + $0x160] sm:$0xff]
    %v98 = vld [vmem:[#allocation5 + $0x168] sm:$0xff]
    %v99 = vld [vmem:[#allocation5 + $0x170] sm:$0xff]
    %v100 = vld [vmem:[#allocation5 + $0x178] sm:$0xff]
    %v101 = vld [vmem:[#allocation5 + $0x180] sm:$0xff]
    %v102 = vld [vmem:[#allocation5 + $0x188] sm:$0xff]
    %v103 = vld [vmem:[#allocation5 + $0x190] sm:$0xff]
    %v104 = vld [vmem:[#allocation5 + $0x198] sm:$0xff]
    %v105 = vld [vmem:[#allocation5 + $0x1a0] sm:$0xff]
    %v106 = vld [vmem:[#allocation5 + $0x1a8] sm:$0xff]
    %v107 = vld [vmem:[#allocation5 + $0x1b0] sm:$0xff]
    %v108 = vld [vmem:[#allocation5 + $0x1b8] sm:$0xff]
    %v109 = vld [vmem:[#allocation5 + $0x1c0] sm:$0xff]
    %v110 = vld [vmem:[#allocation5 + $0x1c8] sm:$0xff]
    %v111 = vld [vmem:[#allocation5 + $0x1d0] sm:$0xff]
    %v112 = vld [vmem:[#allocation5 + $0x1d8] sm:$0xff]
    %v113 = vld [vmem:[#allocation5 + $0x1e0] sm:$0xff]
    %v114 = vld [vmem:[#allocation5 + $0x1e8] sm:$0xff]
    %v115 = vld [vmem:[#allocation5 + $0x1f0] sm:$0xff]
    %v116 = vld [vmem:[#allocation5 + $0x1f8] sm:$0xff]
    %v117 = vld [vmem:[#allocation5 + $0x200] sm:$0xff]
    %v118 = vld [vmem:[#allocation5 + $0x208] sm:$0xff]
    %v119 = vld [vmem:[#allocation5 + $0x210] sm:$0xff]
    %v120 = vld [vmem:[#allocation5 + $0x218] sm:$0xff]
    %v121 = vld [vmem:[#allocation5 + $0x220] sm:$0xff]
    %v122 = vld [vmem:[#allocation5 + $0x228] sm:$0xff]
    %v123 = vld [vmem:[#allocation5 + $0x230] sm:$0xff]
    %v124 = vld [vmem:[#allocation5 + $0x238] sm:$0xff]
    %v125 = vld [vmem:[#allocation5 + $0x240] sm:$0xff]
    %v126 = vld [vmem:[#allocation5 + $0x248] sm:$0xff]
    %v127 = vld [vmem:[#allocation5 + $0x250] sm:$0xff]
    %v128 = vld [vmem:[#allocation5 + $0x258] sm:$0xff]
    %v129 = vld [vmem:[#allocation5 + $0x260] sm:$0xff]
    %v130 = vld [vmem:[#allocation5 + $0x268] sm:$0xff]
    %v131 = vld [vmem:[#allocation5 + $0x270] sm:$0xff]
    %v132 = vld [vmem:[#allocation5 + $0x278] sm:$0xff]
    %v133 = vld [vmem:[#allocation5 + $0x280] sm:$0xff]
    %v134 = vld [vmem:[#allocation5 + $0x288] sm:$0xff]
    %v135 = vld [vmem:[#allocation5 + $0x290] sm:$0xff]
    %v136 = vld [vmem:[#allocation5 + $0x298] sm:$0xff]
    %v137 = vld [vmem:[#allocation5 + $0x2a0] sm:$0xff]
    %v138 = vld [vmem:[#allocation5 + $0x2a8] sm:$0xff]
    %v139 = vld [vmem:[#allocation5 + $0x2b0] sm:$0xff]
    %v140 = vld [vmem:[#allocation5 + $0x2b8] sm:$0xff]
    %v141 = vld [vmem:[#allocation5 + $0x2c0] sm:$0xff]
    %v142 = vld [vmem:[#allocation5 + $0x2c8] sm:$0xff]
    %v143 = vld [vmem:[#allocation5 + $0x2d0] sm:$0xff]
    %v144 = vld [vmem:[#allocation5 + $0x2d8] sm:$0xff]
    %v145 = vld [vmem:[#allocation5 + $0x2e0] sm:$0xff]
    %v146 = vld [vmem:[#allocation5 + $0x2e8] sm:$0xff]
    %v147 = vld [vmem:[#allocation5 + $0x2f0] sm:$0xff]
    %v148 = vld [vmem:[#allocation5 + $0x2f8] sm:$0xff]
    %v149 = vld [vmem:[#allocation5 + $0x300] sm:$0xff]
    %v150 = vld [vmem:[#allocation5 + $0x308] sm:$0xff]
    %v151 = vld [vmem:[#allocation5 + $0x310] sm:$0xff]
    %v152 = vld [vmem:[#allocation5 + $0x318] sm:$0xff]
    %v153 = vld [vmem:[#allocation5 + $0x320] sm:$0xff]
    %v154 = vld [vmem:[#allocation5 + $0x328] sm:$0xff]
    %v155 = vld [vmem:[#allocation5 + $0x330] sm:$0xff]
    %v156 = vld [vmem:[#allocation5 + $0x338] sm:$0xff]
    %v157 = vld [vmem:[#allocation5 + $0x340] sm:$0xff]
    %v158 = vld [vmem:[#allocation5 + $0x348] sm:$0xff]
    %v159 = vld [vmem:[#allocation5 + $0x350] sm:$0xff]
    %v160 = vld [vmem:[#allocation5 + $0x358] sm:$0xff]
    %v161 = vld [vmem:[#allocation5 + $0x360] sm:$0xff]
    %v162 = vld [vmem:[#allocation5 + $0x368] sm:$0xff]
    %v163 = vld [vmem:[#allocation5 + $0x370] sm:$0xff]
    %v164 = vld [vmem:[#allocation5 + $0x378] sm:$0xff]
    %v165 = vld [vmem:[#allocation5 + $0x380] sm:$0xff]
    %v166 = vld [vmem:[#allocation5 + $0x388] sm:$0xff]
    %v167 = vld [vmem:[#allocation5 + $0x390] sm:$0xff]
    %v168 = vld [vmem:[#allocation5 + $0x398] sm:$0xff]
    %v169 = vld [vmem:[#allocation5 + $0x3a0] sm:$0xff]
    %v170 = vld [vmem:[#allocation5 + $0x3a8] sm:$0xff]
    %v171 = vld [vmem:[#allocation5 + $0x3b0] sm:$0xff]
    %v172 = vld [vmem:[#allocation5 + $0x3b8] sm:$0xff]
    %v173 = vld [vmem:[#allocation5 + $0x3c0] sm:$0xff]
    %v174 = vld [vmem:[#allocation5 + $0x3c8] sm:$0xff]
    %v175 = vld [vmem:[#allocation5 + $0x3d0] sm:$0xff]
    %v176 = vld [vmem:[#allocation5 + $0x3d8] sm:$0xff]
    %v177 = vld [vmem:[#allocation5 + $0x3e0] sm:$0xff]
    %v178 = vld [vmem:[#allocation5 + $0x3e8] sm:$0xff]
    %v179 = vld [vmem:[#allocation5 + $0x3f0] sm:$0xff]
    %v180 = vld [vmem:[#allocation5 + $0x3f8] sm:$0xff]
    %v181 = vld [vmem:[#allocation5 + $0x400] sm:$0xff]
    %v182 = vld [vmem:[#allocation5 + $0x408] sm:$0xff]
    %v183 = vld [vmem:[#allocation5 + $0x410] sm:$0xff]
    %v184 = vld [vmem:[#allocation5 + $0x418] sm:$0xff]
    %v185 = vld [vmem:[#allocation5 + $0x420] sm:$0xff]
    %v186 = vld [vmem:[#allocation5 + $0x428] sm:$0xff]
    %v187 = vld [vmem:[#allocation5 + $0x430] sm:$0xff]
    %v188 = vld [vmem:[#allocation5 + $0x438] sm:$0xff]
    %v189 = vld [vmem:[#allocation5 + $0x440] sm:$0xff]
    %v190 = vld [vmem:[#allocation5 + $0x448] sm:$0xff]
    %v191 = vld [vmem:[#allocation5 + $0x450] sm:$0xff]
    %v192 = vld [vmem:[#allocation5 + $0x458] sm:$0xff]
    %v193 = vld [vmem:[#allocation5 + $0x460] sm:$0xff]
    %v194 = vld [vmem:[#allocation5 + $0x468] sm:$0xff]
    %v195 = vld [vmem:[#allocation5 + $0x470] sm:$0xff]
    %v196 = vld [vmem:[#allocation5 + $0x478] sm:$0xff]
    %v197 = vld [vmem:[#allocation5 + $0x480] sm:$0xff]
    %v198 = vld [vmem:[#allocation5 + $0x488] sm:$0xff]
    %v199 = vld [vmem:[#allocation5 + $0x490] sm:$0xff]
    %v200 = vld [vmem:[#allocation5 + $0x498] sm:$0xff]
    %v201 = vld [vmem:[#allocation5 + $0x4a0] sm:$0xff]
    %v202 = vld [vmem:[#allocation5 + $0x4a8] sm:$0xff]
    %v203 = vld [vmem:[#allocation5 + $0x4b0] sm:$0xff]
    %v204 = vld [vmem:[#allocation5 + $0x4b8] sm:$0xff]
    %v205 = vld [vmem:[#allocation5 + $0x4c0] sm:$0xff]
    %v206 = vld [vmem:[#allocation5 + $0x4c8] sm:$0xff]
    %v207 = vld [vmem:[#allocation5 + $0x4d0] sm:$0xff]
    %v208 = vld [vmem:[#allocation5 + $0x4d8] sm:$0xff]
    %v209 = vld [vmem:[#allocation5 + $0x4e0] sm:$0xff]
    %v210 = vld [vmem:[#allocation5 + $0x4e8] sm:$0xff]
    %v211 = vld [vmem:[#allocation5 + $0x4f0] sm:$0xff]
    %v212 = vld [vmem:[#allocation5 + $0x4f8] sm:$0xff]
    %v213 = vld [vmem:[#allocation5 + $0x500] sm:$0xff]
    %v214 = vld [vmem:[#allocation5 + $0x508] sm:$0xff]
    %v215 = vld [vmem:[#allocation5 + $0x510] sm:$0xff]
    %v216 = vld [vmem:[#allocation5 + $0x518] sm:$0xff]
    %v217 = vld [vmem:[#allocation5 + $0x520] sm:$0xff]
    %v218 = vld [vmem:[#allocation5 + $0x528] sm:$0xff]
    %v219 = vld [vmem:[#allocation5 + $0x530] sm:$0xff]
    %v220 = vld [vmem:[#allocation5 + $0x538] sm:$0xff]
    %v221 = vld [vmem:[#allocation5 + $0x540] sm:$0xff]
    %v222 = vld [vmem:[#allocation5 + $0x548] sm:$0xff]
    %v223 = vld [vmem:[#allocation5 + $0x550] sm:$0xff]
    %v224 = vld [vmem:[#allocation5 + $0x558] sm:$0xff]
    %v225 = vld [vmem:[#allocation5 + $0x560] sm:$0xff]
    %v226 = vld [vmem:[#allocation5 + $0x568] sm:$0xff]
    %v227 = vld [vmem:[#allocation5 + $0x570] sm:$0xff]
    %v228 = vld [vmem:[#allocation5 + $0x578] sm:$0xff]
    %v229 = vld [vmem:[#allocation5 + $0x580] sm:$0xff]
    %v230 = vld [vmem:[#allocation5 + $0x588] sm:$0xff]
    %v231 = vld [vmem:[#allocation5 + $0x590] sm:$0xff]
    %v232 = vld [vmem:[#allocation5 + $0x598] sm:$0xff]
    %v233 = vld [vmem:[#allocation5 + $0x5a0] sm:$0xff]
    %v234 = vld [vmem:[#allocation5 + $0x5a8] sm:$0xff]
    %v235 = vld [vmem:[#allocation5 + $0x5b0] sm:$0xff]
    %v236 = vld [vmem:[#allocation5 + $0x5b8] sm:$0xff]
    %v237 = vld [vmem:[#allocation5 + $0x5c0] sm:$0xff]
    %v238 = vld [vmem:[#allocation5 + $0x5c8] sm:$0xff]
    %v239 = vld [vmem:[#allocation5 + $0x5d0] sm:$0xff]
    %v240 = vld [vmem:[#allocation5 + $0x5d8] sm:$0xff]
    %v241 = vld [vmem:[#allocation5 + $0x5e0] sm:$0xff]
    %v242 = vld [vmem:[#allocation5 + $0x5e8] sm:$0xff]
    %v243 = vld [vmem:[#allocation5 + $0x5f0] sm:$0xff]
    %v244 = vld [vmem:[#allocation5 + $0x5f8] sm:$0xff]
    %v245 = vld [vmem:[#allocation5 + $0x600] sm:$0xff]
    %v246 = vld [vmem:[#allocation5 + $0x608] sm:$0xff]
    %v247 = vld [vmem:[#allocation5 + $0x610] sm:$0xff]
    %v248 = vld [vmem:[#allocation5 + $0x618] sm:$0xff]
    %v249 = vld [vmem:[#allocation5 + $0x620] sm:$0xff]
    %v250 = vld [vmem:[#allocation5 + $0x628] sm:$0xff]
    %v251 = vld [vmem:[#allocation5 + $0x630] sm:$0xff]
    %v252 = vld [vmem:[#allocation5 + $0x638] sm:$0xff]
    %v253 = vld [vmem:[#allocation5 + $0x640] sm:$0xff]
    %v254 = vld [vmem:[#allocation5 + $0x648] sm:$0xff]
    %v255 = vld [vmem:[#allocation5 + $0x650] sm:$0xff]
    %v256 = vld [vmem:[#allocation5 + $0x658] sm:$0xff]
    %v257 = vld [vmem:[#allocation5 + $0x660] sm:$0xff]
    %v258 = vld [vmem:[#allocation5 + $0x668] sm:$0xff]
    %v259 = vld [vmem:[#allocation5 + $0x670] sm:$0xff]
    %v260 = vld [vmem:[#allocation5 + $0x678] sm:$0xff]
    %v261 = vld [vmem:[#allocation5 + $0x680] sm:$0xff]
    %v262 = vld [vmem:[#allocation5 + $0x688] sm:$0xff]
    %v263 = vld [vmem:[#allocation5 + $0x690] sm:$0xff]
    %v264 = vld [vmem:[#allocation5 + $0x698] sm:$0xff]
    %v265 = vld [vmem:[#allocation5 + $0x6a0] sm:$0xff]
    %v266 = vld [vmem:[#allocation5 + $0x6a8] sm:$0xff]
    %v267 = vld [vmem:[#allocation5 + $0x6b0] sm:$0xff]
    %v268 = vld [vmem:[#allocation5 + $0x6b8] sm:$0xff]
    %v269 = vld [vmem:[#allocation5 + $0x6c0] sm:$0xff]
    %v270 = vld [vmem:[#allocation5 + $0x6c8] sm:$0xff]
    %v271 = vld [vmem:[#allocation5 + $0x6d0] sm:$0xff]
    %v272 = vld [vmem:[#allocation5 + $0x6d8] sm:$0xff]
    %v273 = vld [vmem:[#allocation5 + $0x6e0] sm:$0xff]
    %v274 = vld [vmem:[#allocation5 + $0x6e8] sm:$0xff]
    %v275 = vld [vmem:[#allocation5 + $0x6f0] sm:$0xff]
    %v276 = vld [vmem:[#allocation5 + $0x6f8] sm:$0xff]
    %v277 = vld [vmem:[#allocation5 + $0x700] sm:$0xff]
    %v278 = vld [vmem:[#allocation5 + $0x708] sm:$0xff]
    %v279 = vld [vmem:[#allocation5 + $0x710] sm:$0xff]
    %v280 = vld [vmem:[#allocation5 + $0x718] sm:$0xff]
    %v281 = vld [vmem:[#allocation5 + $0x720] sm:$0xff]
    %v282 = vld [vmem:[#allocation5 + $0x728] sm:$0xff]
    %v283 = vld [vmem:[#allocation5 + $0x730] sm:$0xff]
    %v284 = vld [vmem:[#allocation5 + $0x738] sm:$0xff]
    %v285 = vld [vmem:[#allocation5 + $0x740] sm:$0xff]
    %v286 = vld [vmem:[#allocation5 + $0x748] sm:$0xff]
    %v287 = vld [vmem:[#allocation5 + $0x750] sm:$0xff]
    %v288 = vld [vmem:[#allocation5 + $0x758] sm:$0xff]
    %v289 = vld [vmem:[#allocation5 + $0x760] sm:$0xff]
    %v290 = vld [vmem:[#allocation5 + $0x768] sm:$0xff]
    %v291 = vld [vmem:[#allocation5 + $0x770] sm:$0xff]
    %v292 = vld [vmem:[#allocation5 + $0x778] sm:$0xff]
    %v293 = vld [vmem:[#allocation5 + $0x780] sm:$0xff]
    %v294 = vld [vmem:[#allocation5 + $0x788] sm:$0xff]
    %v295 = vld [vmem:[#allocation5 + $0x790] sm:$0xff]
    %v296 = vld [vmem:[#allocation5 + $0x798] sm:$0xff]
    %v297 = vld [vmem:[#allocation5 + $0x7a0] sm:$0xff]
    %v298 = vld [vmem:[#allocation5 + $0x7a8] sm:$0xff]
    %v299 = vld [vmem:[#allocation5 + $0x7b0] sm:$0xff]
    %v300 = vld [vmem:[#allocation5 + $0x7b8] sm:$0xff]
    %v301 = vld [vmem:[#allocation5 + $0x7c0] sm:$0xff]
    %v302 = vld [vmem:[#allocation5 + $0x7c8] sm:$0xff]
    %v303 = vld [vmem:[#allocation5 + $0x7d0] sm:$0xff]
    %v304 = vld [vmem:[#allocation5 + $0x7d8] sm:$0xff]
    %v305 = vld [vmem:[#allocation5 + $0x7e0] sm:$0xff]
    %v306 = vld [vmem:[#allocation5 + $0x7e8] sm:$0xff]
    %v307 = vld [vmem:[#allocation5 + $0x7f0] sm:$0xff]
    %v308 = vld [vmem:[#allocation5 + $0x7f8] sm:$0xff]
    %v309 = vld [vmem:[#allocation5 + $0x800] sm:$0xff]
    %v310 = vld [vmem:[#allocation5 + $0x808] sm:$0xff]
    %v311 = vld [vmem:[#allocation5 + $0x810] sm:$0xff]
    %v312 = vld [vmem:[#allocation5 + $0x818] sm:$0xff]
    %v313 = vld [vmem:[#allocation5 + $0x820] sm:$0xff]
    %v314 = vld [vmem:[#allocation5 + $0x828] sm:$0xff]
    %v315 = vld [vmem:[#allocation5 + $0x830] sm:$0xff]
    %v316 = vld [vmem:[#allocation5 + $0x838] sm:$0xff]
    %v317 = vld [vmem:[#allocation5 + $0x840] sm:$0xff]
    %v318 = vld [vmem:[#allocation5 + $0x848] sm:$0xff]
    %v319 = vld [vmem:[#allocation5 + $0x850] sm:$0xff]
    %v320 = vld [vmem:[#allocation5 + $0x858] sm:$0xff]
    %v321 = vld [vmem:[#allocation5 + $0x860] sm:$0xff]
    %v322 = vld [vmem:[#allocation5 + $0x868] sm:$0xff]
    %v323 = vld [vmem:[#allocation5 + $0x870] sm:$0xff]
    %v324 = vld [vmem:[#allocation5 + $0x878] sm:$0xff]
    %v325 = vld [vmem:[#allocation5 + $0x880] sm:$0xff]
    %v326 = vld [vmem:[#allocation5 + $0x888] sm:$0xff]
    %v327 = vld [vmem:[#allocation5 + $0x890] sm:$0xff]
    %v328 = vld [vmem:[#allocation5 + $0x898] sm:$0xff]
    %v329 = vld [vmem:[#allocation5 + $0x8a0] sm:$0xff]
    %v330 = vld [vmem:[#allocation5 + $0x8a8] sm:$0xff]
    %v331 = vld [vmem:[#allocation5 + $0x8b0] sm:$0xff]
    %v332 = vld [vmem:[#allocation5 + $0x8b8] sm:$0xff]
    %v333 = vld [vmem:[#allocation5 + $0x8c0] sm:$0xff]
    %v334 = vld [vmem:[#allocation5 + $0x8c8] sm:$0xff]
    %v335 = vld [vmem:[#allocation5 + $0x8d0] sm:$0xff]
    %v336 = vld [vmem:[#allocation5 + $0x8d8] sm:$0xff]
    %v337 = vld [vmem:[#allocation5 + $0x8e0] sm:$0xff]
    %v338 = vld [vmem:[#allocation5 + $0x8e8] sm:$0xff]
    %v339 = vld [vmem:[#allocation5 + $0x8f0] sm:$0xff]
    %v340 = vld [vmem:[#allocation5 + $0x8f8] sm:$0xff]
    %v341 = vld [vmem:[#allocation5 + $0x900] sm:$0xff]
    %v342 = vld [vmem:[#allocation5 + $0x908] sm:$0xff]
    %v343 = vld [vmem:[#allocation5 + $0x910] sm:$0xff]
    %v344 = vld [vmem:[#allocation5 + $0x918] sm:$0xff]
    %v345 = vld [vmem:[#allocation5 + $0x920] sm:$0xff]
    %v346 = vld [vmem:[#allocation5 + $0x928] sm:$0xff]
    %v347 = vld [vmem:[#allocation5 + $0x930] sm:$0xff]
    %v348 = vld [vmem:[#allocation5 + $0x938] sm:$0xff]
    %v349 = vld [vmem:[#allocation5 + $0x940] sm:$0xff]
    %v350 = vld [vmem:[#allocation5 + $0x948] sm:$0xff]
    %v351 = vld [vmem:[#allocation5 + $0x950] sm:$0xff]
    %v352 = vld [vmem:[#allocation5 + $0x958] sm:$0xff]
    %v353 = vld [vmem:[#allocation5 + $0x960] sm:$0xff]
    %v354 = vld [vmem:[#allocation5 + $0x968] sm:$0xff]
    %v355 = vld [vmem:[#allocation5 + $0x970] sm:$0xff]
    %v356 = vld [vmem:[#allocation5 + $0x978] sm:$0xff]
    %v357 = vld [vmem:[#allocation5 + $0x980] sm:$0xff]
    %v358 = vld [vmem:[#allocation5 + $0x988] sm:$0xff]
    %v359 = vld [vmem:[#allocation5 + $0x990] sm:$0xff]
    %v360 = vld [vmem:[#allocation5 + $0x998] sm:$0xff]
    %v361 = vld [vmem:[#allocation5 + $0x9a0] sm:$0xff]
    %v362 = vld [vmem:[#allocation5 + $0x9a8] sm:$0xff]
    %v363 = vld [vmem:[#allocation5 + $0x9b0] sm:$0xff]
    %v364 = vld [vmem:[#allocation5 + $0x9b8] sm:$0xff]
    %v365 = vld [vmem:[#allocation5 + $0x9c0] sm:$0xff]
    %v366 = vld [vmem:[#allocation5 + $0x9c8] sm:$0xff]
    %v367 = vld [vmem:[#allocation5 + $0x9d0] sm:$0xff]
    %v368 = vld [vmem:[#allocation5 + $0x9d8] sm:$0xff]
    %v369 = vld [vmem:[#allocation5 + $0x9e0] sm:$0xff]
    %v370 = vld [vmem:[#allocation5 + $0x9e8] sm:$0xff]
    %v371 = vld [vmem:[#allocation5 + $0x9f0] sm:$0xff]
    %v372 = vld [vmem:[#allocation5 + $0x9f8] sm:$0xff]
    %v373 = vld [vmem:[#allocation5 + $0xa00] sm:$0xff]
    %v374 = vld [vmem:[#allocation5 + $0xa08] sm:$0xff]
    %v375 = vld [vmem:[#allocation5 + $0xa10] sm:$0xff]
    %v376 = vld [vmem:[#allocation5 + $0xa18] sm:$0xff]
    %v377 = vld [vmem:[#allocation5 + $0xa20] sm:$0xff]
    %v378 = vld [vmem:[#allocation5 + $0xa28] sm:$0xff]
    %v379 = vld [vmem:[#allocation5 + $0xa30] sm:$0xff]
    %v380 = vld [vmem:[#allocation5 + $0xa38] sm:$0xff]
    %v381 = vld [vmem:[#allocation5 + $0xa40] sm:$0xff]
    %v382 = vld [vmem:[#allocation5 + $0xa48] sm:$0xff]
    %v383 = vld [vmem:[#allocation5 + $0xa50] sm:$0xff]
    %v384 = vld [vmem:[#allocation5 + $0xa58] sm:$0xff]
    %v385 = vld [vmem:[#allocation5 + $0xa60] sm:$0xff]
    %v386 = vld [vmem:[#allocation5 + $0xa68] sm:$0xff]
    %v387 = vld [vmem:[#allocation5 + $0xa70] sm:$0xff]
    %v388 = vld [vmem:[#allocation5 + $0xa78] sm:$0xff]
    %v389 = vld [vmem:[#allocation5 + $0xa80] sm:$0xff]
    %v390 = vld [vmem:[#allocation5 + $0xa88] sm:$0xff]
    %v391 = vld [vmem:[#allocation5 + $0xa90] sm:$0xff]
    %v392 = vld [vmem:[#allocation5 + $0xa98] sm:$0xff]
    %v393 = vld [vmem:[#allocation5 + $0xaa0] sm:$0xff]
    %v394 = vld [vmem:[#allocation5 + $0xaa8] sm:$0xff]
    %v395 = vld [vmem:[#allocation5 + $0xab0] sm:$0xff]
    %v396 = vld [vmem:[#allocation5 + $0xab8] sm:$0xff]
    %v397 = vld [vmem:[#allocation5 + $0xac0] sm:$0xff]
    %v398 = vld [vmem:[#allocation5 + $0xac8] sm:$0xff]
    %v399 = vld [vmem:[#allocation5 + $0xad0] sm:$0xff]
    %v400 = vld [vmem:[#allocation5 + $0xad8] sm:$0xff]
    %v401 = vld [vmem:[#allocation5 + $0xae0] sm:$0xff]
    %v402 = vld [vmem:[#allocation5 + $0xae8] sm:$0xff]
    %v403 = vld [vmem:[#allocation5 + $0xaf0] sm:$0xff]
    %v404 = vld [vmem:[#allocation5 + $0xaf8] sm:$0xff]
    %v405 = vld [vmem:[#allocation5 + $0xb00] sm:$0xff]
    %v406 = vld [vmem:[#allocation5 + $0xb08] sm:$0xff]
    %v407 = vld [vmem:[#allocation5 + $0xb10] sm:$0xff]
    %v408 = vld [vmem:[#allocation5 + $0xb18] sm:$0xff]
    %v409 = vld [vmem:[#allocation5 + $0xb20] sm:$0xff]
    %v410 = vld [vmem:[#allocation5 + $0xb28] sm:$0xff]
    %v411 = vld [vmem:[#allocation5 + $0xb30] sm:$0xff]
    %v412 = vld [vmem:[#allocation5 + $0xb38] sm:$0xff]
    %v413 = vld [vmem:[#allocation5 + $0xb40] sm:$0xff]
    %v414 = vld [vmem:[#allocation5 + $0xb48] sm:$0xff]
    %v415 = vld [vmem:[#allocation5 + $0xb50] sm:$0xff]
    %v416 = vld [vmem:[#allocation5 + $0xb58] sm:$0xff]
    %v417 = vld [vmem:[#allocation5 + $0xb60] sm:$0xff]
    %v418 = vld [vmem:[#allocation5 + $0xb68] sm:$0xff]
    %v419 = vld [vmem:[#allocation5 + $0xb70] sm:$0xff]
    %v420 = vld [vmem:[#allocation5 + $0xb78] sm:$0xff]
    %v421 = vld [vmem:[#allocation5 + $0xb80] sm:$0xff]
    %v422 = vld [vmem:[#allocation5 + $0xb88] sm:$0xff]
    %v423 = vld [vmem:[#allocation5 + $0xb90] sm:$0xff]
    %v424 = vld [vmem:[#allocation5 + $0xb98] sm:$0xff]
    %v425 = vld [vmem:[#allocation5 + $0xba0] sm:$0xff]
    %v426 = vld [vmem:[#allocation5 + $0xba8] sm:$0xff]
    %v427 = vld [vmem:[#allocation5 + $0xbb0] sm:$0xff]
    %v428 = vld [vmem:[#allocation5 + $0xbb8] sm:$0xff]
    %v429 = vld [vmem:[#allocation5 + $0xbc0] sm:$0xff]
    %v430 = vld [vmem:[#allocation5 + $0xbc8] sm:$0xff]
    %v431 = vld [vmem:[#allocation5 + $0xbd0] sm:$0xff]
    %v432 = vld [vmem:[#allocation5 + $0xbd8] sm:$0xff]
    %v433 = vld [vmem:[#allocation5 + $0xbe0] sm:$0xff]
    %v434 = vld [vmem:[#allocation5 + $0xbe8] sm:$0xff]
    %v435 = vld [vmem:[#allocation5 + $0xbf0] sm:$0xff]
    %v436 = vld [vmem:[#allocation5 + $0xbf8] sm:$0xff]
    %v437 = vld [vmem:[#allocation5 + $0xc00] sm:$0xff]
    %v438 = vld [vmem:[#allocation5 + $0xc08] sm:$0xff]
    %v439 = vld [vmem:[#allocation5 + $0xc10] sm:$0xff]
    %v440 = vld [vmem:[#allocation5 + $0xc18] sm:$0xff]
    %v441 = vld [vmem:[#allocation5 + $0xc20] sm:$0xff]
    %v442 = vld [vmem:[#allocation5 + $0xc28] sm:$0xff]
    %v443 = vld [vmem:[#allocation5 + $0xc30] sm:$0xff]
    %v444 = vld [vmem:[#allocation5 + $0xc38] sm:$0xff]
    %v445 = vld [vmem:[#allocation5 + $0xc40] sm:$0xff]
    %v446 = vld [vmem:[#allocation5 + $0xc48] sm:$0xff]
    %v447 = vld [vmem:[#allocation5 + $0xc50] sm:$0xff]
    %v448 = vld [vmem:[#allocation5 + $0xc58] sm:$0xff]
    %v449 = vld [vmem:[#allocation5 + $0xc60] sm:$0xff]
    %v450 = vld [vmem:[#allocation5 + $0xc68] sm:$0xff]
    %v451 = vld [vmem:[#allocation5 + $0xc70] sm:$0xff]
    %v452 = vld [vmem:[#allocation5 + $0xc78] sm:$0xff]
    %v453 = vld [vmem:[#allocation5 + $0xc80] sm:$0xff]
    %v454 = vld [vmem:[#allocation5 + $0xc88] sm:$0xff]
    %v455 = vld [vmem:[#allocation5 + $0xc90] sm:$0xff]
    %v456 = vld [vmem:[#allocation5 + $0xc98] sm:$0xff]
    %v457 = vld [vmem:[#allocation5 + $0xca0] sm:$0xff]
    %v458 = vld [vmem:[#allocation5 + $0xca8] sm:$0xff]
    %v459 = vld [vmem:[#allocation5 + $0xcb0] sm:$0xff]
    %v460 = vld [vmem:[#allocation5 + $0xcb8] sm:$0xff]
    %v461 = vld [vmem:[#allocation5 + $0xcc0] sm:$0xff]
    %v462 = vld [vmem:[#allocation5 + $0xcc8] sm:$0xff]
    %v463 = vld [vmem:[#allocation5 + $0xcd0] sm:$0xff]
    %v464 = vld [vmem:[#allocation5 + $0xcd8] sm:$0xff]
    %v465 = vld [vmem:[#allocation5 + $0xce0] sm:$0xff]
    %v466 = vld [vmem:[#allocation5 + $0xce8] sm:$0xff]
    %v467 = vld [vmem:[#allocation5 + $0xcf0] sm:$0xff]
    %v468 = vld [vmem:[#allocation5 + $0xcf8] sm:$0xff]
    %v469 = vld [vmem:[#allocation5 + $0xd00] sm:$0xff]
    %v470 = vld [vmem:[#allocation5 + $0xd08] sm:$0xff]
    %v471 = vld [vmem:[#allocation5 + $0xd10] sm:$0xff]
    %v472 = vld [vmem:[#allocation5 + $0xd18] sm:$0xff]
    %v473 = vld [vmem:[#allocation5 + $0xd20] sm:$0xff]
    %v474 = vld [vmem:[#allocation5 + $0xd28] sm:$0xff]
    %v475 = vld [vmem:[#allocation5 + $0xd30] sm:$0xff]
    %v476 = vld [vmem:[#allocation5 + $0xd38] sm:$0xff]
    %v477 = vld [vmem:[#allocation5 + $0xd40] sm:$0xff]
    %v478 = vld [vmem:[#allocation5 + $0xd48] sm:$0xff]
    %v479 = vld [vmem:[#allocation5 + $0xd50] sm:$0xff]
    %v480 = vld [vmem:[#allocation5 + $0xd58] sm:$0xff]
    %v481 = vld [vmem:[#allocation5 + $0xd60] sm:$0xff]
    %v482 = vld [vmem:[#allocation5 + $0xd68] sm:$0xff]
    %v483 = vld [vmem:[#allocation5 + $0xd70] sm:$0xff]
    %v484 = vld [vmem:[#allocation5 + $0xd78] sm:$0xff]
    %v485 = vld [vmem:[#allocation5 + $0xd80] sm:$0xff]
    %v486 = vld [vmem:[#allocation5 + $0xd88] sm:$0xff]
    %v487 = vld [vmem:[#allocation5 + $0xd90] sm:$0xff]
    %v488 = vld [vmem:[#allocation5 + $0xd98] sm:$0xff]
    %v489 = vld [vmem:[#allocation5 + $0xda0] sm:$0xff]
    %v490 = vld [vmem:[#allocation5 + $0xda8] sm:$0xff]
    %v491 = vld [vmem:[#allocation5 + $0xdb0] sm:$0xff]
    %v492 = vld [vmem:[#allocation5 + $0xdb8] sm:$0xff]
    %v493 = vld [vmem:[#allocation5 + $0xdc0] sm:$0xff]
    %v494 = vld [vmem:[#allocation5 + $0xdc8] sm:$0xff]
    %v495 = vld [vmem:[#allocation5 + $0xdd0] sm:$0xff]
    %v496 = vld [vmem:[#allocation5 + $0xdd8] sm:$0xff]
    %v497 = vld [vmem:[#allocation5 + $0xde0] sm:$0xff]
    %v498 = vld [vmem:[#allocation5 + $0xde8] sm:$0xff]
    %v499 = vld [vmem:[#allocation5 + $0xdf0] sm:$0xff]
    %v500 = vld [vmem:[#allocation5 + $0xdf8] sm:$0xff]
    %v501 = vld [vmem:[#allocation5 + $0xe00] sm:$0xff]
    %v502 = vld [vmem:[#allocation5 + $0xe08] sm:$0xff]
    %v503 = vld [vmem:[#allocation5 + $0xe10] sm:$0xff]
    %v504 = vld [vmem:[#allocation5 + $0xe18] sm:$0xff]
    %v505 = vld [vmem:[#allocation5 + $0xe20] sm:$0xff]
    %v506 = vld [vmem:[#allocation5 + $0xe28] sm:$0xff]
    %v507 = vld [vmem:[#allocation5 + $0xe30] sm:$0xff]
    %v508 = vld [vmem:[#allocation5 + $0xe38] sm:$0xff]
    %v509 = vld [vmem:[#allocation5 + $0xe40] sm:$0xff]
    %v510 = vld [vmem:[#allocation5 + $0xe48] sm:$0xff]
    %v511 = vld [vmem:[#allocation5 + $0xe50] sm:$0xff]
    %v512 = vld [vmem:[#allocation5 + $0xe58] sm:$0xff]
    %v513 = vld [vmem:[#allocation5 + $0xe60] sm:$0xff]
    %v514 = vld [vmem:[#allocation5 + $0xe68] sm:$0xff]
    %v515 = vld [vmem:[#allocation5 + $0xe70] sm:$0xff]
    %v516 = vld [vmem:[#allocation5 + $0xe78] sm:$0xff]
    %v517 = vld [vmem:[#allocation5 + $0xe80] sm:$0xff]
    %v518 = vld [vmem:[#allocation5 + $0xe88] sm:$0xff]
    %v519 = vld [vmem:[#allocation5 + $0xe90] sm:$0xff]
    %v520 = vld [vmem:[#allocation5 + $0xe98] sm:$0xff]
    %v521 = vld [vmem:[#allocation5 + $0xea0] sm:$0xff]
    %v522 = vld [vmem:[#allocation5 + $0xea8] sm:$0xff]
    %v523 = vld [vmem:[#allocation5 + $0xeb0] sm:$0xff]
    %v524 = vld [vmem:[#allocation5 + $0xeb8] sm:$0xff]
    %v525 = vld [vmem:[#allocation5 + $0xec0] sm:$0xff]
    %v526 = vld [vmem:[#allocation5 + $0xec8] sm:$0xff]
    %v527 = vld [vmem:[#allocation5 + $0xed0] sm:$0xff]
    %v528 = vld [vmem:[#allocation5 + $0xed8] sm:$0xff]
    %v529 = vld [vmem:[#allocation5 + $0xee0] sm:$0xff]
    %v530 = vld [vmem:[#allocation5 + $0xee8] sm:$0xff]
    %v531 = vld [vmem:[#allocation5 + $0xef0] sm:$0xff]
    %v532 = vld [vmem:[#allocation5 + $0xef8] sm:$0xff]
    %v533 = vld [vmem:[#allocation5 + $0xf00] sm:$0xff]
    %v534 = vld [vmem:[#allocation5 + $0xf08] sm:$0xff]
    %v535 = vld [vmem:[#allocation5 + $0xf10] sm:$0xff]
    %v536 = vld [vmem:[#allocation5 + $0xf18] sm:$0xff]
    %v537 = vld [vmem:[#allocation5 + $0xf20] sm:$0xff]
    %v538 = vld [vmem:[#allocation5 + $0xf28] sm:$0xff]
    %v539 = vld [vmem:[#allocation5 + $0xf30] sm:$0xff]
    %v540 = vld [vmem:[#allocation5 + $0xf38] sm:$0xff]
    %v541 = vld [vmem:[#allocation5 + $0xf40] sm:$0xff]
    %v542 = vld [vmem:[#allocation5 + $0xf48] sm:$0xff]
    %v543 = vld [vmem:[#allocation5 + $0xf50] sm:$0xff]
    %v544 = vld [vmem:[#allocation5 + $0xf58] sm:$0xff]
    %v545 = vld [vmem:[#allocation5 + $0xf60] sm:$0xff]
    %v546 = vld [vmem:[#allocation5 + $0xf68] sm:$0xff]
    %v547 = vld [vmem:[#allocation5 + $0xf70] sm:$0xff]
    %v548 = vld [vmem:[#allocation5 + $0xf78] sm:$0xff]
    %v549 = vld [vmem:[#allocation5 + $0xf80] sm:$0xff]
    %v550 = vld [vmem:[#allocation5 + $0xf88] sm:$0xff]
    %v551 = vld [vmem:[#allocation5 + $0xf90] sm:$0xff]
    %v552 = vld [vmem:[#allocation5 + $0xf98] sm:$0xff]
    %v553 = vld [vmem:[#allocation5 + $0xfa0] sm:$0xff]
    %v554 = vld [vmem:[#allocation5 + $0xfa8] sm:$0xff]
    %v555 = vld [vmem:[#allocation5 + $0xfb0] sm:$0xff]
    %v556 = vld [vmem:[#allocation5 + $0xfb8] sm:$0xff]
    %v557 = vld [vmem:[#allocation5 + $0xfc0] sm:$0xff]
    %v558 = vld [vmem:[#allocation5 + $0xfc8] sm:$0xff]
    %v559 = vld [vmem:[#allocation5 + $0xfd0] sm:$0xff]
    %v560 = vld [vmem:[#allocation5 + $0xfd8] sm:$0xff]
    %v561 = vld [vmem:[#allocation5 + $0xfe0] sm:$0xff]
    %v562 = vld [vmem:[#allocation5 + $0xfe8] sm:$0xff]
    %v563 = vld [vmem:[#allocation5 + $0xff0] sm:$0xff]
    %v564 = vld [vmem:[#allocation5 + $0xff8] sm:$0xff]
    %v565 = vld [vmem:[#allocation5 + $0x1000] sm:$0xff]
    %v566 = vld [vmem:[#allocation5 + $0x1008] sm:$0xff]
    %v567 = vld [vmem:[#allocation5 + $0x1010] sm:$0xff]
    %v568 = vld [vmem:[#allocation5 + $0x1018] sm:$0xff]
    %v569 = vld [vmem:[#allocation5 + $0x1020] sm:$0xff]
    %v570 = vld [vmem:[#allocation5 + $0x1028] sm:$0xff]
    %v571 = vld [vmem:[#allocation5 + $0x1030] sm:$0xff]
    %v572 = vld [vmem:[#allocation5 + $0x1038] sm:$0xff]
    %v573 = vld [vmem:[#allocation5 + $0x1040] sm:$0xff]
    %v574 = vld [vmem:[#allocation5 + $0x1048] sm:$0xff]
    %v575 = vld [vmem:[#allocation5 + $0x1050] sm:$0xff]
    %v576 = vld [vmem:[#allocation5 + $0x1058] sm:$0xff]
    %v577 = vld [vmem:[#allocation5 + $0x1060] sm:$0xff]
    %v578 = vld [vmem:[#allocation5 + $0x1068] sm:$0xff]
    %v579 = vld [vmem:[#allocation5 + $0x1070] sm:$0xff]
    %v580 = vld [vmem:[#allocation5 + $0x1078] sm:$0xff]
    %v581 = vld [vmem:[#allocation5 + $0x1080] sm:$0xff]
    %v582 = vld [vmem:[#allocation5 + $0x1088] sm:$0xff]
    %v583 = vld [vmem:[#allocation5 + $0x1090] sm:$0xff]
    %v584 = vld [vmem:[#allocation5 + $0x1098] sm:$0xff]
    %v585 = vld [vmem:[#allocation5 + $0x10a0] sm:$0xff]
    %v586 = vld [vmem:[#allocation5 + $0x10a8] sm:$0xff]
    %v587 = vld [vmem:[#allocation5 + $0x10b0] sm:$0xff]
    %v588 = vld [vmem:[#allocation5 + $0x10b8] sm:$0xff]
    %v589 = vld [vmem:[#allocation5 + $0x10c0] sm:$0xff]
    %v590 = vld [vmem:[#allocation5 + $0x10c8] sm:$0xff]
    %v591 = vld [vmem:[#allocation5 + $0x10d0] sm:$0xff]
    %v592 = vld [vmem:[#allocation5 + $0x10d8] sm:$0xff]
    %v593 = vld [vmem:[#allocation5 + $0x10e0] sm:$0xff]
    %v594 = vld [vmem:[#allocation5 + $0x10e8] sm:$0xff]
    %v595 = vld [vmem:[#allocation5 + $0x10f0] sm:$0xff]
    %v596 = vld [vmem:[#allocation5 + $0x10f8] sm:$0xff]
    %v597 = vld [vmem:[#allocation5 + $0x1100] sm:$0xff]
    %v598 = vld [vmem:[#allocation5 + $0x1108] sm:$0xff]
    %v599 = vld [vmem:[#allocation5 + $0x1110] sm:$0xff]
    %v600 = vld [vmem:[#allocation5 + $0x1118] sm:$0xff]
    %v601 = vld [vmem:[#allocation5 + $0x1120] sm:$0xff]
    %v602 = vld [vmem:[#allocation5 + $0x1128] sm:$0xff]
    %v603 = vld [vmem:[#allocation5 + $0x1130] sm:$0xff]
    %v604 = vld [vmem:[#allocation5 + $0x1138] sm:$0xff]
    %v605 = vld [vmem:[#allocation5 + $0x1140] sm:$0xff]
    %v606 = vld [vmem:[#allocation5 + $0x1148] sm:$0xff]
    %v607 = vld [vmem:[#allocation5 + $0x1150] sm:$0xff]
    %v608 = vld [vmem:[#allocation5 + $0x1158] sm:$0xff]
    %v609 = vld [vmem:[#allocation5 + $0x1160] sm:$0xff]
    %v610 = vld [vmem:[#allocation5 + $0x1168] sm:$0xff]
    %v611 = vld [vmem:[#allocation5 + $0x1170] sm:$0xff]
    %v612 = vld [vmem:[#allocation5 + $0x1178] sm:$0xff]
    %v613 = vld [vmem:[#allocation5 + $0x1180] sm:$0xff]
    %v614 = vld [vmem:[#allocation5 + $0x1188] sm:$0xff]
    %v615 = vld [vmem:[#allocation5 + $0x1190] sm:$0xff]
    %v616 = vld [vmem:[#allocation5 + $0x1198] sm:$0xff]
    %v617 = vld [vmem:[#allocation5 + $0x11a0] sm:$0xff]
    %v618 = vld [vmem:[#allocation5 + $0x11a8] sm:$0xff]
    %v619 = vld [vmem:[#allocation5 + $0x11b0] sm:$0xff]
    %v620 = vld [vmem:[#allocation5 + $0x11b8] sm:$0xff]
    %v621 = vld [vmem:[#allocation5 + $0x11c0] sm:$0xff]
    %v622 = vld [vmem:[#allocation5 + $0x11c8] sm:$0xff]
    %v623 = vld [vmem:[#allocation5 + $0x11d0] sm:$0xff]
    %v624 = vld [vmem:[#allocation5 + $0x11d8] sm:$0xff]
    %v625 = vld [vmem:[#allocation5 + $0x11e0] sm:$0xff]
    %v626 = vld [vmem:[#allocation5 + $0x11e8] sm:$0xff]
    %v627 = vld [vmem:[#allocation5 + $0x11f0] sm:$0xff]
    %v628 = vld [vmem:[#allocation5 + $0x11f8] sm:$0xff]
    %v629 = vld [vmem:[#allocation5 + $0x1200] sm:$0xff]
    %v630 = vld [vmem:[#allocation5 + $0x1208] sm:$0xff]
    %v631 = vld [vmem:[#allocation5 + $0x1210] sm:$0xff]
    %v632 = vld [vmem:[#allocation5 + $0x1218] sm:$0xff]
    %v633 = vld [vmem:[#allocation5 + $0x1220] sm:$0xff]
    %v634 = vld [vmem:[#allocation5 + $0x1228] sm:$0xff]
    %v635 = vld [vmem:[#allocation5 + $0x1230] sm:$0xff]
    %v636 = vld [vmem:[#allocation5 + $0x1238] sm:$0xff]
    %v637 = vld [vmem:[#allocation5 + $0x1240] sm:$0xff]
    %v638 = vld [vmem:[#allocation5 + $0x1248] sm:$0xff]
    %v639 = vld [vmem:[#allocation5 + $0x1250] sm:$0xff]
    %v640 = vld [vmem:[#allocation5 + $0x1258] sm:$0xff]
    %v641 = vld [vmem:[#allocation5 + $0x1260] sm:$0xff]
    %v642 = vld [vmem:[#allocation5 + $0x1268] sm:$0xff]
    %v643 = vld [vmem:[#allocation5 + $0x1270] sm:$0xff]
    %v644 = vld [vmem:[#allocation5 + $0x1278] sm:$0xff]
    %v645 = vld [vmem:[#allocation5 + $0x1280] sm:$0xff]
    %v646 = vld [vmem:[#allocation5 + $0x1288] sm:$0xff]
    %v647 = vld [vmem:[#allocation5 + $0x1290] sm:$0xff]
    %v648 = vld [vmem:[#allocation5 + $0x1298] sm:$0xff]
    %v649 = vld [vmem:[#allocation5 + $0x12a0] sm:$0xff]
    %v650 = vld [vmem:[#allocation5 + $0x12a8] sm:$0xff]
    %v651 = vld [vmem:[#allocation5 + $0x12b0] sm:$0xff]
    %v652 = vld [vmem:[#allocation5 + $0x12b8] sm:$0xff]
    %v653 = vld [vmem:[#allocation5 + $0x12c0] sm:$0xff]
    %v654 = vld [vmem:[#allocation5 + $0x12c8] sm:$0xff]
    %v655 = vld [vmem:[#allocation5 + $0x12d0] sm:$0xff]
    %v656 = vld [vmem:[#allocation5 + $0x12d8] sm:$0xff]
    %v657 = vld [vmem:[#allocation5 + $0x12e0] sm:$0xff]
    %v658 = vld [vmem:[#allocation5 + $0x12e8] sm:$0xff]
    %v659 = vld [vmem:[#allocation5 + $0x12f0] sm:$0xff]
    %v660 = vld [vmem:[#allocation5 + $0x12f8] sm:$0xff]
    %v661 = vld [vmem:[#allocation5 + $0x1300] sm:$0xff]
    %v662 = vld [vmem:[#allocation5 + $0x1308] sm:$0xff]
    %v663 = vld [vmem:[#allocation5 + $0x1310] sm:$0xff]
    %v664 = vld [vmem:[#allocation5 + $0x1318] sm:$0xff]
    %v665 = vld [vmem:[#allocation5 + $0x1320] sm:$0xff]
    %v666 = vld [vmem:[#allocation5 + $0x1328] sm:$0xff]
    %v667 = vld [vmem:[#allocation5 + $0x1330] sm:$0xff]
    %v668 = vld [vmem:[#allocation5 + $0x1338] sm:$0xff]
    %v669 = vld [vmem:[#allocation5 + $0x1340] sm:$0xff]
    %v670 = vld [vmem:[#allocation5 + $0x1348] sm:$0xff]
    %v671 = vld [vmem:[#allocation5 + $0x1350] sm:$0xff]
    %v672 = vld [vmem:[#allocation5 + $0x1358] sm:$0xff]
    %v673 = vld [vmem:[#allocation5 + $0x1360] sm:$0xff]
    %v674 = vld [vmem:[#allocation5 + $0x1368] sm:$0xff]
    %v675 = vld [vmem:[#allocation5 + $0x1370] sm:$0xff]
    %v676 = vld [vmem:[#allocation5 + $0x1378] sm:$0xff]
    %v677 = vld [vmem:[#allocation5 + $0x1380] sm:$0xff]
    %v678 = vld [vmem:[#allocation5 + $0x1388] sm:$0xff]
    %v679 = vld [vmem:[#allocation5 + $0x1390] sm:$0xff]
    %v680 = vld [vmem:[#allocation5 + $0x1398] sm:$0xff]
    %v681 = vld [vmem:[#allocation5 + $0x13a0] sm:$0xff]
    %v682 = vld [vmem:[#allocation5 + $0x13a8] sm:$0xff]
    %v683 = vld [vmem:[#allocation5 + $0x13b0] sm:$0xff]
    %v684 = vld [vmem:[#allocation5 + $0x13b8] sm:$0xff]
    %v685 = vld [vmem:[#allocation5 + $0x13c0] sm:$0xff]
    %v686 = vld [vmem:[#allocation5 + $0x13c8] sm:$0xff]
    %v687 = vld [vmem:[#allocation5 + $0x13d0] sm:$0xff]
    %v688 = vld [vmem:[#allocation5 + $0x13d8] sm:$0xff]
    %v689 = vld [vmem:[#allocation5 + $0x13e0] sm:$0xff]
    %v690 = vld [vmem:[#allocation5 + $0x13e8] sm:$0xff]
    %v691 = vld [vmem:[#allocation5 + $0x13f0] sm:$0xff]
    %v692 = vld [vmem:[#allocation5 + $0x13f8] sm:$0xff]
    %v693 = vld [vmem:[#allocation5 + $0x1400] sm:$0xff]
    %v694 = vld [vmem:[#allocation5 + $0x1408] sm:$0xff]
    %v695 = vld [vmem:[#allocation5 + $0x1410] sm:$0xff]
    %v696 = vld [vmem:[#allocation5 + $0x1418] sm:$0xff]
    %v697 = vld [vmem:[#allocation5 + $0x1420] sm:$0xff]
    %v698 = vld [vmem:[#allocation5 + $0x1428] sm:$0xff]
    %v699 = vld [vmem:[#allocation5 + $0x1430] sm:$0xff]
    %v700 = vld [vmem:[#allocation5 + $0x1438] sm:$0xff]
    %v701 = vld [vmem:[#allocation5 + $0x1440] sm:$0xff]
    %v702 = vld [vmem:[#allocation5 + $0x1448] sm:$0xff]
    %v703 = vld [vmem:[#allocation5 + $0x1450] sm:$0xff]
    %v704 = vld [vmem:[#allocation5 + $0x1458] sm:$0xff]
    %v705 = vld [vmem:[#allocation5 + $0x1460] sm:$0xff]
    %v706 = vld [vmem:[#allocation5 + $0x1468] sm:$0xff]
    %v707 = vld [vmem:[#allocation5 + $0x1470] sm:$0xff]
    %v708 = vld [vmem:[#allocation5 + $0x1478] sm:$0xff]
    %v709 = vld [vmem:[#allocation5 + $0x1480] sm:$0xff]
    %v710 = vld [vmem:[#allocation5 + $0x1488] sm:$0xff]
    %v711 = vld [vmem:[#allocation5 + $0x1490] sm:$0xff]
    %v712 = vld [vmem:[#allocation5 + $0x1498] sm:$0xff]
    %v713 = vld [vmem:[#allocation5 + $0x14a0] sm:$0xff]
    %v714 = vld [vmem:[#allocation5 + $0x14a8] sm:$0xff]
    %v715 = vld [vmem:[#allocation5 + $0x14b0] sm:$0xff]
    %v716 = vld [vmem:[#allocation5 + $0x14b8] sm:$0xff]
    %v717 = vld [vmem:[#allocation5 + $0x14c0] sm:$0xff]
    %v718 = vld [vmem:[#allocation5 + $0x14c8] sm:$0xff]
    %v719 = vld [vmem:[#allocation5 + $0x14d0] sm:$0xff]
    %v720 = vld [vmem:[#allocation5 + $0x14d8] sm:$0xff]
    %v721 = vld [vmem:[#allocation5 + $0x14e0] sm:$0xff]
    %v722 = vld [vmem:[#allocation5 + $0x14e8] sm:$0xff]
    %v723 = vld [vmem:[#allocation5 + $0x14f0] sm:$0xff]
    %v724 = vld [vmem:[#allocation5 + $0x14f8] sm:$0xff]
    %v725 = vld [vmem:[#allocation5 + $0x1500] sm:$0xff]
    %v726 = vld [vmem:[#allocation5 + $0x1508] sm:$0xff]
    %v727 = vld [vmem:[#allocation5 + $0x1510] sm:$0xff]
    %v728 = vld [vmem:[#allocation5 + $0x1518] sm:$0xff]
    %v729 = vld [vmem:[#allocation5 + $0x1520] sm:$0xff]
    %v730 = vld [vmem:[#allocation5 + $0x1528] sm:$0xff]
    %v731 = vld [vmem:[#allocation5 + $0x1530] sm:$0xff]
    %v732 = vld [vmem:[#allocation5 + $0x1538] sm:$0xff]
    %v733 = vld [vmem:[#allocation5 + $0x1540] sm:$0xff]
    %v734 = vld [vmem:[#allocation5 + $0x1548] sm:$0xff]
    %v735 = vld [vmem:[#allocation5 + $0x1550] sm:$0xff]
    %v736 = vld [vmem:[#allocation5 + $0x1558] sm:$0xff]
    %v737 = vld [vmem:[#allocation5 + $0x1560] sm:$0xff]
    %v738 = vld [vmem:[#allocation5 + $0x1568] sm:$0xff]
    %v739 = vld [vmem:[#allocation5 + $0x1570] sm:$0xff]
    %v740 = vld [vmem:[#allocation5 + $0x1578] sm:$0xff]
    %v741 = vld [vmem:[#allocation5 + $0x1580] sm:$0xff]
    %v742 = vld [vmem:[#allocation5 + $0x1588] sm:$0xff]
    %v743 = vld [vmem:[#allocation5 + $0x1590] sm:$0xff]
    %v744 = vld [vmem:[#allocation5 + $0x1598] sm:$0xff]
    %v745 = vld [vmem:[#allocation5 + $0x15a0] sm:$0xff]
    %v746 = vld [vmem:[#allocation5 + $0x15a8] sm:$0xff]
    %v747 = vld [vmem:[#allocation5 + $0x15b0] sm:$0xff]
    %v748 = vld [vmem:[#allocation5 + $0x15b8] sm:$0xff]
    %v749 = vld [vmem:[#allocation5 + $0x15c0] sm:$0xff]
    %v750 = vld [vmem:[#allocation5 + $0x15c8] sm:$0xff]
    %v751 = vld [vmem:[#allocation5 + $0x15d0] sm:$0xff]
    %v752 = vld [vmem:[#allocation5 + $0x15d8] sm:$0xff]
    %v753 = vld [vmem:[#allocation5 + $0x15e0] sm:$0xff]
    %v754 = vld [vmem:[#allocation5 + $0x15e8] sm:$0xff]
    %v755 = vld [vmem:[#allocation5 + $0x15f0] sm:$0xff]
    %v756 = vld [vmem:[#allocation5 + $0x15f8] sm:$0xff]
    %v757 = vld [vmem:[#allocation5 + $0x1600] sm:$0xff]
    %v758 = vld [vmem:[#allocation5 + $0x1608] sm:$0xff]
    %v759 = vld [vmem:[#allocation5 + $0x1610] sm:$0xff]
    %v760 = vld [vmem:[#allocation5 + $0x1618] sm:$0xff]
    %v761 = vld [vmem:[#allocation5 + $0x1620] sm:$0xff]
    %v762 = vld [vmem:[#allocation5 + $0x1628] sm:$0xff]
    %v763 = vld [vmem:[#allocation5 + $0x1630] sm:$0xff]
    %v764 = vld [vmem:[#allocation5 + $0x1638] sm:$0xff]
    %v765 = vld [vmem:[#allocation5 + $0x1640] sm:$0xff]
    %v766 = vld [vmem:[#allocation5 + $0x1648] sm:$0xff]
    %v767 = vld [vmem:[#allocation5 + $0x1650] sm:$0xff]
    %v768 = vld [vmem:[#allocation5 + $0x1658] sm:$0xff]
    %v769 = vld [vmem:[#allocation5 + $0x1660] sm:$0xff]
    %v770 = vld [vmem:[#allocation5 + $0x1668] sm:$0xff]
    %v771 = vld [vmem:[#allocation5 + $0x1670] sm:$0xff]
    %v772 = vld [vmem:[#allocation5 + $0x1678] sm:$0xff]
    %v773 = vld [vmem:[#allocation5 + $0x1680] sm:$0xff]
    %v774 = vld [vmem:[#allocation5 + $0x1688] sm:$0xff]
    %v775 = vld [vmem:[#allocation5 + $0x1690] sm:$0xff]
    %v776 = vld [vmem:[#allocation5 + $0x1698] sm:$0xff]
    %v777 = vld [vmem:[#allocation5 + $0x16a0] sm:$0xff]
    %v778 = vld [vmem:[#allocation5 + $0x16a8] sm:$0xff]
    %v779 = vld [vmem:[#allocation5 + $0x16b0] sm:$0xff]
    %v780 = vld [vmem:[#allocation5 + $0x16b8] sm:$0xff]
    %v781 = vld [vmem:[#allocation5 + $0x16c0] sm:$0xff]
    %v782 = vld [vmem:[#allocation5 + $0x16c8] sm:$0xff]
    %v783 = vld [vmem:[#allocation5 + $0x16d0] sm:$0xff]
    %v784 = vld [vmem:[#allocation5 + $0x16d8] sm:$0xff]
    %v785 = vld [vmem:[#allocation5 + $0x16e0] sm:$0xff]
    %v786 = vld [vmem:[#allocation5 + $0x16e8] sm:$0xff]
    %v787 = vld [vmem:[#allocation5 + $0x16f0] sm:$0xff]
    %v788 = vld [vmem:[#allocation5 + $0x16f8] sm:$0xff]
    %v789 = vld [vmem:[#allocation5 + $0x1700] sm:$0xff]
    %v790 = vld [vmem:[#allocation5 + $0x1708] sm:$0xff]
    %v791 = vld [vmem:[#allocation5 + $0x1710] sm:$0xff]
    %v792 = vld [vmem:[#allocation5 + $0x1718] sm:$0xff]
    %v793 = vld [vmem:[#allocation5 + $0x1720] sm:$0xff]
    %v794 = vld [vmem:[#allocation5 + $0x1728] sm:$0xff]
    %v795 = vld [vmem:[#allocation5 + $0x1730] sm:$0xff]
    %v796 = vld [vmem:[#allocation5 + $0x1738] sm:$0xff]
    %v797 = vld [vmem:[#allocation5 + $0x1740] sm:$0xff]
    %v798 = vld [vmem:[#allocation5 + $0x1748] sm:$0xff]
    %v799 = vld [vmem:[#allocation5 + $0x1750] sm:$0xff]
    %v800 = vld [vmem:[#allocation5 + $0x1758] sm:$0xff]
    %v801 = vld [vmem:[#allocation5 + $0x1760] sm:$0xff]
    %v802 = vld [vmem:[#allocation5 + $0x1768] sm:$0xff]
    %v803 = vld [vmem:[#allocation5 + $0x1770] sm:$0xff]
    %v804 = vld [vmem:[#allocation5 + $0x1778] sm:$0xff]
    %v805 = vld [vmem:[#allocation5 + $0x1780] sm:$0xff]
    %v806 = vld [vmem:[#allocation5 + $0x1788] sm:$0xff]
    %v807 = vld [vmem:[#allocation5 + $0x1790] sm:$0xff]
    %v808 = vld [vmem:[#allocation5 + $0x1798] sm:$0xff]
    %v809 = vld [vmem:[#allocation5 + $0x17a0] sm:$0xff]
    %v810 = vld [vmem:[#allocation5 + $0x17a8] sm:$0xff]
    %v811 = vld [vmem:[#allocation5 + $0x17b0] sm:$0xff]
    %v812 = vld [vmem:[#allocation5 + $0x17b8] sm:$0xff]
    %v813 = vld [vmem:[#allocation5 + $0x17c0] sm:$0xff]
    %v814 = vld [vmem:[#allocation5 + $0x17c8] sm:$0xff]
    %v815 = vld [vmem:[#allocation5 + $0x17d0] sm:$0xff]
    %v816 = vld [vmem:[#allocation5 + $0x17d8] sm:$0xff]
    %v817 = vld [vmem:[#allocation5 + $0x17e0] sm:$0xff]
    %v818 = vld [vmem:[#allocation5 + $0x17e8] sm:$0xff]
    %v819 = vld [vmem:[#allocation5 + $0x17f0] sm:$0xff]
    %v820 = vld [vmem:[#allocation5 + $0x17f8] sm:$0xff]
    %v821 = vld [vmem:[#allocation5 + $0x1800] sm:$0xff]
    %v822 = vld [vmem:[#allocation5 + $0x1808] sm:$0xff]
    %v823 = vld [vmem:[#allocation5 + $0x1810] sm:$0xff]
    %v824 = vld [vmem:[#allocation5 + $0x1818] sm:$0xff]
    %v825 = vld [vmem:[#allocation5 + $0x1820] sm:$0xff]
    %v826 = vld [vmem:[#allocation5 + $0x1828] sm:$0xff]
    %v827 = vld [vmem:[#allocation5 + $0x1830] sm:$0xff]
    %v828 = vld [vmem:[#allocation5 + $0x1838] sm:$0xff]
    %v829 = vld [vmem:[#allocation5 + $0x1840] sm:$0xff]
    %v830 = vld [vmem:[#allocation5 + $0x1848] sm:$0xff]
    %v831 = vld [vmem:[#allocation5 + $0x1850] sm:$0xff]
    %v832 = vld [vmem:[#allocation5 + $0x1858] sm:$0xff]
    %v833 = vld [vmem:[#allocation5 + $0x1860] sm:$0xff]
    %v834 = vld [vmem:[#allocation5 + $0x1868] sm:$0xff]
    %v835 = vld [vmem:[#allocation5 + $0x1870] sm:$0xff]
    %v836 = vld [vmem:[#allocation5 + $0x1878] sm:$0xff]
    %v837 = vld [vmem:[#allocation5 + $0x1880] sm:$0xff]
    %v838 = vld [vmem:[#allocation5 + $0x1888] sm:$0xff]
    %v839 = vld [vmem:[#allocation5 + $0x1890] sm:$0xff]
    %v840 = vld [vmem:[#allocation5 + $0x1898] sm:$0xff]
    %v841 = vld [vmem:[#allocation5 + $0x18a0] sm:$0xff]
    %v842 = vld [vmem:[#allocation5 + $0x18a8] sm:$0xff]
    %v843 = vld [vmem:[#allocation5 + $0x18b0] sm:$0xff]
    %v844 = vld [vmem:[#allocation5 + $0x18b8] sm:$0xff]
    %v845 = vld [vmem:[#allocation5 + $0x18c0] sm:$0xff]
    %v846 = vld [vmem:[#allocation5 + $0x18c8] sm:$0xff]
    %v847 = vld [vmem:[#allocation5 + $0x18d0] sm:$0xff]
    %v848 = vld [vmem:[#allocation5 + $0x18d8] sm:$0xff]
    %v849 = vld [vmem:[#allocation5 + $0x18e0] sm:$0xff]
    %v850 = vld [vmem:[#allocation5 + $0x18e8] sm:$0xff]
    %v851 = vld [vmem:[#allocation5 + $0x18f0] sm:$0xff]
    %v852 = vld [vmem:[#allocation5 + $0x18f8] sm:$0xff]
    %853 = vmatprep.subr.mxu0 %v54
    %854 = vmatpush1.msra.mxu0 %v53
    %855 = vmatprep.subr.mxu0 %v104
    %856 = vmatpush1.msra.mxu0 %v103
    %857 = vmatprep.subr.mxu0 %v154
    %858 = vmatpush1.msra.mxu0 %v153
    %859 = vmatprep.subr.mxu0 %v204
    %860 = vmatpush1.msra.mxu0 %v203
    %861 = vmatprep.subr.mxu0 %v254
    %862 = vmatpush1.msra.mxu0 %v253
    %863 = vmatprep.subr.mxu0 %v304
    %864 = vmatpush1.msra.mxu0 %v303
    %865 = vmatprep.subr.mxu0 %v354
    %866 = vmatpush1.msra.mxu0 %v353
    %867 = vmatprep.subr.mxu0 %v404
    %868 = vmatpush1.msra.mxu0 %v403
    %869 = vmatprep.subr.mxu0 %v454
    %870 = vmatpush1.msra.mxu0 %v453
    %871 = vmatprep.subr.mxu0 %v504
    %872 = vmatpush1.msra.mxu0 %v503
    %873 = vmatprep.subr.mxu0 %v554
    %874 = vmatpush1.msra.mxu0 %v553
    %875 = vmatprep.subr.mxu0 %v604
    %876 = vmatpush1.msra.mxu0 %v603
    %877 = vmatprep.subr.mxu0 %v654
    %878 = vmatpush1.msra.mxu0 %v653
    %879 = vmatprep.subr.mxu0 %v704
    %880 = vmatpush1.msra.mxu0 %v703
    %881 = vmatprep.subr.mxu0 %v754
    %882 = vmatpush1.msra.mxu0 %v753
    %883 = vmatprep.subr.mxu0 %v804
    %884 = vmatpush1.msra.mxu0 %v803
    %885 = vmatprep.subr.mxu0 0.0
    %886 = vmatpush1.msra.mxu0 0.0
    %887 = vmatprep.subr.mxu0 0.0
    %888 = vmatpush1.msra.mxu0 0.0
    %889 = vmatprep.subr.mxu0 0.0
    %890 = vmatpush1.msra.mxu0 0.0
    %891 = vmatprep.subr.mxu0 0.0
    %892 = vmatpush1.msra.mxu0 0.0
    %893 = vmatprep.subr.mxu0 0.0
    %894 = vmatpush1.msra.mxu0 0.0
    %895 = vmatprep.subr.mxu0 0.0
    %896 = vmatpush1.msra.mxu0 0.0
    %897 = vmatprep.subr.mxu0 0.0
    %898 = vmatpush1.msra.mxu0 0.0
    %899 = vmatprep.subr.mxu0 0.0
    %900 = vmatpush1.msra.mxu0 0.0
    %901 = vmatprep.subr.mxu0 0.0
    %902 = vmatpush1.msra.mxu0 0.0
    %903 = vmatprep.subr.mxu0 0.0
    %904 = vmatpush1.msra.mxu0 0.0
    %905 = vmatprep.subr.mxu0 0.0
    %906 = vmatpush1.msra.mxu0 0.0
    %907 = vmatprep.subr.mxu0 0.0
    %908 = vmatpush1.msra.mxu0 0.0
    %909 = vmatprep.subr.mxu0 0.0
    %910 = vmatpush1.msra.mxu0 0.0
    %911 = vmatprep.subr.mxu0 0.0
    %912 = vmatpush1.msra.mxu0 0.0
    %913 = vmatprep.subr.mxu0 0.0
    %914 = vmatpush1.msra.mxu0 0.0
    %915 = vmatprep.subr.mxu0 0.0
    %916 = vmatpush1.msra.mxu0 0.0
    %917 = vmatprep.mubr.f32.mxu0 0.0
    %918 = vmatmul.mubr.f32.gmra.mrb[0].mxu0 %v52
    %v919 = vpop.f32.mrb[0].mxu0
    %v920 = vadd.f32 0.0, %v919
    %v921 = vpop.f32.mrb[0].mxu0
    %v922 = vadd.f32 0.0, %v921
    %923 = vdwg.mxu0
    %924 = vmatprep.subr.mxu0 %v56
    %925 = vmatpush1.msra.mxu0 %v55
    %926 = vmatprep.subr.mxu0 %v106
    %927 = vmatpush1.msra.mxu0 %v105
    %928 = vmatprep.subr.mxu0 %v156
    %929 = vmatpush1.msra.mxu0 %v155
    %930 = vmatprep.subr.mxu0 %v206
    %931 = vmatpush1.msra.mxu0 %v205
    %932 = vmatprep.subr.mxu0 %v256
    %933 = vmatpush1.msra.mxu0 %v255
    %934 = vmatprep.subr.mxu0 %v306
    %935 = vmatpush1.msra.mxu0 %v305
    %936 = vmatprep.subr.mxu0 %v356
    %937 = vmatpush1.msra.mxu0 %v355
    %938 = vmatprep.subr.mxu0 %v406
    %939 = vmatpush1.msra.mxu0 %v405
    %940 = vmatprep.subr.mxu0 %v456
    %941 = vmatpush1.msra.mxu0 %v455
    %942 = vmatprep.subr.mxu0 %v506
    %943 = vmatpush1.msra.mxu0 %v505
    %944 = vmatprep.subr.mxu0 %v556
    %945 = vmatpush1.msra.mxu0 %v555
    %946 = vmatprep.subr.mxu0 %v606
    %947 = vmatpush1.msra.mxu0 %v605
    %948 = vmatprep.subr.mxu0 %v656
    %949 = vmatpush1.msra.mxu0 %v655
    %950 = vmatprep.subr.mxu0 %v706
    %951 = vmatpush1.msra.mxu0 %v705
    %952 = vmatprep.subr.mxu0 %v756
    %953 = vmatpush1.msra.mxu0 %v755
    %954 = vmatprep.subr.mxu0 %v806
    %955 = vmatpush1.msra.mxu0 %v805
    %956 = vmatprep.subr.mxu0 0.0
    %957 = vmatpush1.msra.mxu0 0.0
    %958 = vmatprep.subr.mxu0 0.0
    %959 = vmatpush1.msra.mxu0 0.0
    %960 = vmatprep.subr.mxu0 0.0
    %961 = vmatpush1.msra.mxu0 0.0
    %962 = vmatprep.subr.mxu0 0.0
    %963 = vmatpush1.msra.mxu0 0.0
    %964 = vmatprep.subr.mxu0 0.0
    %965 = vmatpush1.msra.mxu0 0.0
    %966 = vmatprep.subr.mxu0 0.0
    %967 = vmatpush1.msra.mxu0 0.0
    %968 = vmatprep.subr.mxu0 0.0
    %969 = vmatpush1.msra.mxu0 0.0
    %970 = vmatprep.subr.mxu0 0.0
    %971 = vmatpush1.msra.mxu0 0.0
    %972 = vmatprep.subr.mxu0 0.0
    %973 = vmatpush1.msra.mxu0 0.0
    %974 = vmatprep.subr.mxu0 0.0
    %975 = vmatpush1.msra.mxu0 0.0
    %976 = vmatprep.subr.mxu0 0.0
    %977 = vmatpush1.msra.mxu0 0.0
    %978 = vmatprep.subr.mxu0 0.0
    %979 = vmatpush1.msra.mxu0 0.0
    %980 = vmatprep.subr.mxu0 0.0
    %981 = vmatpush1.msra.mxu0 0.0
    %982 = vmatprep.subr.mxu0 0.0
    %983 = vmatpush1.msra.mxu0 0.0
    %984 = vmatprep.subr.mxu0 0.0
    %985 = vmatpush1.msra.mxu0 0.0
    %986 = vmatprep.subr.mxu0 0.0
    %987 = vmatpush1.msra.mxu0 0.0
    %988 = vmatprep.mubr.f32.mxu0 0.0
    %989 = vmatmul.mubr.f32.gmra.mrb[0].mxu0 %v52
    %v990 = vpop.f32.mrb[0].mxu0
    %v991 = vadd.f32 0.0, %v990
    %v992 = vpop.f32.mrb[0].mxu0
    %v993 = vadd.f32 0.0, %v992
    %994 = vdwg.mxu0
    %995 = vmatprep.subr.mxu0 %v58
    %996 = vmatpush1.msra.mxu0 %v57
    %997 = vmatprep.subr.mxu0 %v108
    %998 = vmatpush1.msra.mxu0 %v107
    %999 = vmatprep.subr.mxu0 %v158
    %1000 = vmatpush1.msra.mxu0 %v157
    %1001 = vmatprep.subr.mxu0 %v208
    %1002 = vmatpush1.msra.mxu0 %v207
    %1003 = vmatprep.subr.mxu0 %v258
    %1004 = vmatpush1.msra.mxu0 %v257
    %1005 = vmatprep.subr.mxu0 %v308
    %1006 = vmatpush1.msra.mxu0 %v307
    %1007 = vmatprep.subr.mxu0 %v358
    %1008 = vmatpush1.msra.mxu0 %v357
    %1009 = vmatprep.subr.mxu0 %v408
    %1010 = vmatpush1.msra.mxu0 %v407
    %1011 = vmatprep.subr.mxu0 %v458
    %1012 = vmatpush1.msra.mxu0 %v457
    %1013 = vmatprep.subr.mxu0 %v508
    %1014 = vmatpush1.msra.mxu0 %v507
    %1015 = vmatprep.subr.mxu0 %v558
    %1016 = vmatpush1.msra.mxu0 %v557
    %1017 = vmatprep.subr.mxu0 %v608
    %1018 = vmatpush1.msra.mxu0 %v607
    %1019 = vmatprep.subr.mxu0 %v658
    %1020 = vmatpush1.msra.mxu0 %v657
    %1021 = vmatprep.subr.mxu0 %v708
    %1022 = vmatpush1.msra.mxu0 %v707
    %1023 = vmatprep.subr.mxu0 %v758
    %1024 = vmatpush1.msra.mxu0 %v757
    %1025 = vmatprep.subr.mxu0 %v808
    %1026 = vmatpush1.msra.mxu0 %v807
    %1027 = vmatprep.subr.mxu0 0.0
    %1028 = vmatpush1.msra.mxu0 0.0
    %1029 = vmatprep.subr.mxu0 0.0
    %1030 = vmatpush1.msra.mxu0 0.0
    %1031 = vmatprep.subr.mxu0 0.0
    %1032 = vmatpush1.msra.mxu0 0.0
    %1033 = vmatprep.subr.mxu0 0.0
    %1034 = vmatpush1.msra.mxu0 0.0
    %1035 = vmatprep.subr.mxu0 0.0
    %1036 = vmatpush1.msra.mxu0 0.0
    %1037 = vmatprep.subr.mxu0 0.0
    %1038 = vmatpush1.msra.mxu0 0.0
    %1039 = vmatprep.subr.mxu0 0.0
    %1040 = vmatpush1.msra.mxu0 0.0
    %1041 = vmatprep.subr.mxu0 0.0
    %1042 = vmatpush1.msra.mxu0 0.0
    %1043 = vmatprep.subr.mxu0 0.0
    %1044 = vmatpush1.msra.mxu0 0.0
    %1045 = vmatprep.subr.mxu0 0.0
    %1046 = vmatpush1.msra.mxu0 0.0
    %1047 = vmatprep.subr.mxu0 0.0
    %1048 = vmatpush1.msra.mxu0 0.0
    %1049 = vmatprep.subr.mxu0 0.0
    %1050 = vmatpush1.msra.mxu0 0.0
    %1051 = vmatprep.subr.mxu0 0.0
    %1052 = vmatpush1.msra.mxu0 0.0
    %1053 = vmatprep.subr.mxu0 0.0
    %1054 = vmatpush1.msra.mxu0 0.0
    %1055 = vmatprep.subr.mxu0 0.0
    %1056 = vmatpush1.msra.mxu0 0.0
    %1057 = vmatprep.subr.mxu0 0.0
    %1058 = vmatpush1.msra.mxu0 0.0
    %1059 = vmatprep.mubr.f32.mxu0 0.0
    %1060 = vmatmul.mubr.f32.gmra.mrb[0].mxu0 %v52
    %v1061 = vpop.f32.mrb[0].mxu0
    %v1062 = vadd.f32 0.0, %v1061
    %v1063 = vpop.f32.mrb[0].mxu0
    %v1064 = vadd.f32 0.0, %v1063
    %1065 = vdwg.mxu0
    %1066 = vmatprep.subr.mxu0 %v60
    %1067 = vmatpush1.msra.mxu0 %v59
    %1068 = vmatprep.subr.mxu0 %v110
    %1069 = vmatpush1.msra.mxu0 %v109
    %1070 = vmatprep.subr.mxu0 %v160
    %1071 = vmatpush1.msra.mxu0 %v159
    %1072 = vmatprep.subr.mxu0 %v210
    %1073 = vmatpush1.msra.mxu0 %v209
    %1074 = vmatprep.subr.mxu0 %v260
    %1075 = vmatpush1.msra.mxu0 %v259
    %1076 = vmatprep.subr.mxu0 %v310
    %1077 = vmatpush1.msra.mxu0 %v309
    %1078 = vmatprep.subr.mxu0 %v360
    %1079 = vmatpush1.msra.mxu0 %v359
    %1080 = vmatprep.subr.mxu0 %v410
    %1081 = vmatpush1.msra.mxu0 %v409
    %1082 = vmatprep.subr.mxu0 %v460
    %1083 = vmatpush1.msra.mxu0 %v459
    %1084 = vmatprep.subr.mxu0 %v510
    %1085 = vmatpush1.msra.mxu0 %v509
    %1086 = vmatprep.subr.mxu0 %v560
    %1087 = vmatpush1.msra.mxu0 %v559
    %1088 = vmatprep.subr.mxu0 %v610
    %1089 = vmatpush1.msra.mxu0 %v609
    %1090 = vmatprep.subr.mxu0 %v660
    %1091 = vmatpush1.msra.mxu0 %v659
    %1092 = vmatprep.subr.mxu0 %v710
    %1093 = vmatpush1.msra.mxu0 %v709
    %1094 = vmatprep.subr.mxu0 %v760
    %1095 = vmatpush1.msra.mxu0 %v759
    %1096 = vmatprep.subr.mxu0 %v810
    %1097 = vmatpush1.msra.mxu0 %v809
    %1098 = vmatprep.subr.mxu0 0.0
    %1099 = vmatpush1.msra.mxu0 0.0
    %1100 = vmatprep.subr.mxu0 0.0
    %1101 = vmatpush1.msra.mxu0 0.0
    %1102 = vmatprep.subr.mxu0 0.0
    %1103 = vmatpush1.msra.mxu0 0.0
    %1104 = vmatprep.subr.mxu0 0.0
    %1105 = vmatpush1.msra.mxu0 0.0
    %1106 = vmatprep.subr.mxu0 0.0
    %1107 = vmatpush1.msra.mxu0 0.0
    %1108 = vmatprep.subr.mxu0 0.0
    %1109 = vmatpush1.msra.mxu0 0.0
    %1110 = vmatprep.subr.mxu0 0.0
    %1111 = vmatpush1.msra.mxu0 0.0
    %1112 = vmatprep.subr.mxu0 0.0
    %1113 = vmatpush1.msra.mxu0 0.0
    %1114 = vmatprep.subr.mxu0 0.0
    %1115 = vmatpush1.msra.mxu0 0.0
    %1116 = vmatprep.subr.mxu0 0.0
    %1117 = vmatpush1.msra.mxu0 0.0
    %1118 = vmatprep.subr.mxu0 0.0
    %1119 = vmatpush1.msra.mxu0 0.0
    %1120 = vmatprep.subr.mxu0 0.0
    %1121 = vmatpush1.msra.mxu0 0.0
    %1122 = vmatprep.subr.mxu0 0.0
    %1123 = vmatpush1.msra.mxu0 0.0
    %1124 = vmatprep.subr.mxu0 0.0
    %1125 = vmatpush1.msra.mxu0 0.0
    %1126 = vmatprep.subr.mxu0 0.0
    %1127 = vmatpush1.msra.mxu0 0.0
    %1128 = vmatprep.subr.mxu0 0.0
    %1129 = vmatpush1.msra.mxu0 0.0
    %1130 = vmatprep.mubr.f32.mxu0 0.0
    %1131 = vmatmul.mubr.f32.gmra.mrb[0].mxu0 %v52
    %v1132 = vpop.f32.mrb[0].mxu0
    %v1133 = vadd.f32 0.0, %v1132
    %v1134 = vpop.f32.mrb[0].mxu0
    %v1135 = vadd.f32 0.0, %v1134
    %1136 = vdwg.mxu0
    %1137 = vmatprep.subr.mxu0 %v62
    %1138 = vmatpush1.msra.mxu0 %v61
    %1139 = vmatprep.subr.mxu0 %v112
    %1140 = vmatpush1.msra.mxu0 %v111
    %1141 = vmatprep.subr.mxu0 %v162
    %1142 = vmatpush1.msra.mxu0 %v161
    %1143 = vmatprep.subr.mxu0 %v212
    %1144 = vmatpush1.msra.mxu0 %v211
    %1145 = vmatprep.subr.mxu0 %v262
    %1146 = vmatpush1.msra.mxu0 %v261
    %1147 = vmatprep.subr.mxu0 %v312
    %1148 = vmatpush1.msra.mxu0 %v311
    %1149 = vmatprep.subr.mxu0 %v362
    %1150 = vmatpush1.msra.mxu0 %v361
    %1151 = vmatprep.subr.mxu0 %v412
    %1152 = vmatpush1.msra.mxu0 %v411
    %1153 = vmatprep.subr.mxu0 %v462
    %1154 = vmatpush1.msra.mxu0 %v461
    %1155 = vmatprep.subr.mxu0 %v512
    %1156 = vmatpush1.msra.mxu0 %v511
    %1157 = vmatprep.subr.mxu0 %v562
    %1158 = vmatpush1.msra.mxu0 %v561
    %1159 = vmatprep.subr.mxu0 %v612
    %1160 = vmatpush1.msra.mxu0 %v611
    %1161 = vmatprep.subr.mxu0 %v662
    %1162 = vmatpush1.msra.mxu0 %v661
    %1163 = vmatprep.subr.mxu0 %v712
    %1164 = vmatpush1.msra.mxu0 %v711
    %1165 = vmatprep.subr.mxu0 %v762
    %1166 = vmatpush1.msra.mxu0 %v761
    %1167 = vmatprep.subr.mxu0 %v812
    %1168 = vmatpush1.msra.mxu0 %v811
    %1169 = vmatprep.subr.mxu0 0.0
    %1170 = vmatpush1.msra.mxu0 0.0
    %1171 = vmatprep.subr.mxu0 0.0
    %1172 = vmatpush1.msra.mxu0 0.0
    %1173 = vmatprep.subr.mxu0 0.0
    %1174 = vmatpush1.msra.mxu0 0.0
    %1175 = vmatprep.subr.mxu0 0.0
    %1176 = vmatpush1.msra.mxu0 0.0
    %1177 = vmatprep.subr.mxu0 0.0
    %1178 = vmatpush1.msra.mxu0 0.0
    %1179 = vmatprep.subr.mxu0 0.0
    %1180 = vmatpush1.msra.mxu0 0.0
    %1181 = vmatprep.subr.mxu0 0.0
    %1182 = vmatpush1.msra.mxu0 0.0
    %1183 = vmatprep.subr.mxu0 0.0
    %1184 = vmatpush1.msra.mxu0 0.0
    %1185 = vmatprep.subr.mxu0 0.0
    %1186 = vmatpush1.msra.mxu0 0.0
    %1187 = vmatprep.subr.mxu0 0.0
    %1188 = vmatpush1.msra.mxu0 0.0
    %1189 = vmatprep.subr.mxu0 0.0
    %1190 = vmatpush1.msra.mxu0 0.0
    %1191 = vmatprep.subr.mxu0 0.0
    %1192 = vmatpush1.msra.mxu0 0.0
    %1193 = vmatprep.subr.mxu0 0.0
    %1194 = vmatpush1.msra.mxu0 0.0
    %1195 = vmatprep.subr.mxu0 0.0
    %1196 = vmatpush1.msra.mxu0 0.0
    %1197 = vmatprep.subr.mxu0 0.0
    %1198 = vmatpush1.msra.mxu0 0.0
    %1199 = vmatprep.subr.mxu0 0.0
    %1200 = vmatpush1.msra.mxu0 0.0
    %1201 = vmatprep.mubr.f32.mxu0 0.0
    %1202 = vmatmul.mubr.f32.gmra.mrb[0].mxu0 %v52
    %v1203 = vpop.f32.mrb[0].mxu0
    %v1204 = vadd.f32 0.0, %v1203
    %v1205 = vpop.f32.mrb[0].mxu0
    %v1206 = vadd.f32 0.0, %v1205
    %1207 = vdwg.mxu0
    %1208 = vmatprep.subr.mxu0 %v64
    %1209 = vmatpush1.msra.mxu0 %v63
    %1210 = vmatprep.subr.mxu0 %v114
    %1211 = vmatpush1.msra.mxu0 %v113
    %1212 = vmatprep.subr.mxu0 %v164
    %1213 = vmatpush1.msra.mxu0 %v163
    %1214 = vmatprep.subr.mxu0 %v214
    %1215 = vmatpush1.msra.mxu0 %v213
    %1216 = vmatprep.subr.mxu0 %v264
    %1217 = vmatpush1.msra.mxu0 %v263
    %1218 = vmatprep.subr.mxu0 %v314
    %1219 = vmatpush1.msra.mxu0 %v313
    %1220 = vmatprep.subr.mxu0 %v364
    %1221 = vmatpush1.msra.mxu0 %v363
    %1222 = vmatprep.subr.mxu0 %v414
    %1223 = vmatpush1.msra.mxu0 %v413
    %1224 = vmatprep.subr.mxu0 %v464
    %1225 = vmatpush1.msra.mxu0 %v463
    %1226 = vmatprep.subr.mxu0 %v514
    %1227 = vmatpush1.msra.mxu0 %v513
    %1228 = vmatprep.subr.mxu0 %v564
    %1229 = vmatpush1.msra.mxu0 %v563
    %1230 = vmatprep.subr.mxu0 %v614
    %1231 = vmatpush1.msra.mxu0 %v613
    %1232 = vmatprep.subr.mxu0 %v664
    %1233 = vmatpush1.msra.mxu0 %v663
    %1234 = vmatprep.subr.mxu0 %v714
    %1235 = vmatpush1.msra.mxu0 %v713
    %1236 = vmatprep.subr.mxu0 %v764
    %1237 = vmatpush1.msra.mxu0 %v763
    %1238 = vmatprep.subr.mxu0 %v814
    %1239 = vmatpush1.msra.mxu0 %v813
    %1240 = vmatprep.subr.mxu0 0.0
    %1241 = vmatpush1.msra.mxu0 0.0
    %1242 = vmatprep.subr.mxu0 0.0
    %1243 = vmatpush1.msra.mxu0 0.0
    %1244 = vmatprep.subr.mxu0 0.0
    %1245 = vmatpush1.msra.mxu0 0.0
    %1246 = vmatprep.subr.mxu0 0.0
    %1247 = vmatpush1.msra.mxu0 0.0
    %1248 = vmatprep.subr.mxu0 0.0
    %1249 = vmatpush1.msra.mxu0 0.0
    %1250 = vmatprep.subr.mxu0 0.0
    %1251 = vmatpush1.msra.mxu0 0.0
    %1252 = vmatprep.subr.mxu0 0.0
    %1253 = vmatpush1.msra.mxu0 0.0
    %1254 = vmatprep.subr.mxu0 0.0
    %1255 = vmatpush1.msra.mxu0 0.0
    %1256 = vmatprep.subr.mxu0 0.0
    %1257 = vmatpush1.msra.mxu0 0.0
    %1258 = vmatprep.subr.mxu0 0.0
    %1259 = vmatpush1.msra.mxu0 0.0
    %1260 = vmatprep.subr.mxu0 0.0
    %1261 = vmatpush1.msra.mxu0 0.0
    %1262 = vmatprep.subr.mxu0 0.0
    %1263 = vmatpush1.msra.mxu0 0.0
    %1264 = vmatprep.subr.mxu0 0.0
    %1265 = vmatpush1.msra.mxu0 0.0
    %1266 = vmatprep.subr.mxu0 0.0
    %1267 = vmatpush1.msra.mxu0 0.0
    %1268 = vmatprep.subr.mxu0 0.0
    %1269 = vmatpush1.msra.mxu0 0.0
    %1270 = vmatprep.subr.mxu0 0.0
    %1271 = vmatpush1.msra.mxu0 0.0
    %1272 = vmatprep.mubr.f32.mxu0 0.0
    %1273 = vmatmul.mubr.f32.gmra.mrb[0].mxu0 %v52
    %v1274 = vpop.f32.mrb[0].mxu0
    %v1275 = vadd.f32 0.0, %v1274
    %v1276 = vpop.f32.mrb[0].mxu0
    %v1277 = vadd.f32 0.0, %v1276
    %1278 = vdwg.mxu0
    %1279 = vmatprep.subr.mxu0 %v66
    %1280 = vmatpush1.msra.mxu0 %v65
    %1281 = vmatprep.subr.mxu0 %v116
    %1282 = vmatpush1.msra.mxu0 %v115
    %1283 = vmatprep.subr.mxu0 %v166
    %1284 = vmatpush1.msra.mxu0 %v165
    %1285 = vmatprep.subr.mxu0 %v216
    %1286 = vmatpush1.msra.mxu0 %v215
    %1287 = vmatprep.subr.mxu0 %v266
    %1288 = vmatpush1.msra.mxu0 %v265
    %1289 = vmatprep.subr.mxu0 %v316
    %1290 = vmatpush1.msra.mxu0 %v315
    %1291 = vmatprep.subr.mxu0 %v366
    %1292 = vmatpush1.msra.mxu0 %v365
    %1293 = vmatprep.subr.mxu0 %v416
    %1294 = vmatpush1.msra.mxu0 %v415
    %1295 = vmatprep.subr.mxu0 %v466
    %1296 = vmatpush1.msra.mxu0 %v465
    %1297 = vmatprep.subr.mxu0 %v516
    %1298 = vmatpush1.msra.mxu0 %v515
    %1299 = vmatprep.subr.mxu0 %v566
    %1300 = vmatpush1.msra.mxu0 %v565
    %1301 = vmatprep.subr.mxu0 %v616
    %1302 = vmatpush1.msra.mxu0 %v615
    %1303 = vmatprep.subr.mxu0 %v666
    %1304 = vmatpush1.msra.mxu0 %v665
    %1305 = vmatprep.subr.mxu0 %v716
    %1306 = vmatpush1.msra.mxu0 %v715
    %1307 = vmatprep.subr.mxu0 %v766
    %1308 = vmatpush1.msra.mxu0 %v765
    %1309 = vmatprep.subr.mxu0 %v816
    %1310 = vmatpush1.msra.mxu0 %v815
    %1311 = vmatprep.subr.mxu0 0.0
    %1312 = vmatpush1.msra.mxu0 0.0
    %1313 = vmatprep.subr.mxu0 0.0
    %1314 = vmatpush1.msra.mxu0 0.0
    %1315 = vmatprep.subr.mxu0 0.0
    %1316 = vmatpush1.msra.mxu0 0.0
    %1317 = vmatprep.subr.mxu0 0.0
    %1318 = vmatpush1.msra.mxu0 0.0
    %1319 = vmatprep.subr.mxu0 0.0
    %1320 = vmatpush1.msra.mxu0 0.0
    %1321 = vmatprep.subr.mxu0 0.0
    %1322 = vmatpush1.msra.mxu0 0.0
    %1323 = vmatprep.subr.mxu0 0.0
    %1324 = vmatpush1.msra.mxu0 0.0
    %1325 = vmatprep.subr.mxu0 0.0
    %1326 = vmatpush1.msra.mxu0 0.0
    %1327 = vmatprep.subr.mxu0 0.0
    %1328 = vmatpush1.msra.mxu0 0.0
    %1329 = vmatprep.subr.mxu0 0.0
    %1330 = vmatpush1.msra.mxu0 0.0
    %1331 = vmatprep.subr.mxu0 0.0
    %1332 = vmatpush1.msra.mxu0 0.0
    %1333 = vmatprep.subr.mxu0 0.0
    %1334 = vmatpush1.msra.mxu0 0.0
    %1335 = vmatprep.subr.mxu0 0.0
    %1336 = vmatpush1.msra.mxu0 0.0
    %1337 = vmatprep.subr.mxu0 0.0
    %1338 = vmatpush1.msra.mxu0 0.0
    %1339 = vmatprep.subr.mxu0 0.0
    %1340 = vmatpush1.msra.mxu0 0.0
    %1341 = vmatprep.subr.mxu0 0.0
    %1342 = vmatpush1.msra.mxu0 0.0
    %1343 = vmatprep.mubr.f32.mxu0 0.0
    %1344 = vmatmul.mubr.f32.gmra.mrb[0].mxu0 %v52
    %v1345 = vpop.f32.mrb[0].mxu0
    %v1346 = vadd.f32 0.0, %v1345
    %v1347 = vpop.f32.mrb[0].mxu0
    %v1348 = vadd.f32 0.0, %v1347
    %1349 = vdwg.mxu0
    %1350 = vmatprep.subr.mxu0 %v68
    %1351 = vmatpush1.msra.mxu0 %v67
    %1352 = vmatprep.subr.mxu0 %v118
    %1353 = vmatpush1.msra.mxu0 %v117
    %1354 = vmatprep.subr.mxu0 %v168
    %1355 = vmatpush1.msra.mxu0 %v167
    %1356 = vmatprep.subr.mxu0 %v218
    %1357 = vmatpush1.msra.mxu0 %v217
    %1358 = vmatprep.subr.mxu0 %v268
    %1359 = vmatpush1.msra.mxu0 %v267
    %1360 = vmatprep.subr.mxu0 %v318
    %1361 = vmatpush1.msra.mxu0 %v317
    %1362 = vmatprep.subr.mxu0 %v368
    %1363 = vmatpush1.msra.mxu0 %v367
    %1364 = vmatprep.subr.mxu0 %v418
    %1365 = vmatpush1.msra.mxu0 %v417
    %1366 = vmatprep.subr.mxu0 %v468
    %1367 = vmatpush1.msra.mxu0 %v467
    %1368 = vmatprep.subr.mxu0 %v518
    %1369 = vmatpush1.msra.mxu0 %v517
    %1370 = vmatprep.subr.mxu0 %v568
    %1371 = vmatpush1.msra.mxu0 %v567
    %1372 = vmatprep.subr.mxu0 %v618
    %1373 = vmatpush1.msra.mxu0 %v617
    %1374 = vmatprep.subr.mxu0 %v668
    %1375 = vmatpush1.msra.mxu0 %v667
    %1376 = vmatprep.subr.mxu0 %v718
    %1377 = vmatpush1.msra.mxu0 %v717
    %1378 = vmatprep.subr.mxu0 %v768
    %1379 = vmatpush1.msra.mxu0 %v767
    %1380 = vmatprep.subr.mxu0 %v818
    %1381 = vmatpush1.msra.mxu0 %v817
    %1382 = vmatprep.subr.mxu0 0.0
    %1383 = vmatpush1.msra.mxu0 0.0
    %1384 = vmatprep.subr.mxu0 0.0
    %1385 = vmatpush1.msra.mxu0 0.0
    %1386 = vmatprep.subr.mxu0 0.0
    %1387 = vmatpush1.msra.mxu0 0.0
    %1388 = vmatprep.subr.mxu0 0.0
    %1389 = vmatpush1.msra.mxu0 0.0
    %1390 = vmatprep.subr.mxu0 0.0
    %1391 = vmatpush1.msra.mxu0 0.0
    %1392 = vmatprep.subr.mxu0 0.0
    %1393 = vmatpush1.msra.mxu0 0.0
    %1394 = vmatprep.subr.mxu0 0.0
    %1395 = vmatpush1.msra.mxu0 0.0
    %1396 = vmatprep.subr.mxu0 0.0
    %1397 = vmatpush1.msra.mxu0 0.0
    %1398 = vmatprep.subr.mxu0 0.0
    %1399 = vmatpush1.msra.mxu0 0.0
    %1400 = vmatprep.subr.mxu0 0.0
    %1401 = vmatpush1.msra.mxu0 0.0
    %1402 = vmatprep.subr.mxu0 0.0
    %1403 = vmatpush1.msra.mxu0 0.0
    %1404 = vmatprep.subr.mxu0 0.0
    %1405 = vmatpush1.msra.mxu0 0.0
    %1406 = vmatprep.subr.mxu0 0.0
    %1407 = vmatpush1.msra.mxu0 0.0
    %1408 = vmatprep.subr.mxu0 0.0
    %1409 = vmatpush1.msra.mxu0 0.0
    %1410 = vmatprep.subr.mxu0 0.0
    %1411 = vmatpush1.msra.mxu0 0.0
    %1412 = vmatprep.subr.mxu0 0.0
    %1413 = vmatpush1.msra.mxu0 0.0
    %1414 = vmatprep.mubr.f32.mxu0 0.0
    %1415 = vmatmul.mubr.f32.gmra.mrb[0].mxu0 %v52
    %v1416 = vpop.f32.mrb[0].mxu0
    %v1417 = vadd.f32 0.0, %v1416
    %v1418 = vpop.f32.mrb[0].mxu0
    %v1419 = vadd.f32 0.0, %v1418
    %1420 = vdwg.mxu0
    %1421 = vmatprep.subr.mxu0 %v70
    %1422 = vmatpush1.msra.mxu0 %v69
    %1423 = vmatprep.subr.mxu0 %v120
    %1424 = vmatpush1.msra.mxu0 %v119
    %1425 = vmatprep.subr.mxu0 %v170
    %1426 = vmatpush1.msra.mxu0 %v169
    %1427 = vmatprep.subr.mxu0 %v220
    %1428 = vmatpush1.msra.mxu0 %v219
    %1429 = vmatprep.subr.mxu0 %v270
    %1430 = vmatpush1.msra.mxu0 %v269
    %1431 = vmatprep.subr.mxu0 %v320
    %1432 = vmatpush1.msra.mxu0 %v319
    %1433 = vmatprep.subr.mxu0 %v370
    %1434 = vmatpush1.msra.mxu0 %v369
    %1435 = vmatprep.subr.mxu0 %v420
    %1436 = vmatpush1.msra.mxu0 %v419
    %1437 = vmatprep.subr.mxu0 %v470
    %1438 = vmatpush1.msra.mxu0 %v469
    %1439 = vmatprep.subr.mxu0 %v520
    %1440 = vmatpush1.msra.mxu0 %v519
    %1441 = vmatprep.subr.mxu0 %v570
    %1442 = vmatpush1.msra.mxu0 %v569
    %1443 = vmatprep.subr.mxu0 %v620
    %1444 = vmatpush1.msra.mxu0 %v619
    %1445 = vmatprep.subr.mxu0 %v670
    %1446 = vmatpush1.msra.mxu0 %v669
    %1447 = vmatprep.subr.mxu0 %v720
    %1448 = vmatpush1.msra.mxu0 %v719
    %1449 = vmatprep.subr.mxu0 %v770
    %1450 = vmatpush1.msra.mxu0 %v769
    %1451 = vmatprep.subr.mxu0 %v820
    %1452 = vmatpush1.msra.mxu0 %v819
    %1453 = vmatprep.subr.mxu0 0.0
    %1454 = vmatpush1.msra.mxu0 0.0
    %1455 = vmatprep.subr.mxu0 0.0
    %1456 = vmatpush1.msra.mxu0 0.0
    %1457 = vmatprep.subr.mxu0 0.0
    %1458 = vmatpush1.msra.mxu0 0.0
    %1459 = vmatprep.subr.mxu0 0.0
    %1460 = vmatpush1.msra.mxu0 0.0
    %1461 = vmatprep.subr.mxu0 0.0
    %1462 = vmatpush1.msra.mxu0 0.0
    %1463 = vmatprep.subr.mxu0 0.0
    %1464 = vmatpush1.msra.mxu0 0.0
    %1465 = vmatprep.subr.mxu0 0.0
    %1466 = vmatpush1.msra.mxu0 0.0
    %1467 = vmatprep.subr.mxu0 0.0
    %1468 = vmatpush1.msra.mxu0 0.0
    %1469 = vmatprep.subr.mxu0 0.0
    %1470 = vmatpush1.msra.mxu0 0.0
    %1471 = vmatprep.subr.mxu0 0.0
    %1472 = vmatpush1.msra.mxu0 0.0
    %1473 = vmatprep.subr.mxu0 0.0
    %1474 = vmatpush1.msra.mxu0 0.0
    %1475 = vmatprep.subr.mxu0 0.0
    %1476 = vmatpush1.msra.mxu0 0.0
    %1477 = vmatprep.subr.mxu0 0.0
    %1478 = vmatpush1.msra.mxu0 0.0
    %1479 = vmatprep.subr.mxu0 0.0
    %1480 = vmatpush1.msra.mxu0 0.0
    %1481 = vmatprep.subr.mxu0 0.0
    %1482 = vmatpush1.msra.mxu0 0.0
    %1483 = vmatprep.subr.mxu0 0.0
    %1484 = vmatpush1.msra.mxu0 0.0
    %1485 = vmatprep.mubr.f32.mxu0 0.0
    %1486 = vmatmul.mubr.f32.gmra.mrb[0].mxu0 %v52
    %v1487 = vpop.f32.mrb[0].mxu0
    %v1488 = vadd.f32 0.0, %v1487
    %v1489 = vpop.f32.mrb[0].mxu0
    %v1490 = vadd.f32 0.0, %v1489
    %1491 = vdwg.mxu0
    %1492 = vmatprep.subr.mxu0 %v72
    %1493 = vmatpush1.msra.mxu0 %v71
    %1494 = vmatprep.subr.mxu0 %v122
    %1495 = vmatpush1.msra.mxu0 %v121
    %1496 = vmatprep.subr.mxu0 %v172
    %1497 = vmatpush1.msra.mxu0 %v171
    %1498 = vmatprep.subr.mxu0 %v222
    %1499 = vmatpush1.msra.mxu0 %v221
    %1500 = vmatprep.subr.mxu0 %v272
    %1501 = vmatpush1.msra.mxu0 %v271
    %1502 = vmatprep.subr.mxu0 %v322
    %1503 = vmatpush1.msra.mxu0 %v321
    %1504 = vmatprep.subr.mxu0 %v372
    %1505 = vmatpush1.msra.mxu0 %v371
    %1506 = vmatprep.subr.mxu0 %v422
    %1507 = vmatpush1.msra.mxu0 %v421
    %1508 = vmatprep.subr.mxu0 %v472
    %1509 = vmatpush1.msra.mxu0 %v471
    %1510 = vmatprep.subr.mxu0 %v522
    %1511 = vmatpush1.msra.mxu0 %v521
    %1512 = vmatprep.subr.mxu0 %v572
    %1513 = vmatpush1.msra.mxu0 %v571
    %1514 = vmatprep.subr.mxu0 %v622
    %1515 = vmatpush1.msra.mxu0 %v621
    %1516 = vmatprep.subr.mxu0 %v672
    %1517 = vmatpush1.msra.mxu0 %v671
    %1518 = vmatprep.subr.mxu0 %v722
    %1519 = vmatpush1.msra.mxu0 %v721
    %1520 = vmatprep.subr.mxu0 %v772
    %1521 = vmatpush1.msra.mxu0 %v771
    %1522 = vmatprep.subr.mxu0 %v822
    %1523 = vmatpush1.msra.mxu0 %v821
    %1524 = vmatprep.subr.mxu0 0.0
    %1525 = vmatpush1.msra.mxu0 0.0
    %1526 = vmatprep.subr.mxu0 0.0
    %1527 = vmatpush1.msra.mxu0 0.0
    %1528 = vmatprep.subr.mxu0 0.0
    %1529 = vmatpush1.msra.mxu0 0.0
    %1530 = vmatprep.subr.mxu0 0.0
    %1531 = vmatpush1.msra.mxu0 0.0
    %1532 = vmatprep.subr.mxu0 0.0
    %1533 = vmatpush1.msra.mxu0 0.0
    %1534 = vmatprep.subr.mxu0 0.0
    %1535 = vmatpush1.msra.mxu0 0.0
    %1536 = vmatprep.subr.mxu0 0.0
    %1537 = vmatpush1.msra.mxu0 0.0
    %1538 = vmatprep.subr.mxu0 0.0
    %1539 = vmatpush1.msra.mxu0 0.0
    %1540 = vmatprep.subr.mxu0 0.0
    %1541 = vmatpush1.msra.mxu0 0.0
    %1542 = vmatprep.subr.mxu0 0.0
    %1543 = vmatpush1.msra.mxu0 0.0
    %1544 = vmatprep.subr.mxu0 0.0
    %1545 = vmatpush1.msra.mxu0 0.0
    %1546 = vmatprep.subr.mxu0 0.0
    %1547 = vmatpush1.msra.mxu0 0.0
    %1548 = vmatprep.subr.mxu0 0.0
    %1549 = vmatpush1.msra.mxu0 0.0
    %1550 = vmatprep.subr.mxu0 0.0
    %1551 = vmatpush1.msra.mxu0 0.0
    %1552 = vmatprep.subr.mxu0 0.0
    %1553 = vmatpush1.msra.mxu0 0.0
    %1554 = vmatprep.subr.mxu0 0.0
    %1555 = vmatpush1.msra.mxu0 0.0
    %1556 = vmatprep.mubr.f32.mxu0 0.0
    %1557 = vmatmul.mubr.f32.gmra.mrb[0].mxu0 %v52
    %v1558 = vpop.f32.mrb[0].mxu0
    %v1559 = vadd.f32 0.0, %v1558
    %v1560 = vpop.f32.mrb[0].mxu0
    %v1561 = vadd.f32 0.0, %v1560
    %1562 = vdwg.mxu0
    %1563 = vmatprep.subr.mxu0 %v74
    %1564 = vmatpush1.msra.mxu0 %v73
    %1565 = vmatprep.subr.mxu0 %v124
    %1566 = vmatpush1.msra.mxu0 %v123
    %1567 = vmatprep.subr.mxu0 %v174
    %1568 = vmatpush1.msra.mxu0 %v173
    %1569 = vmatprep.subr.mxu0 %v224
    %1570 = vmatpush1.msra.mxu0 %v223
    %1571 = vmatprep.subr.mxu0 %v274
    %1572 = vmatpush1.msra.mxu0 %v273
    %1573 = vmatprep.subr.mxu0 %v324
    %1574 = vmatpush1.msra.mxu0 %v323
    %1575 = vmatprep.subr.mxu0 %v374
    %1576 = vmatpush1.msra.mxu0 %v373
    %1577 = vmatprep.subr.mxu0 %v424
    %1578 = vmatpush1.msra.mxu0 %v423
    %1579 = vmatprep.subr.mxu0 %v474
    %1580 = vmatpush1.msra.mxu0 %v473
    %1581 = vmatprep.subr.mxu0 %v524
    %1582 = vmatpush1.msra.mxu0 %v523
    %1583 = vmatprep.subr.mxu0 %v574
    %1584 = vmatpush1.msra.mxu0 %v573
    %1585 = vmatprep.subr.mxu0 %v624
    %1586 = vmatpush1.msra.mxu0 %v623
    %1587 = vmatprep.subr.mxu0 %v674
    %1588 = vmatpush1.msra.mxu0 %v673
    %1589 = vmatprep.subr.mxu0 %v724
    %1590 = vmatpush1.msra.mxu0 %v723
    %1591 = vmatprep.subr.mxu0 %v774
    %1592 = vmatpush1.msra.mxu0 %v773
    %1593 = vmatprep.subr.mxu0 %v824
    %1594 = vmatpush1.msra.mxu0 %v823
    %1595 = vmatprep.subr.mxu0 0.0
    %1596 = vmatpush1.msra.mxu0 0.0
    %1597 = vmatprep.subr.mxu0 0.0
    %1598 = vmatpush1.msra.mxu0 0.0
    %1599 = vmatprep.subr.mxu0 0.0
    %1600 = vmatpush1.msra.mxu0 0.0
    %1601 = vmatprep.subr.mxu0 0.0
    %1602 = vmatpush1.msra.mxu0 0.0
    %1603 = vmatprep.subr.mxu0 0.0
    %1604 = vmatpush1.msra.mxu0 0.0
    %1605 = vmatprep.subr.mxu0 0.0
    %1606 = vmatpush1.msra.mxu0 0.0
    %1607 = vmatprep.subr.mxu0 0.0
    %1608 = vmatpush1.msra.mxu0 0.0
    %1609 = vmatprep.subr.mxu0 0.0
    %1610 = vmatpush1.msra.mxu0 0.0
    %1611 = vmatprep.subr.mxu0 0.0
    %1612 = vmatpush1.msra.mxu0 0.0
    %1613 = vmatprep.subr.mxu0 0.0
    %1614 = vmatpush1.msra.mxu0 0.0
    %1615 = vmatprep.subr.mxu0 0.0
    %1616 = vmatpush1.msra.mxu0 0.0
    %1617 = vmatprep.subr.mxu0 0.0
    %1618 = vmatpush1.msra.mxu0 0.0
    %1619 = vmatprep.subr.mxu0 0.0
    %1620 = vmatpush1.msra.mxu0 0.0
    %1621 = vmatprep.subr.mxu0 0.0
    %1622 = vmatpush1.msra.mxu0 0.0
    %1623 = vmatprep.subr.mxu0 0.0
    %1624 = vmatpush1.msra.mxu0 0.0
    %1625 = vmatprep.subr.mxu0 0.0
    %1626 = vmatpush1.msra.mxu0 0.0
    %1627 = vmatprep.mubr.f32.mxu0 0.0
    %1628 = vmatmul.mubr.f32.gmra.mrb[0].mxu0 %v52
    %v1629 = vpop.f32.mrb[0].mxu0
    %v1630 = vadd.f32 0.0, %v1629
    %v1631 = vpop.f32.mrb[0].mxu0
    %v1632 = vadd.f32 0.0, %v1631
    %1633 = vdwg.mxu0
    %1634 = vmatprep.subr.mxu0 %v76
    %1635 = vmatpush1.msra.mxu0 %v75
    %1636 = vmatprep.subr.mxu0 %v126
    %1637 = vmatpush1.msra.mxu0 %v125
    %1638 = vmatprep.subr.mxu0 %v176
    %1639 = vmatpush1.msra.mxu0 %v175
    %1640 = vmatprep.subr.mxu0 %v226
    %1641 = vmatpush1.msra.mxu0 %v225
    %1642 = vmatprep.subr.mxu0 %v276
    %1643 = vmatpush1.msra.mxu0 %v275
    %1644 = vmatprep.subr.mxu0 %v326
    %1645 = vmatpush1.msra.mxu0 %v325
    %1646 = vmatprep.subr.mxu0 %v376
    %1647 = vmatpush1.msra.mxu0 %v375
    %1648 = vmatprep.subr.mxu0 %v426
    %1649 = vmatpush1.msra.mxu0 %v425
    %1650 = vmatprep.subr.mxu0 %v476
    %1651 = vmatpush1.msra.mxu0 %v475
    %1652 = vmatprep.subr.mxu0 %v526
    %1653 = vmatpush1.msra.mxu0 %v525
    %1654 = vmatprep.subr.mxu0 %v576
    %1655 = vmatpush1.msra.mxu0 %v575
    %1656 = vmatprep.subr.mxu0 %v626
    %1657 = vmatpush1.msra.mxu0 %v625
    %1658 = vmatprep.subr.mxu0 %v676
    %1659 = vmatpush1.msra.mxu0 %v675
    %1660 = vmatprep.subr.mxu0 %v726
    %1661 = vmatpush1.msra.mxu0 %v725
    %1662 = vmatprep.subr.mxu0 %v776
    %1663 = vmatpush1.msra.mxu0 %v775
    %1664 = vmatprep.subr.mxu0 %v826
    %1665 = vmatpush1.msra.mxu0 %v825
    %1666 = vmatprep.subr.mxu0 0.0
    %1667 = vmatpush1.msra.mxu0 0.0
    %1668 = vmatprep.subr.mxu0 0.0
    %1669 = vmatpush1.msra.mxu0 0.0
    %1670 = vmatprep.subr.mxu0 0.0
    %1671 = vmatpush1.msra.mxu0 0.0
    %1672 = vmatprep.subr.mxu0 0.0
    %1673 = vmatpush1.msra.mxu0 0.0
    %1674 = vmatprep.subr.mxu0 0.0
    %1675 = vmatpush1.msra.mxu0 0.0
    %1676 = vmatprep.subr.mxu0 0.0
    %1677 = vmatpush1.msra.mxu0 0.0
    %1678 = vmatprep.subr.mxu0 0.0
    %1679 = vmatpush1.msra.mxu0 0.0
    %1680 = vmatprep.subr.mxu0 0.0
    %1681 = vmatpush1.msra.mxu0 0.0
    %1682 = vmatprep.subr.mxu0 0.0
    %1683 = vmatpush1.msra.mxu0 0.0
    %1684 = vmatprep.subr.mxu0 0.0
    %1685 = vmatpush1.msra.mxu0 0.0
    %1686 = vmatprep.subr.mxu0 0.0
    %1687 = vmatpush1.msra.mxu0 0.0
    %1688 = vmatprep.subr.mxu0 0.0
    %1689 = vmatpush1.msra.mxu0 0.0
    %1690 = vmatprep.subr.mxu0 0.0
    %1691 = vmatpush1.msra.mxu0 0.0
    %1692 = vmatprep.subr.mxu0 0.0
    %1693 = vmatpush1.msra.mxu0 0.0
    %1694 = vmatprep.subr.mxu0 0.0
    %1695 = vmatpush1.msra.mxu0 0.0
    %1696 = vmatprep.subr.mxu0 0.0
    %1697 = vmatpush1.msra.mxu0 0.0
    %1698 = vmatprep.mubr.f32.mxu0 0.0
    %1699 = vmatmul.mubr.f32.gmra.mrb[0].mxu0 %v52
    %v1700 = vpop.f32.mrb[0].mxu0
    %v1701 = vadd.f32 0.0, %v1700
    %v1702 = vpop.f32.mrb[0].mxu0
    %v1703 = vadd.f32 0.0, %v1702
    %1704 = vdwg.mxu0
    %1705 = vmatprep.subr.mxu0 %v78
    %1706 = vmatpush1.msra.mxu0 %v77
    %1707 = vmatprep.subr.mxu0 %v128
    %1708 = vmatpush1.msra.mxu0 %v127
    %1709 = vmatprep.subr.mxu0 %v178
    %1710 = vmatpush1.msra.mxu0 %v177
    %1711 = vmatprep.subr.mxu0 %v228
    %1712 = vmatpush1.msra.mxu0 %v227
    %1713 = vmatprep.subr.mxu0 %v278
    %1714 = vmatpush1.msra.mxu0 %v277
    %1715 = vmatprep.subr.mxu0 %v328
    %1716 = vmatpush1.msra.mxu0 %v327
    %1717 = vmatprep.subr.mxu0 %v378
    %1718 = vmatpush1.msra.mxu0 %v377
    %1719 = vmatprep.subr.mxu0 %v428
    %1720 = vmatpush1.msra.mxu0 %v427
    %1721 = vmatprep.subr.mxu0 %v478
    %1722 = vmatpush1.msra.mxu0 %v477
    %1723 = vmatprep.subr.mxu0 %v528
    %1724 = vmatpush1.msra.mxu0 %v527
    %1725 = vmatprep.subr.mxu0 %v578
    %1726 = vmatpush1.msra.mxu0 %v577
    %1727 = vmatprep.subr.mxu0 %v628
    %1728 = vmatpush1.msra.mxu0 %v627
    %1729 = vmatprep.subr.mxu0 %v678
    %1730 = vmatpush1.msra.mxu0 %v677
    %1731 = vmatprep.subr.mxu0 %v728
    %1732 = vmatpush1.msra.mxu0 %v727
    %1733 = vmatprep.subr.mxu0 %v778
    %1734 = vmatpush1.msra.mxu0 %v777
    %1735 = vmatprep.subr.mxu0 %v828
    %1736 = vmatpush1.msra.mxu0 %v827
    %1737 = vmatprep.subr.mxu0 0.0
    %1738 = vmatpush1.msra.mxu0 0.0
    %1739 = vmatprep.subr.mxu0 0.0
    %1740 = vmatpush1.msra.mxu0 0.0
    %1741 = vmatprep.subr.mxu0 0.0
    %1742 = vmatpush1.msra.mxu0 0.0
    %1743 = vmatprep.subr.mxu0 0.0
    %1744 = vmatpush1.msra.mxu0 0.0
    %1745 = vmatprep.subr.mxu0 0.0
    %1746 = vmatpush1.msra.mxu0 0.0
    %1747 = vmatprep.subr.mxu0 0.0
    %1748 = vmatpush1.msra.mxu0 0.0
    %1749 = vmatprep.subr.mxu0 0.0
    %1750 = vmatpush1.msra.mxu0 0.0
    %1751 = vmatprep.subr.mxu0 0.0
    %1752 = vmatpush1.msra.mxu0 0.0
    %1753 = vmatprep.subr.mxu0 0.0
    %1754 = vmatpush1.msra.mxu0 0.0
    %1755 = vmatprep.subr.mxu0 0.0
    %1756 = vmatpush1.msra.mxu0 0.0
    %1757 = vmatprep.subr.mxu0 0.0
    %1758 = vmatpush1.msra.mxu0 0.0
    %1759 = vmatprep.subr.mxu0 0.0
    %1760 = vmatpush1.msra.mxu0 0.0
    %1761 = vmatprep.subr.mxu0 0.0
    %1762 = vmatpush1.msra.mxu0 0.0
    %1763 = vmatprep.subr.mxu0 0.0
    %1764 = vmatpush1.msra.mxu0 0.0
    %1765 = vmatprep.subr.mxu0 0.0
    %1766 = vmatpush1.msra.mxu0 0.0
    %1767 = vmatprep.subr.mxu0 0.0
    %1768 = vmatpush1.msra.mxu0 0.0
    %1769 = vmatprep.mubr.f32.mxu0 0.0
    %1770 = vmatmul.mubr.f32.gmra.mrb[0].mxu0 %v52
    %v1771 = vpop.f32.mrb[0].mxu0
    %v1772 = vadd.f32 0.0, %v1771
    %v1773 = vpop.f32.mrb[0].mxu0
    %v1774 = vadd.f32 0.0, %v1773
    %1775 = vdwg.mxu0
    %1776 = vmatprep.subr.mxu0 %v80
    %1777 = vmatpush1.msra.mxu0 %v79
    %1778 = vmatprep.subr.mxu0 %v130
    %1779 = vmatpush1.msra.mxu0 %v129
    %1780 = vmatprep.subr.mxu0 %v180
    %1781 = vmatpush1.msra.mxu0 %v179
    %1782 = vmatprep.subr.mxu0 %v230
    %1783 = vmatpush1.msra.mxu0 %v229
    %1784 = vmatprep.subr.mxu0 %v280
    %1785 = vmatpush1.msra.mxu0 %v279
    %1786 = vmatprep.subr.mxu0 %v330
    %1787 = vmatpush1.msra.mxu0 %v329
    %1788 = vmatprep.subr.mxu0 %v380
    %1789 = vmatpush1.msra.mxu0 %v379
    %1790 = vmatprep.subr.mxu0 %v430
    %1791 = vmatpush1.msra.mxu0 %v429
    %1792 = vmatprep.subr.mxu0 %v480
    %1793 = vmatpush1.msra.mxu0 %v479
    %1794 = vmatprep.subr.mxu0 %v530
    %1795 = vmatpush1.msra.mxu0 %v529
    %1796 = vmatprep.subr.mxu0 %v580
    %1797 = vmatpush1.msra.mxu0 %v579
    %1798 = vmatprep.subr.mxu0 %v630
    %1799 = vmatpush1.msra.mxu0 %v629
    %1800 = vmatprep.subr.mxu0 %v680
    %1801 = vmatpush1.msra.mxu0 %v679
    %1802 = vmatprep.subr.mxu0 %v730
    %1803 = vmatpush1.msra.mxu0 %v729
    %1804 = vmatprep.subr.mxu0 %v780
    %1805 = vmatpush1.msra.mxu0 %v779
    %1806 = vmatprep.subr.mxu0 %v830
    %1807 = vmatpush1.msra.mxu0 %v829
    %1808 = vmatprep.subr.mxu0 0.0
    %1809 = vmatpush1.msra.mxu0 0.0
    %1810 = vmatprep.subr.mxu0 0.0
    %1811 = vmatpush1.msra.mxu0 0.0
    %1812 = vmatprep.subr.mxu0 0.0
    %1813 = vmatpush1.msra.mxu0 0.0
    %1814 = vmatprep.subr.mxu0 0.0
    %1815 = vmatpush1.msra.mxu0 0.0
    %1816 = vmatprep.subr.mxu0 0.0
    %1817 = vmatpush1.msra.mxu0 0.0
    %1818 = vmatprep.subr.mxu0 0.0
    %1819 = vmatpush1.msra.mxu0 0.0
    %1820 = vmatprep.subr.mxu0 0.0
    %1821 = vmatpush1.msra.mxu0 0.0
    %1822 = vmatprep.subr.mxu0 0.0
    %1823 = vmatpush1.msra.mxu0 0.0
    %1824 = vmatprep.subr.mxu0 0.0
    %1825 = vmatpush1.msra.mxu0 0.0
    %1826 = vmatprep.subr.mxu0 0.0
    %1827 = vmatpush1.msra.mxu0 0.0
    %1828 = vmatprep.subr.mxu0 0.0
    %1829 = vmatpush1.msra.mxu0 0.0
    %1830 = vmatprep.subr.mxu0 0.0
    %1831 = vmatpush1.msra.mxu0 0.0
    %1832 = vmatprep.subr.mxu0 0.0
    %1833 = vmatpush1.msra.mxu0 0.0
    %1834 = vmatprep.subr.mxu0 0.0
    %1835 = vmatpush1.msra.mxu0 0.0
    %1836 = vmatprep.subr.mxu0 0.0
    %1837 = vmatpush1.msra.mxu0 0.0
    %1838 = vmatprep.subr.mxu0 0.0
    %1839 = vmatpush1.msra.mxu0 0.0
    %1840 = vmatprep.mubr.f32.mxu0 0.0
    %1841 = vmatmul.mubr.f32.gmra.mrb[0].mxu0 %v52
    %v1842 = vpop.f32.mrb[0].mxu0
    %v1843 = vadd.f32 0.0, %v1842
    %v1844 = vpop.f32.mrb[0].mxu0
    %v1845 = vadd.f32 0.0, %v1844
    %1846 = vdwg.mxu0
    %1847 = vmatprep.subr.mxu0 %v82
    %1848 = vmatpush1.msra.mxu0 %v81
    %1849 = vmatprep.subr.mxu0 %v132
    %1850 = vmatpush1.msra.mxu0 %v131
    %1851 = vmatprep.subr.mxu0 %v182
    %1852 = vmatpush1.msra.mxu0 %v181
    %1853 = vmatprep.subr.mxu0 %v232
    %1854 = vmatpush1.msra.mxu0 %v231
    %1855 = vmatprep.subr.mxu0 %v282
    %1856 = vmatpush1.msra.mxu0 %v281
    %1857 = vmatprep.subr.mxu0 %v332
    %1858 = vmatpush1.msra.mxu0 %v331
    %1859 = vmatprep.subr.mxu0 %v382
    %1860 = vmatpush1.msra.mxu0 %v381
    %1861 = vmatprep.subr.mxu0 %v432
    %1862 = vmatpush1.msra.mxu0 %v431
    %1863 = vmatprep.subr.mxu0 %v482
    %1864 = vmatpush1.msra.mxu0 %v481
    %1865 = vmatprep.subr.mxu0 %v532
    %1866 = vmatpush1.msra.mxu0 %v531
    %1867 = vmatprep.subr.mxu0 %v582
    %1868 = vmatpush1.msra.mxu0 %v581
    %1869 = vmatprep.subr.mxu0 %v632
    %1870 = vmatpush1.msra.mxu0 %v631
    %1871 = vmatprep.subr.mxu0 %v682
    %1872 = vmatpush1.msra.mxu0 %v681
    %1873 = vmatprep.subr.mxu0 %v732
    %1874 = vmatpush1.msra.mxu0 %v731
    %1875 = vmatprep.subr.mxu0 %v782
    %1876 = vmatpush1.msra.mxu0 %v781
    %1877 = vmatprep.subr.mxu0 %v832
    %1878 = vmatpush1.msra.mxu0 %v831
    %1879 = vmatprep.subr.mxu0 0.0
    %1880 = vmatpush1.msra.mxu0 0.0
    %1881 = vmatprep.subr.mxu0 0.0
    %1882 = vmatpush1.msra.mxu0 0.0
    %1883 = vmatprep.subr.mxu0 0.0
    %1884 = vmatpush1.msra.mxu0 0.0
    %1885 = vmatprep.subr.mxu0 0.0
    %1886 = vmatpush1.msra.mxu0 0.0
    %1887 = vmatprep.subr.mxu0 0.0
    %1888 = vmatpush1.msra.mxu0 0.0
    %1889 = vmatprep.subr.mxu0 0.0
    %1890 = vmatpush1.msra.mxu0 0.0
    %1891 = vmatprep.subr.mxu0 0.0
    %1892 = vmatpush1.msra.mxu0 0.0
    %1893 = vmatprep.subr.mxu0 0.0
    %1894 = vmatpush1.msra.mxu0 0.0
    %1895 = vmatprep.subr.mxu0 0.0
    %1896 = vmatpush1.msra.mxu0 0.0
    %1897 = vmatprep.subr.mxu0 0.0
    %1898 = vmatpush1.msra.mxu0 0.0
    %1899 = vmatprep.subr.mxu0 0.0
    %1900 = vmatpush1.msra.mxu0 0.0
    %1901 = vmatprep.subr.mxu0 0.0
    %1902 = vmatpush1.msra.mxu0 0.0
    %1903 = vmatprep.subr.mxu0 0.0
    %1904 = vmatpush1.msra.mxu0 0.0
    %1905 = vmatprep.subr.mxu0 0.0
    %1906 = vmatpush1.msra.mxu0 0.0
    %1907 = vmatprep.subr.mxu0 0.0
    %1908 = vmatpush1.msra.mxu0 0.0
    %1909 = vmatprep.subr.mxu0 0.0
    %1910 = vmatpush1.msra.mxu0 0.0
    %1911 = vmatprep.mubr.f32.mxu0 0.0
    %1912 = vmatmul.mubr.f32.gmra.mrb[0].mxu0 %v52
    %v1913 = vpop.f32.mrb[0].mxu0
    %v1914 = vadd.f32 0.0, %v1913
    %v1915 = vpop.f32.mrb[0].mxu0
    %v1916 = vadd.f32 0.0, %v1915
    %1917 = vdwg.mxu0
    %1918 = vmatprep.subr.mxu0 %v84
    %1919 = vmatpush1.msra.mxu0 %v83
    %1920 = vmatprep.subr.mxu0 %v134
    %1921 = vmatpush1.msra.mxu0 %v133
    %1922 = vmatprep.subr.mxu0 %v184
    %1923 = vmatpush1.msra.mxu0 %v183
    %1924 = vmatprep.subr.mxu0 %v234
    %1925 = vmatpush1.msra.mxu0 %v233
    %1926 = vmatprep.subr.mxu0 %v284
    %1927 = vmatpush1.msra.mxu0 %v283
    %1928 = vmatprep.subr.mxu0 %v334
    %1929 = vmatpush1.msra.mxu0 %v333
    %1930 = vmatprep.subr.mxu0 %v384
    %1931 = vmatpush1.msra.mxu0 %v383
    %1932 = vmatprep.subr.mxu0 %v434
    %1933 = vmatpush1.msra.mxu0 %v433
    %1934 = vmatprep.subr.mxu0 %v484
    %1935 = vmatpush1.msra.mxu0 %v483
    %1936 = vmatprep.subr.mxu0 %v534
    %1937 = vmatpush1.msra.mxu0 %v533
    %1938 = vmatprep.subr.mxu0 %v584
    %1939 = vmatpush1.msra.mxu0 %v583
    %1940 = vmatprep.subr.mxu0 %v634
    %1941 = vmatpush1.msra.mxu0 %v633
    %1942 = vmatprep.subr.mxu0 %v684
    %1943 = vmatpush1.msra.mxu0 %v683
    %1944 = vmatprep.subr.mxu0 %v734
    %1945 = vmatpush1.msra.mxu0 %v733
    %1946 = vmatprep.subr.mxu0 %v784
    %1947 = vmatpush1.msra.mxu0 %v783
    %1948 = vmatprep.subr.mxu0 %v834
    %1949 = vmatpush1.msra.mxu0 %v833
    %1950 = vmatprep.subr.mxu0 0.0
    %1951 = vmatpush1.msra.mxu0 0.0
    %1952 = vmatprep.subr.mxu0 0.0
    %1953 = vmatpush1.msra.mxu0 0.0
    %1954 = vmatprep.subr.mxu0 0.0
    %1955 = vmatpush1.msra.mxu0 0.0
    %1956 = vmatprep.subr.mxu0 0.0
    %1957 = vmatpush1.msra.mxu0 0.0
    %1958 = vmatprep.subr.mxu0 0.0
    %1959 = vmatpush1.msra.mxu0 0.0
    %1960 = vmatprep.subr.mxu0 0.0
    %1961 = vmatpush1.msra.mxu0 0.0
    %1962 = vmatprep.subr.mxu0 0.0
    %1963 = vmatpush1.msra.mxu0 0.0
    %1964 = vmatprep.subr.mxu0 0.0
    %1965 = vmatpush1.msra.mxu0 0.0
    %1966 = vmatprep.subr.mxu0 0.0
    %1967 = vmatpush1.msra.mxu0 0.0
    %1968 = vmatprep.subr.mxu0 0.0
    %1969 = vmatpush1.msra.mxu0 0.0
    %1970 = vmatprep.subr.mxu0 0.0
    %1971 = vmatpush1.msra.mxu0 0.0
    %1972 = vmatprep.subr.mxu0 0.0
    %1973 = vmatpush1.msra.mxu0 0.0
    %1974 = vmatprep.subr.mxu0 0.0
    %1975 = vmatpush1.msra.mxu0 0.0
    %1976 = vmatprep.subr.mxu0 0.0
    %1977 = vmatpush1.msra.mxu0 0.0
    %1978 = vmatprep.subr.mxu0 0.0
    %1979 = vmatpush1.msra.mxu0 0.0
    %1980 = vmatprep.subr.mxu0 0.0
    %1981 = vmatpush1.msra.mxu0 0.0
    %1982 = vmatprep.mubr.f32.mxu0 0.0
    %1983 = vmatmul.mubr.f32.gmra.mrb[0].mxu0 %v52
    %v1984 = vpop.f32.mrb[0].mxu0
    %v1985 = vadd.f32 0.0, %v1984
    %v1986 = vpop.f32.mrb[0].mxu0
    %v1987 = vadd.f32 0.0, %v1986
    %1988 = vdwg.mxu0
    %1989 = vmatprep.subr.mxu0 %v86
    %1990 = vmatpush1.msra.mxu0 %v85
    %1991 = vmatprep.subr.mxu0 %v136
    %1992 = vmatpush1.msra.mxu0 %v135
    %1993 = vmatprep.subr.mxu0 %v186
    %1994 = vmatpush1.msra.mxu0 %v185
    %1995 = vmatprep.subr.mxu0 %v236
    %1996 = vmatpush1.msra.mxu0 %v235
    %1997 = vmatprep.subr.mxu0 %v286
    %1998 = vmatpush1.msra.mxu0 %v285
    %1999 = vmatprep.subr.mxu0 %v336
    %2000 = vmatpush1.msra.mxu0 %v335
    %2001 = vmatprep.subr.mxu0 %v386
    %2002 = vmatpush1.msra.mxu0 %v385
    %2003 = vmatprep.subr.mxu0 %v436
    %2004 = vmatpush1.msra.mxu0 %v435
    %2005 = vmatprep.subr.mxu0 %v486
    %2006 = vmatpush1.msra.mxu0 %v485
    %2007 = vmatprep.subr.mxu0 %v536
    %2008 = vmatpush1.msra.mxu0 %v535
    %2009 = vmatprep.subr.mxu0 %v586
    %2010 = vmatpush1.msra.mxu0 %v585
    %2011 = vmatprep.subr.mxu0 %v636
    %2012 = vmatpush1.msra.mxu0 %v635
    %2013 = vmatprep.subr.mxu0 %v686
    %2014 = vmatpush1.msra.mxu0 %v685
    %2015 = vmatprep.subr.mxu0 %v736
    %2016 = vmatpush1.msra.mxu0 %v735
    %2017 = vmatprep.subr.mxu0 %v786
    %2018 = vmatpush1.msra.mxu0 %v785
    %2019 = vmatprep.subr.mxu0 %v836
    %2020 = vmatpush1.msra.mxu0 %v835
    %2021 = vmatprep.subr.mxu0 0.0
    %2022 = vmatpush1.msra.mxu0 0.0
    %2023 = vmatprep.subr.mxu0 0.0
    %2024 = vmatpush1.msra.mxu0 0.0
    %2025 = vmatprep.subr.mxu0 0.0
    %2026 = vmatpush1.msra.mxu0 0.0
    %2027 = vmatprep.subr.mxu0 0.0
    %2028 = vmatpush1.msra.mxu0 0.0
    %2029 = vmatprep.subr.mxu0 0.0
    %2030 = vmatpush1.msra.mxu0 0.0
    %2031 = vmatprep.subr.mxu0 0.0
    %2032 = vmatpush1.msra.mxu0 0.0
    %2033 = vmatprep.subr.mxu0 0.0
    %2034 = vmatpush1.msra.mxu0 0.0
    %2035 = vmatprep.subr.mxu0 0.0
    %2036 = vmatpush1.msra.mxu0 0.0
    %2037 = vmatprep.subr.mxu0 0.0
    %2038 = vmatpush1.msra.mxu0 0.0
    %2039 = vmatprep.subr.mxu0 0.0
    %2040 = vmatpush1.msra.mxu0 0.0
    %2041 = vmatprep.subr.mxu0 0.0
    %2042 = vmatpush1.msra.mxu0 0.0
    %2043 = vmatprep.subr.mxu0 0.0
    %2044 = vmatpush1.msra.mxu0 0.0
    %2045 = vmatprep.subr.mxu0 0.0
    %2046 = vmatpush1.msra.mxu0 0.0
    %2047 = vmatprep.subr.mxu0 0.0
    %2048 = vmatpush1.msra.mxu0 0.0
    %2049 = vmatprep.subr.mxu0 0.0
    %2050 = vmatpush1.msra.mxu0 0.0
    %2051 = vmatprep.subr.mxu0 0.0
    %2052 = vmatpush1.msra.mxu0 0.0
    %2053 = vmatprep.mubr.f32.mxu0 0.0
    %2054 = vmatmul.mubr.f32.gmra.mrb[0].mxu0 %v52
    %v2055 = vpop.f32.mrb[0].mxu0
    %v2056 = vadd.f32 0.0, %v2055
    %v2057 = vpop.f32.mrb[0].mxu0
    %v2058 = vadd.f32 0.0, %v2057
    %2059 = vdwg.mxu0
    %2060 = vmatprep.subr.mxu0 %v88
    %2061 = vmatpush1.msra.mxu0 %v87
    %2062 = vmatprep.subr.mxu0 %v138
    %2063 = vmatpush1.msra.mxu0 %v137
    %2064 = vmatprep.subr.mxu0 %v188
    %2065 = vmatpush1.msra.mxu0 %v187
    %2066 = vmatprep.subr.mxu0 %v238
    %2067 = vmatpush1.msra.mxu0 %v237
    %2068 = vmatprep.subr.mxu0 %v288
    %2069 = vmatpush1.msra.mxu0 %v287
    %2070 = vmatprep.subr.mxu0 %v338
    %2071 = vmatpush1.msra.mxu0 %v337
    %2072 = vmatprep.subr.mxu0 %v388
    %2073 = vmatpush1.msra.mxu0 %v387
    %2074 = vmatprep.subr.mxu0 %v438
    %2075 = vmatpush1.msra.mxu0 %v437
    %2076 = vmatprep.subr.mxu0 %v488
    %2077 = vmatpush1.msra.mxu0 %v487
    %2078 = vmatprep.subr.mxu0 %v538
    %2079 = vmatpush1.msra.mxu0 %v537
    %2080 = vmatprep.subr.mxu0 %v588
    %2081 = vmatpush1.msra.mxu0 %v587
    %2082 = vmatprep.subr.mxu0 %v638
    %2083 = vmatpush1.msra.mxu0 %v637
    %2084 = vmatprep.subr.mxu0 %v688
    %2085 = vmatpush1.msra.mxu0 %v687
    %2086 = vmatprep.subr.mxu0 %v738
    %2087 = vmatpush1.msra.mxu0 %v737
    %2088 = vmatprep.subr.mxu0 %v788
    %2089 = vmatpush1.msra.mxu0 %v787
    %2090 = vmatprep.subr.mxu0 %v838
    %2091 = vmatpush1.msra.mxu0 %v837
    %2092 = vmatprep.subr.mxu0 0.0
    %2093 = vmatpush1.msra.mxu0 0.0
    %2094 = vmatprep.subr.mxu0 0.0
    %2095 = vmatpush1.msra.mxu0 0.0
    %2096 = vmatprep.subr.mxu0 0.0
    %2097 = vmatpush1.msra.mxu0 0.0
    %2098 = vmatprep.subr.mxu0 0.0
    %2099 = vmatpush1.msra.mxu0 0.0
    %2100 = vmatprep.subr.mxu0 0.0
    %2101 = vmatpush1.msra.mxu0 0.0
    %2102 = vmatprep.subr.mxu0 0.0
    %2103 = vmatpush1.msra.mxu0 0.0
    %2104 = vmatprep.subr.mxu0 0.0
    %2105 = vmatpush1.msra.mxu0 0.0
    %2106 = vmatprep.subr.mxu0 0.0
    %2107 = vmatpush1.msra.mxu0 0.0
    %2108 = vmatprep.subr.mxu0 0.0
    %2109 = vmatpush1.msra.mxu0 0.0
    %2110 = vmatprep.subr.mxu0 0.0
    %2111 = vmatpush1.msra.mxu0 0.0
    %2112 = vmatprep.subr.mxu0 0.0
    %2113 = vmatpush1.msra.mxu0 0.0
    %2114 = vmatprep.subr.mxu0 0.0
    %2115 = vmatpush1.msra.mxu0 0.0
    %2116 = vmatprep.subr.mxu0 0.0
    %2117 = vmatpush1.msra.mxu0 0.0
    %2118 = vmatprep.subr.mxu0 0.0
    %2119 = vmatpush1.msra.mxu0 0.0
    %2120 = vmatprep.subr.mxu0 0.0
    %2121 = vmatpush1.msra.mxu0 0.0
    %2122 = vmatprep.subr.mxu0 0.0
    %2123 = vmatpush1.msra.mxu0 0.0
    %2124 = vmatprep.mubr.f32.mxu0 0.0
    %2125 = vmatmul.mubr.f32.gmra.mrb[0].mxu0 %v52
    %v2126 = vpop.f32.mrb[0].mxu0
    %v2127 = vadd.f32 0.0, %v2126
    %v2128 = vpop.f32.mrb[0].mxu0
    %v2129 = vadd.f32 0.0, %v2128
    %2130 = vdwg.mxu0
    %2131 = vmatprep.subr.mxu0 %v90
    %2132 = vmatpush1.msra.mxu0 %v89
    %2133 = vmatprep.subr.mxu0 %v140
    %2134 = vmatpush1.msra.mxu0 %v139
    %2135 = vmatprep.subr.mxu0 %v190
    %2136 = vmatpush1.msra.mxu0 %v189
    %2137 = vmatprep.subr.mxu0 %v240
    %2138 = vmatpush1.msra.mxu0 %v239
    %2139 = vmatprep.subr.mxu0 %v290
    %2140 = vmatpush1.msra.mxu0 %v289
    %2141 = vmatprep.subr.mxu0 %v340
    %2142 = vmatpush1.msra.mxu0 %v339
    %2143 = vmatprep.subr.mxu0 %v390
    %2144 = vmatpush1.msra.mxu0 %v389
    %2145 = vmatprep.subr.mxu0 %v440
    %2146 = vmatpush1.msra.mxu0 %v439
    %2147 = vmatprep.subr.mxu0 %v490
    %2148 = vmatpush1.msra.mxu0 %v489
    %2149 = vmatprep.subr.mxu0 %v540
    %2150 = vmatpush1.msra.mxu0 %v539
    %2151 = vmatprep.subr.mxu0 %v590
    %2152 = vmatpush1.msra.mxu0 %v589
    %2153 = vmatprep.subr.mxu0 %v640
    %2154 = vmatpush1.msra.mxu0 %v639
    %2155 = vmatprep.subr.mxu0 %v690
    %2156 = vmatpush1.msra.mxu0 %v689
    %2157 = vmatprep.subr.mxu0 %v740
    %2158 = vmatpush1.msra.mxu0 %v739
    %2159 = vmatprep.subr.mxu0 %v790
    %2160 = vmatpush1.msra.mxu0 %v789
    %2161 = vmatprep.subr.mxu0 %v840
    %2162 = vmatpush1.msra.mxu0 %v839
    %2163 = vmatprep.subr.mxu0 0.0
    %2164 = vmatpush1.msra.mxu0 0.0
    %2165 = vmatprep.subr.mxu0 0.0
    %2166 = vmatpush1.msra.mxu0 0.0
    %2167 = vmatprep.subr.mxu0 0.0
    %2168 = vmatpush1.msra.mxu0 0.0
    %2169 = vmatprep.subr.mxu0 0.0
    %2170 = vmatpush1.msra.mxu0 0.0
    %2171 = vmatprep.subr.mxu0 0.0
    %2172 = vmatpush1.msra.mxu0 0.0
    %2173 = vmatprep.subr.mxu0 0.0
    %2174 = vmatpush1.msra.mxu0 0.0
    %2175 = vmatprep.subr.mxu0 0.0
    %2176 = vmatpush1.msra.mxu0 0.0
    %2177 = vmatprep.subr.mxu0 0.0
    %2178 = vmatpush1.msra.mxu0 0.0
    %2179 = vmatprep.subr.mxu0 0.0
    %2180 = vmatpush1.msra.mxu0 0.0
    %2181 = vmatprep.subr.mxu0 0.0
    %2182 = vmatpush1.msra.mxu0 0.0
    %2183 = vmatprep.subr.mxu0 0.0
    %2184 = vmatpush1.msra.mxu0 0.0
    %2185 = vmatprep.subr.mxu0 0.0
    %2186 = vmatpush1.msra.mxu0 0.0
    %2187 = vmatprep.subr.mxu0 0.0
    %2188 = vmatpush1.msra.mxu0 0.0
    %2189 = vmatprep.subr.mxu0 0.0
    %2190 = vmatpush1.msra.mxu0 0.0
    %2191 = vmatprep.subr.mxu0 0.0
    %2192 = vmatpush1.msra.mxu0 0.0
    %2193 = vmatprep.subr.mxu0 0.0
    %2194 = vmatpush1.msra.mxu0 0.0
    %2195 = vmatprep.mubr.f32.mxu0 0.0
    %2196 = vmatmul.mubr.f32.gmra.mrb[0].mxu0 %v52
    %v2197 = vpop.f32.mrb[0].mxu0
    %v2198 = vadd.f32 0.0, %v2197
    %v2199 = vpop.f32.mrb[0].mxu0
    %v2200 = vadd.f32 0.0, %v2199
    %2201 = vdwg.mxu0
    %2202 = vmatprep.subr.mxu0 %v92
    %2203 = vmatpush1.msra.mxu0 %v91
    %2204 = vmatprep.subr.mxu0 %v142
    %2205 = vmatpush1.msra.mxu0 %v141
    %2206 = vmatprep.subr.mxu0 %v192
    %2207 = vmatpush1.msra.mxu0 %v191
    %2208 = vmatprep.subr.mxu0 %v242
    %2209 = vmatpush1.msra.mxu0 %v241
    %2210 = vmatprep.subr.mxu0 %v292
    %2211 = vmatpush1.msra.mxu0 %v291
    %2212 = vmatprep.subr.mxu0 %v342
    %2213 = vmatpush1.msra.mxu0 %v341
    %2214 = vmatprep.subr.mxu0 %v392
    %2215 = vmatpush1.msra.mxu0 %v391
    %2216 = vmatprep.subr.mxu0 %v442
    %2217 = vmatpush1.msra.mxu0 %v441
    %2218 = vmatprep.subr.mxu0 %v492
    %2219 = vmatpush1.msra.mxu0 %v491
    %2220 = vmatprep.subr.mxu0 %v542
    %2221 = vmatpush1.msra.mxu0 %v541
    %2222 = vmatprep.subr.mxu0 %v592
    %2223 = vmatpush1.msra.mxu0 %v591
    %2224 = vmatprep.subr.mxu0 %v642
    %2225 = vmatpush1.msra.mxu0 %v641
    %2226 = vmatprep.subr.mxu0 %v692
    %2227 = vmatpush1.msra.mxu0 %v691
    %2228 = vmatprep.subr.mxu0 %v742
    %2229 = vmatpush1.msra.mxu0 %v741
    %2230 = vmatprep.subr.mxu0 %v792
    %2231 = vmatpush1.msra.mxu0 %v791
    %2232 = vmatprep.subr.mxu0 %v842
    %2233 = vmatpush1.msra.mxu0 %v841
    %2234 = vmatprep.subr.mxu0 0.0
    %2235 = vmatpush1.msra.mxu0 0.0
    %2236 = vmatprep.subr.mxu0 0.0
    %2237 = vmatpush1.msra.mxu0 0.0
    %2238 = vmatprep.subr.mxu0 0.0
    %2239 = vmatpush1.msra.mxu0 0.0
    %2240 = vmatprep.subr.mxu0 0.0
    %2241 = vmatpush1.msra.mxu0 0.0
    %2242 = vmatprep.subr.mxu0 0.0
    %2243 = vmatpush1.msra.mxu0 0.0
    %2244 = vmatprep.subr.mxu0 0.0
    %2245 = vmatpush1.msra.mxu0 0.0
    %2246 = vmatprep.subr.mxu0 0.0
    %2247 = vmatpush1.msra.mxu0 0.0
    %2248 = vmatprep.subr.mxu0 0.0
    %2249 = vmatpush1.msra.mxu0 0.0
    %2250 = vmatprep.subr.mxu0 0.0
    %2251 = vmatpush1.msra.mxu0 0.0
    %2252 = vmatprep.subr.mxu0 0.0
    %2253 = vmatpush1.msra.mxu0 0.0
    %2254 = vmatprep.subr.mxu0 0.0
    %2255 = vmatpush1.msra.mxu0 0.0
    %2256 = vmatprep.subr.mxu0 0.0
    %2257 = vmatpush1.msra.mxu0 0.0
    %2258 = vmatprep.subr.mxu0 0.0
    %2259 = vmatpush1.msra.mxu0 0.0
    %2260 = vmatprep.subr.mxu0 0.0
    %2261 = vmatpush1.msra.mxu0 0.0
    %2262 = vmatprep.subr.mxu0 0.0
    %2263 = vmatpush1.msra.mxu0 0.0
    %2264 = vmatprep.subr.mxu0 0.0
    %2265 = vmatpush1.msra.mxu0 0.0
    %2266 = vmatprep.mubr.f32.mxu0 0.0
    %2267 = vmatmul.mubr.f32.gmra.mrb[0].mxu0 %v52
    %v2268 = vpop.f32.mrb[0].mxu0
    %v2269 = vadd.f32 0.0, %v2268
    %v2270 = vpop.f32.mrb[0].mxu0
    %v2271 = vadd.f32 0.0, %v2270
    %2272 = vdwg.mxu0
    %2273 = vmatprep.subr.mxu0 %v94
    %2274 = vmatpush1.msra.mxu0 %v93
    %2275 = vmatprep.subr.mxu0 %v144
    %2276 = vmatpush1.msra.mxu0 %v143
    %2277 = vmatprep.subr.mxu0 %v194
    %2278 = vmatpush1.msra.mxu0 %v193
    %2279 = vmatprep.subr.mxu0 %v244
    %2280 = vmatpush1.msra.mxu0 %v243
    %2281 = vmatprep.subr.mxu0 %v294
    %2282 = vmatpush1.msra.mxu0 %v293
    %2283 = vmatprep.subr.mxu0 %v344
    %2284 = vmatpush1.msra.mxu0 %v343
    %2285 = vmatprep.subr.mxu0 %v394
    %2286 = vmatpush1.msra.mxu0 %v393
    %2287 = vmatprep.subr.mxu0 %v444
    %2288 = vmatpush1.msra.mxu0 %v443
    %2289 = vmatprep.subr.mxu0 %v494
    %2290 = vmatpush1.msra.mxu0 %v493
    %2291 = vmatprep.subr.mxu0 %v544
    %2292 = vmatpush1.msra.mxu0 %v543
    %2293 = vmatprep.subr.mxu0 %v594
    %2294 = vmatpush1.msra.mxu0 %v593
    %2295 = vmatprep.subr.mxu0 %v644
    %2296 = vmatpush1.msra.mxu0 %v643
    %2297 = vmatprep.subr.mxu0 %v694
    %2298 = vmatpush1.msra.mxu0 %v693
    %2299 = vmatprep.subr.mxu0 %v744
    %2300 = vmatpush1.msra.mxu0 %v743
    %2301 = vmatprep.subr.mxu0 %v794
    %2302 = vmatpush1.msra.mxu0 %v793
    %2303 = vmatprep.subr.mxu0 %v844
    %2304 = vmatpush1.msra.mxu0 %v843
    %2305 = vmatprep.subr.mxu0 0.0
    %2306 = vmatpush1.msra.mxu0 0.0
    %2307 = vmatprep.subr.mxu0 0.0
    %2308 = vmatpush1.msra.mxu0 0.0
    %2309 = vmatprep.subr.mxu0 0.0
    %2310 = vmatpush1.msra.mxu0 0.0
    %2311 = vmatprep.subr.mxu0 0.0
    %2312 = vmatpush1.msra.mxu0 0.0
    %2313 = vmatprep.subr.mxu0 0.0
    %2314 = vmatpush1.msra.mxu0 0.0
    %2315 = vmatprep.subr.mxu0 0.0
    %2316 = vmatpush1.msra.mxu0 0.0
    %2317 = vmatprep.subr.mxu0 0.0
    %2318 = vmatpush1.msra.mxu0 0.0
    %2319 = vmatprep.subr.mxu0 0.0
    %2320 = vmatpush1.msra.mxu0 0.0
    %2321 = vmatprep.subr.mxu0 0.0
    %2322 = vmatpush1.msra.mxu0 0.0
    %2323 = vmatprep.subr.mxu0 0.0
    %2324 = vmatpush1.msra.mxu0 0.0
    %2325 = vmatprep.subr.mxu0 0.0
    %2326 = vmatpush1.msra.mxu0 0.0
    %2327 = vmatprep.subr.mxu0 0.0
    %2328 = vmatpush1.msra.mxu0 0.0
    %2329 = vmatprep.subr.mxu0 0.0
    %2330 = vmatpush1.msra.mxu0 0.0
    %2331 = vmatprep.subr.mxu0 0.0
    %2332 = vmatpush1.msra.mxu0 0.0
    %2333 = vmatprep.subr.mxu0 0.0
    %2334 = vmatpush1.msra.mxu0 0.0
    %2335 = vmatprep.subr.mxu0 0.0
    %2336 = vmatpush1.msra.mxu0 0.0
    %2337 = vmatprep.mubr.f32.mxu0 0.0
    %2338 = vmatmul.mubr.f32.gmra.mrb[0].mxu0 %v52
    %v2339 = vpop.f32.mrb[0].mxu0
    %v2340 = vadd.f32 0.0, %v2339
    %v2341 = vpop.f32.mrb[0].mxu0
    %v2342 = vadd.f32 0.0, %v2341
    %2343 = vdwg.mxu0
    %2344 = vmatprep.subr.mxu0 %v96
    %2345 = vmatpush1.msra.mxu0 %v95
    %2346 = vmatprep.subr.mxu0 %v146
    %2347 = vmatpush1.msra.mxu0 %v145
    %2348 = vmatprep.subr.mxu0 %v196
    %2349 = vmatpush1.msra.mxu0 %v195
    %2350 = vmatprep.subr.mxu0 %v246
    %2351 = vmatpush1.msra.mxu0 %v245
    %2352 = vmatprep.subr.mxu0 %v296
    %2353 = vmatpush1.msra.mxu0 %v295
    %2354 = vmatprep.subr.mxu0 %v346
    %2355 = vmatpush1.msra.mxu0 %v345
    %2356 = vmatprep.subr.mxu0 %v396
    %2357 = vmatpush1.msra.mxu0 %v395
    %2358 = vmatprep.subr.mxu0 %v446
    %2359 = vmatpush1.msra.mxu0 %v445
    %2360 = vmatprep.subr.mxu0 %v496
    %2361 = vmatpush1.msra.mxu0 %v495
    %2362 = vmatprep.subr.mxu0 %v546
    %2363 = vmatpush1.msra.mxu0 %v545
    %2364 = vmatprep.subr.mxu0 %v596
    %2365 = vmatpush1.msra.mxu0 %v595
    %2366 = vmatprep.subr.mxu0 %v646
    %2367 = vmatpush1.msra.mxu0 %v645
    %2368 = vmatprep.subr.mxu0 %v696
    %2369 = vmatpush1.msra.mxu0 %v695
    %2370 = vmatprep.subr.mxu0 %v746
    %2371 = vmatpush1.msra.mxu0 %v745
    %2372 = vmatprep.subr.mxu0 %v796
    %2373 = vmatpush1.msra.mxu0 %v795
    %2374 = vmatprep.subr.mxu0 %v846
    %2375 = vmatpush1.msra.mxu0 %v845
    %2376 = vmatprep.subr.mxu0 0.0
    %2377 = vmatpush1.msra.mxu0 0.0
    %2378 = vmatprep.subr.mxu0 0.0
    %2379 = vmatpush1.msra.mxu0 0.0
    %2380 = vmatprep.subr.mxu0 0.0
    %2381 = vmatpush1.msra.mxu0 0.0
    %2382 = vmatprep.subr.mxu0 0.0
    %2383 = vmatpush1.msra.mxu0 0.0
    %2384 = vmatprep.subr.mxu0 0.0
    %2385 = vmatpush1.msra.mxu0 0.0
    %2386 = vmatprep.subr.mxu0 0.0
    %2387 = vmatpush1.msra.mxu0 0.0
    %2388 = vmatprep.subr.mxu0 0.0
    %2389 = vmatpush1.msra.mxu0 0.0
    %2390 = vmatprep.subr.mxu0 0.0
    %2391 = vmatpush1.msra.mxu0 0.0
    %2392 = vmatprep.subr.mxu0 0.0
    %2393 = vmatpush1.msra.mxu0 0.0
    %2394 = vmatprep.subr.mxu0 0.0
    %2395 = vmatpush1.msra.mxu0 0.0
    %2396 = vmatprep.subr.mxu0 0.0
    %2397 = vmatpush1.msra.mxu0 0.0
    %2398 = vmatprep.subr.mxu0 0.0
    %2399 = vmatpush1.msra.mxu0 0.0
    %2400 = vmatprep.subr.mxu0 0.0
    %2401 = vmatpush1.msra.mxu0 0.0
    %2402 = vmatprep.subr.mxu0 0.0
    %2403 = vmatpush1.msra.mxu0 0.0
    %2404 = vmatprep.subr.mxu0 0.0
    %2405 = vmatpush1.msra.mxu0 0.0
    %2406 = vmatprep.subr.mxu0 0.0
    %2407 = vmatpush1.msra.mxu0 0.0
    %2408 = vmatprep.mubr.f32.mxu0 0.0
    %2409 = vmatmul.mubr.f32.gmra.mrb[0].mxu0 %v52
    %v2410 = vpop.f32.mrb[0].mxu0
    %v2411 = vadd.f32 0.0, %v2410
    %v2412 = vpop.f32.mrb[0].mxu0
    %v2413 = vadd.f32 0.0, %v2412
    %2414 = vdwg.mxu0
    %2415 = vmatprep.subr.mxu0 %v98
    %2416 = vmatpush1.msra.mxu0 %v97
    %2417 = vmatprep.subr.mxu0 %v148
    %2418 = vmatpush1.msra.mxu0 %v147
    %2419 = vmatprep.subr.mxu0 %v198
    %2420 = vmatpush1.msra.mxu0 %v197
    %2421 = vmatprep.subr.mxu0 %v248
    %2422 = vmatpush1.msra.mxu0 %v247
    %2423 = vmatprep.subr.mxu0 %v298
    %2424 = vmatpush1.msra.mxu0 %v297
    %2425 = vmatprep.subr.mxu0 %v348
    %2426 = vmatpush1.msra.mxu0 %v347
    %2427 = vmatprep.subr.mxu0 %v398
    %2428 = vmatpush1.msra.mxu0 %v397
    %2429 = vmatprep.subr.mxu0 %v448
    %2430 = vmatpush1.msra.mxu0 %v447
    %2431 = vmatprep.subr.mxu0 %v498
    %2432 = vmatpush1.msra.mxu0 %v497
    %2433 = vmatprep.subr.mxu0 %v548
    %2434 = vmatpush1.msra.mxu0 %v547
    %2435 = vmatprep.subr.mxu0 %v598
    %2436 = vmatpush1.msra.mxu0 %v597
    %2437 = vmatprep.subr.mxu0 %v648
    %2438 = vmatpush1.msra.mxu0 %v647
    %2439 = vmatprep.subr.mxu0 %v698
    %2440 = vmatpush1.msra.mxu0 %v697
    %2441 = vmatprep.subr.mxu0 %v748
    %2442 = vmatpush1.msra.mxu0 %v747
    %2443 = vmatprep.subr.mxu0 %v798
    %2444 = vmatpush1.msra.mxu0 %v797
    %2445 = vmatprep.subr.mxu0 %v848
    %2446 = vmatpush1.msra.mxu0 %v847
    %2447 = vmatprep.subr.mxu0 0.0
    %2448 = vmatpush1.msra.mxu0 0.0
    %2449 = vmatprep.subr.mxu0 0.0
    %2450 = vmatpush1.msra.mxu0 0.0
    %2451 = vmatprep.subr.mxu0 0.0
    %2452 = vmatpush1.msra.mxu0 0.0
    %2453 = vmatprep.subr.mxu0 0.0
    %2454 = vmatpush1.msra.mxu0 0.0
    %2455 = vmatprep.subr.mxu0 0.0
    %2456 = vmatpush1.msra.mxu0 0.0
    %2457 = vmatprep.subr.mxu0 0.0
    %2458 = vmatpush1.msra.mxu0 0.0
    %2459 = vmatprep.subr.mxu0 0.0
    %2460 = vmatpush1.msra.mxu0 0.0
    %2461 = vmatprep.subr.mxu0 0.0
    %2462 = vmatpush1.msra.mxu0 0.0
    %2463 = vmatprep.subr.mxu0 0.0
    %2464 = vmatpush1.msra.mxu0 0.0
    %2465 = vmatprep.subr.mxu0 0.0
    %2466 = vmatpush1.msra.mxu0 0.0
    %2467 = vmatprep.subr.mxu0 0.0
    %2468 = vmatpush1.msra.mxu0 0.0
    %2469 = vmatprep.subr.mxu0 0.0
    %2470 = vmatpush1.msra.mxu0 0.0
    %2471 = vmatprep.subr.mxu0 0.0
    %2472 = vmatpush1.msra.mxu0 0.0
    %2473 = vmatprep.subr.mxu0 0.0
    %2474 = vmatpush1.msra.mxu0 0.0
    %2475 = vmatprep.subr.mxu0 0.0
    %2476 = vmatpush1.msra.mxu0 0.0
    %2477 = vmatprep.subr.mxu0 0.0
    %2478 = vmatpush1.msra.mxu0 0.0
    %2479 = vmatprep.mubr.f32.mxu0 0.0
    %2480 = vmatmul.mubr.f32.gmra.mrb[0].mxu0 %v52
    %v2481 = vpop.f32.mrb[0].mxu0
    %v2482 = vadd.f32 0.0, %v2481
    %v2483 = vpop.f32.mrb[0].mxu0
    %v2484 = vadd.f32 0.0, %v2483
    %2485 = vdwg.mxu0
    %2486 = vmatprep.subr.mxu0 %v100
    %2487 = vmatpush1.msra.mxu0 %v99
    %2488 = vmatprep.subr.mxu0 %v150
    %2489 = vmatpush1.msra.mxu0 %v149
    %2490 = vmatprep.subr.mxu0 %v200
    %2491 = vmatpush1.msra.mxu0 %v199
    %2492 = vmatprep.subr.mxu0 %v250
    %2493 = vmatpush1.msra.mxu0 %v249
    %2494 = vmatprep.subr.mxu0 %v300
    %2495 = vmatpush1.msra.mxu0 %v299
    %2496 = vmatprep.subr.mxu0 %v350
    %2497 = vmatpush1.msra.mxu0 %v349
    %2498 = vmatprep.subr.mxu0 %v400
    %2499 = vmatpush1.msra.mxu0 %v399
    %2500 = vmatprep.subr.mxu0 %v450
    %2501 = vmatpush1.msra.mxu0 %v449
    %2502 = vmatprep.subr.mxu0 %v500
    %2503 = vmatpush1.msra.mxu0 %v499
    %2504 = vmatprep.subr.mxu0 %v550
    %2505 = vmatpush1.msra.mxu0 %v549
    %2506 = vmatprep.subr.mxu0 %v600
    %2507 = vmatpush1.msra.mxu0 %v599
    %2508 = vmatprep.subr.mxu0 %v650
    %2509 = vmatpush1.msra.mxu0 %v649
    %2510 = vmatprep.subr.mxu0 %v700
    %2511 = vmatpush1.msra.mxu0 %v699
    %2512 = vmatprep.subr.mxu0 %v750
    %2513 = vmatpush1.msra.mxu0 %v749
    %2514 = vmatprep.subr.mxu0 %v800
    %2515 = vmatpush1.msra.mxu0 %v799
    %2516 = vmatprep.subr.mxu0 %v850
    %2517 = vmatpush1.msra.mxu0 %v849
    %2518 = vmatprep.subr.mxu0 0.0
    %2519 = vmatpush1.msra.mxu0 0.0
    %2520 = vmatprep.subr.mxu0 0.0
    %2521 = vmatpush1.msra.mxu0 0.0
    %2522 = vmatprep.subr.mxu0 0.0
    %2523 = vmatpush1.msra.mxu0 0.0
    %2524 = vmatprep.subr.mxu0 0.0
    %2525 = vmatpush1.msra.mxu0 0.0
    %2526 = vmatprep.subr.mxu0 0.0
    %2527 = vmatpush1.msra.mxu0 0.0
    %2528 = vmatprep.subr.mxu0 0.0
    %2529 = vmatpush1.msra.mxu0 0.0
    %2530 = vmatprep.subr.mxu0 0.0
    %2531 = vmatpush1.msra.mxu0 0.0
    %2532 = vmatprep.subr.mxu0 0.0
    %2533 = vmatpush1.msra.mxu0 0.0
    %2534 = vmatprep.subr.mxu0 0.0
    %2535 = vmatpush1.msra.mxu0 0.0
    %2536 = vmatprep.subr.mxu0 0.0
    %2537 = vmatpush1.msra.mxu0 0.0
    %2538 = vmatprep.subr.mxu0 0.0
    %2539 = vmatpush1.msra.mxu0 0.0
    %2540 = vmatprep.subr.mxu0 0.0
    %2541 = vmatpush1.msra.mxu0 0.0
    %2542 = vmatprep.subr.mxu0 0.0
    %2543 = vmatpush1.msra.mxu0 0.0
    %2544 = vmatprep.subr.mxu0 0.0
    %2545 = vmatpush1.msra.mxu0 0.0
    %2546 = vmatprep.subr.mxu0 0.0
    %2547 = vmatpush1.msra.mxu0 0.0
    %2548 = vmatprep.subr.mxu0 0.0
    %2549 = vmatpush1.msra.mxu0 0.0
    %2550 = vmatprep.mubr.f32.mxu0 0.0
    %2551 = vmatmul.mubr.f32.gmra.mrb[0].mxu0 %v52
    %v2552 = vpop.f32.mrb[0].mxu0
    %v2553 = vadd.f32 0.0, %v2552
    %v2554 = vpop.f32.mrb[0].mxu0
    %v2555 = vadd.f32 0.0, %v2554
    %2556 = vdwg.mxu0
    %2557 = vmatprep.subr.mxu0 %v102
    %2558 = vmatpush1.msra.mxu0 %v101
    %2559 = vmatprep.subr.mxu0 %v152
    %2560 = vmatpush1.msra.mxu0 %v151
    %2561 = vmatprep.subr.mxu0 %v202
    %2562 = vmatpush1.msra.mxu0 %v201
    %2563 = vmatprep.subr.mxu0 %v252
    %2564 = vmatpush1.msra.mxu0 %v251
    %2565 = vmatprep.subr.mxu0 %v302
    %2566 = vmatpush1.msra.mxu0 %v301
    %2567 = vmatprep.subr.mxu0 %v352
    %2568 = vmatpush1.msra.mxu0 %v351
    %2569 = vmatprep.subr.mxu0 %v402
    %2570 = vmatpush1.msra.mxu0 %v401
    %2571 = vmatprep.subr.mxu0 %v452
    %2572 = vmatpush1.msra.mxu0 %v451
    %2573 = vmatprep.subr.mxu0 %v502
    %2574 = vmatpush1.msra.mxu0 %v501
    %2575 = vmatprep.subr.mxu0 %v552
    %2576 = vmatpush1.msra.mxu0 %v551
    %2577 = vmatprep.subr.mxu0 %v602
    %2578 = vmatpush1.msra.mxu0 %v601
    %2579 = vmatprep.subr.mxu0 %v652
    %2580 = vmatpush1.msra.mxu0 %v651
    %2581 = vmatprep.subr.mxu0 %v702
    %2582 = vmatpush1.msra.mxu0 %v701
    %2583 = vmatprep.subr.mxu0 %v752
    %2584 = vmatpush1.msra.mxu0 %v751
    %2585 = vmatprep.subr.mxu0 %v802
    %2586 = vmatpush1.msra.mxu0 %v801
    %2587 = vmatprep.subr.mxu0 %v852
    %2588 = vmatpush1.msra.mxu0 %v851
    %2589 = vmatprep.subr.mxu0 0.0
    %2590 = vmatpush1.msra.mxu0 0.0
    %2591 = vmatprep.subr.mxu0 0.0
    %2592 = vmatpush1.msra.mxu0 0.0
    %2593 = vmatprep.subr.mxu0 0.0
    %2594 = vmatpush1.msra.mxu0 0.0
    %2595 = vmatprep.subr.mxu0 0.0
    %2596 = vmatpush1.msra.mxu0 0.0
    %2597 = vmatprep.subr.mxu0 0.0
    %2598 = vmatpush1.msra.mxu0 0.0
    %2599 = vmatprep.subr.mxu0 0.0
    %2600 = vmatpush1.msra.mxu0 0.0
    %2601 = vmatprep.subr.mxu0 0.0
    %2602 = vmatpush1.msra.mxu0 0.0
    %2603 = vmatprep.subr.mxu0 0.0
    %2604 = vmatpush1.msra.mxu0 0.0
    %2605 = vmatprep.subr.mxu0 0.0
    %2606 = vmatpush1.msra.mxu0 0.0
    %2607 = vmatprep.subr.mxu0 0.0
    %2608 = vmatpush1.msra.mxu0 0.0
    %2609 = vmatprep.subr.mxu0 0.0
    %2610 = vmatpush1.msra.mxu0 0.0
    %2611 = vmatprep.subr.mxu0 0.0
    %2612 = vmatpush1.msra.mxu0 0.0
    %2613 = vmatprep.subr.mxu0 0.0
    %2614 = vmatpush1.msra.mxu0 0.0
    %2615 = vmatprep.subr.mxu0 0.0
    %2616 = vmatpush1.msra.mxu0 0.0
    %2617 = vmatprep.subr.mxu0 0.0
    %2618 = vmatpush1.msra.mxu0 0.0
    %2619 = vmatprep.subr.mxu0 0.0
    %2620 = vmatpush1.msra.mxu0 0.0
    %2621 = vmatprep.mubr.f32.mxu0 0.0
    %2622 = vmatmul.mubr.f32.gmra.mrb[0].mxu0 %v52
    %v2623 = vpop.f32.mrb[0].mxu0
    %v2624 = vadd.f32 0.0, %v2623
    %v2625 = vpop.f32.mrb[0].mxu0
    %v2626 = vadd.f32 0.0, %v2625
    %2627 = vdwg.mxu0
    %v2628 = vld [vmem:[#allocation7] sm:$0xff]
    %v2629 = vld [vmem:[#allocation7 + $0x8] sm:$0xff]
    %v2630 = vld [vmem:[#allocation7 + $0x10] sm:$0xff]
    %v2631 = vld [vmem:[#allocation7 + $0x18] sm:$0xff]
    %v2632 = vld [vmem:[#allocation7 + $0x20] sm:$0xff]
    %v2633 = vld [vmem:[#allocation7 + $0x28] sm:$0xff]
    %v2634 = vld [vmem:[#allocation7 + $0x30] sm:$0x3]
    %v2642 = vlaneseq
    %v2643 = vshrl.u32 %v2642, 7
    %v2644 = vsub.s32 0, %v2643
    %v2645 = vrot.slane %v2628, %v2644
    %v2646 = vlaneseq
    %v2647 = vshrl.u32 %v2646, 7
    %v2648 = vsub.s32 1, %v2647
    %v2649 = vrot.slane %v2628, %v2648
    %v2650 = vlaneseq
    %v2651 = vshrl.u32 %v2650, 7
    %v2652 = vsub.s32 2, %v2651
    %v2653 = vrot.slane %v2628, %v2652
    %v2654 = vlaneseq
    %v2655 = vshrl.u32 %v2654, 7
    %v2656 = vsub.s32 3, %v2655
    %v2657 = vrot.slane %v2628, %v2656
    %v2658 = vlaneseq
    %v2659 = vshrl.u32 %v2658, 7
    %v2660 = vsub.s32 4, %v2659
    %v2661 = vrot.slane %v2628, %v2660
    %v2662 = vlaneseq
    %v2663 = vshrl.u32 %v2662, 7
    %v2664 = vsub.s32 5, %v2663
    %v2665 = vrot.slane %v2628, %v2664
    %v2666 = vlaneseq
    %v2667 = vshrl.u32 %v2666, 7
    %v2668 = vsub.s32 6, %v2667
    %v2669 = vrot.slane %v2628, %v2668
    %v2670 = vlaneseq
    %v2671 = vshrl.u32 %v2670, 7
    %v2672 = vsub.s32 7, %v2671
    %v2673 = vrot.slane %v2628, %v2672
    %v2674 = vlaneseq
    %v2675 = vshrl.u32 %v2674, 7
    %v2676 = vsub.s32 0, %v2675
    %v2677 = vrot.slane %v2629, %v2676
    %v2678 = vlaneseq
    %v2679 = vshrl.u32 %v2678, 7
    %v2680 = vsub.s32 1, %v2679
    %v2681 = vrot.slane %v2629, %v2680
    %v2682 = vlaneseq
    %v2683 = vshrl.u32 %v2682, 7
    %v2684 = vsub.s32 2, %v2683
    %v2685 = vrot.slane %v2629, %v2684
    %v2686 = vlaneseq
    %v2687 = vshrl.u32 %v2686, 7
    %v2688 = vsub.s32 3, %v2687
    %v2689 = vrot.slane %v2629, %v2688
    %v2690 = vlaneseq
    %v2691 = vshrl.u32 %v2690, 7
    %v2692 = vsub.s32 4, %v2691
    %v2693 = vrot.slane %v2629, %v2692
    %v2694 = vlaneseq
    %v2695 = vshrl.u32 %v2694, 7
    %v2696 = vsub.s32 5, %v2695
    %v2697 = vrot.slane %v2629, %v2696
    %v2698 = vlaneseq
    %v2699 = vshrl.u32 %v2698, 7
    %v2700 = vsub.s32 6, %v2699
    %v2701 = vrot.slane %v2629, %v2700
    %v2702 = vlaneseq
    %v2703 = vshrl.u32 %v2702, 7
    %v2704 = vsub.s32 7, %v2703
    %v2705 = vrot.slane %v2629, %v2704
    %v2706 = vlaneseq
    %v2707 = vshrl.u32 %v2706, 7
    %v2708 = vsub.s32 0, %v2707
    %v2709 = vrot.slane %v2630, %v2708
    %v2710 = vlaneseq
    %v2711 = vshrl.u32 %v2710, 7
    %v2712 = vsub.s32 1, %v2711
    %v2713 = vrot.slane %v2630, %v2712
    %v2714 = vlaneseq
    %v2715 = vshrl.u32 %v2714, 7
    %v2716 = vsub.s32 2, %v2715
    %v2717 = vrot.slane %v2630, %v2716
    %v2718 = vlaneseq
    %v2719 = vshrl.u32 %v2718, 7
    %v2720 = vsub.s32 3, %v2719
    %v2721 = vrot.slane %v2630, %v2720
    %v2722 = vlaneseq
    %v2723 = vshrl.u32 %v2722, 7
    %v2724 = vsub.s32 4, %v2723
    %v2725 = vrot.slane %v2630, %v2724
    %v2726 = vlaneseq
    %v2727 = vshrl.u32 %v2726, 7
    %v2728 = vsub.s32 5, %v2727
    %v2729 = vrot.slane %v2630, %v2728
    %v2730 = vlaneseq
    %v2731 = vshrl.u32 %v2730, 7
    %v2732 = vsub.s32 6, %v2731
    %v2733 = vrot.slane %v2630, %v2732
    %v2734 = vlaneseq
    %v2735 = vshrl.u32 %v2734, 7
    %v2736 = vsub.s32 7, %v2735
    %v2737 = vrot.slane %v2630, %v2736
    %v2738 = vlaneseq
    %v2739 = vshrl.u32 %v2738, 7
    %v2740 = vsub.s32 0, %v2739
    %v2741 = vrot.slane %v2631, %v2740
    %v2742 = vlaneseq
    %v2743 = vshrl.u32 %v2742, 7
    %v2744 = vsub.s32 1, %v2743
    %v2745 = vrot.slane %v2631, %v2744
    %v2746 = vlaneseq
    %v2747 = vshrl.u32 %v2746, 7
    %v2748 = vsub.s32 2, %v2747
    %v2749 = vrot.slane %v2631, %v2748
    %v2750 = vlaneseq
    %v2751 = vshrl.u32 %v2750, 7
    %v2752 = vsub.s32 3, %v2751
    %v2753 = vrot.slane %v2631, %v2752
    %v2754 = vlaneseq
    %v2755 = vshrl.u32 %v2754, 7
    %v2756 = vsub.s32 4, %v2755
    %v2757 = vrot.slane %v2631, %v2756
    %v2758 = vlaneseq
    %v2759 = vshrl.u32 %v2758, 7
    %v2760 = vsub.s32 5, %v2759
    %v2761 = vrot.slane %v2631, %v2760
    %v2762 = vlaneseq
    %v2763 = vshrl.u32 %v2762, 7
    %v2764 = vsub.s32 6, %v2763
    %v2765 = vrot.slane %v2631, %v2764
    %v2766 = vlaneseq
    %v2767 = vshrl.u32 %v2766, 7
    %v2768 = vsub.s32 7, %v2767
    %v2769 = vrot.slane %v2631, %v2768
    %v2770 = vlaneseq
    %v2771 = vshrl.u32 %v2770, 7
    %v2772 = vsub.s32 0, %v2771
    %v2773 = vrot.slane %v2632, %v2772
    %v2774 = vlaneseq
    %v2775 = vshrl.u32 %v2774, 7
    %v2776 = vsub.s32 1, %v2775
    %v2777 = vrot.slane %v2632, %v2776
    %v2778 = vlaneseq
    %v2779 = vshrl.u32 %v2778, 7
    %v2780 = vsub.s32 2, %v2779
    %v2781 = vrot.slane %v2632, %v2780
    %v2782 = vlaneseq
    %v2783 = vshrl.u32 %v2782, 7
    %v2784 = vsub.s32 3, %v2783
    %v2785 = vrot.slane %v2632, %v2784
    %v2786 = vlaneseq
    %v2787 = vshrl.u32 %v2786, 7
    %v2788 = vsub.s32 4, %v2787
    %v2789 = vrot.slane %v2632, %v2788
    %v2790 = vlaneseq
    %v2791 = vshrl.u32 %v2790, 7
    %v2792 = vsub.s32 5, %v2791
    %v2793 = vrot.slane %v2632, %v2792
    %v2794 = vlaneseq
    %v2795 = vshrl.u32 %v2794, 7
    %v2796 = vsub.s32 6, %v2795
    %v2797 = vrot.slane %v2632, %v2796
    %v2798 = vlaneseq
    %v2799 = vshrl.u32 %v2798, 7
    %v2800 = vsub.s32 7, %v2799
    %v2801 = vrot.slane %v2632, %v2800
    %v2802 = vlaneseq
    %v2803 = vshrl.u32 %v2802, 7
    %v2804 = vsub.s32 0, %v2803
    %v2805 = vrot.slane %v2633, %v2804
    %v2806 = vlaneseq
    %v2807 = vshrl.u32 %v2806, 7
    %v2808 = vsub.s32 1, %v2807
    %v2809 = vrot.slane %v2633, %v2808
    %v2810 = vlaneseq
    %v2811 = vshrl.u32 %v2810, 7
    %v2812 = vsub.s32 2, %v2811
    %v2813 = vrot.slane %v2633, %v2812
    %v2814 = vlaneseq
    %v2815 = vshrl.u32 %v2814, 7
    %v2816 = vsub.s32 3, %v2815
    %v2817 = vrot.slane %v2633, %v2816
    %v2818 = vlaneseq
    %v2819 = vshrl.u32 %v2818, 7
    %v2820 = vsub.s32 4, %v2819
    %v2821 = vrot.slane %v2633, %v2820
    %v2822 = vlaneseq
    %v2823 = vshrl.u32 %v2822, 7
    %v2824 = vsub.s32 5, %v2823
    %v2825 = vrot.slane %v2633, %v2824
    %v2826 = vlaneseq
    %v2827 = vshrl.u32 %v2826, 7
    %v2828 = vsub.s32 6, %v2827
    %v2829 = vrot.slane %v2633, %v2828
    %v2830 = vlaneseq
    %v2831 = vshrl.u32 %v2830, 7
    %v2832 = vsub.s32 7, %v2831
    %v2833 = vrot.slane %v2633, %v2832
    %v2834 = vlaneseq
    %v2835 = vshrl.u32 %v2834, 7
    %v2836 = vsub.s32 0, %v2835
    %v2837 = vrot.slane %v2634, %v2836
    %v2838 = vlaneseq
    %v2839 = vshrl.u32 %v2838, 7
    %v2840 = vsub.s32 1, %v2839
    %v2841 = vrot.slane %v2634, %v2840
    %v2892 = vsub.f32 %v920, %v2645
    %v2893 = vsub.f32 %v922, %v2649
    %v2894 = vsub.f32 %v991, %v2653
    %v2895 = vsub.f32 %v993, %v2657
    %v2896 = vsub.f32 %v1062, %v2661
    %v2897 = vsub.f32 %v1064, %v2665
    %v2898 = vsub.f32 %v1133, %v2669
    %v2899 = vsub.f32 %v1135, %v2673
    %v2900 = vsub.f32 %v1204, %v2677
    %v2901 = vsub.f32 %v1206, %v2681
    %v2902 = vsub.f32 %v1275, %v2685
    %v2903 = vsub.f32 %v1277, %v2689
    %v2904 = vsub.f32 %v1346, %v2693
    %v2905 = vsub.f32 %v1348, %v2697
    %v2906 = vsub.f32 %v1417, %v2701
    %v2907 = vsub.f32 %v1419, %v2705
    %v2908 = vsub.f32 %v1488, %v2709
    %v2909 = vsub.f32 %v1490, %v2713
    %v2910 = vsub.f32 %v1559, %v2717
    %v2911 = vsub.f32 %v1561, %v2721
    %v2912 = vsub.f32 %v1630, %v2725
    %v2913 = vsub.f32 %v1632, %v2729
    %v2914 = vsub.f32 %v1701, %v2733
    %v2915 = vsub.f32 %v1703, %v2737
    %v2916 = vsub.f32 %v1772, %v2741
    %v2917 = vsub.f32 %v1774, %v2745
    %v2918 = vsub.f32 %v1843, %v2749
    %v2919 = vsub.f32 %v1845, %v2753
    %v2920 = vsub.f32 %v1914, %v2757
    %v2921 = vsub.f32 %v1916, %v2761
    %v2922 = vsub.f32 %v1985, %v2765
    %v2923 = vsub.f32 %v1987, %v2769
    %v2924 = vsub.f32 %v2056, %v2773
    %v2925 = vsub.f32 %v2058, %v2777
    %v2926 = vsub.f32 %v2127, %v2781
    %v2927 = vsub.f32 %v2129, %v2785
    %v2928 = vsub.f32 %v2198, %v2789
    %v2929 = vsub.f32 %v2200, %v2793
    %v2930 = vsub.f32 %v2269, %v2797
    %v2931 = vsub.f32 %v2271, %v2801
    %v2932 = vsub.f32 %v2340, %v2805
    %v2933 = vsub.f32 %v2342, %v2809
    %v2934 = vsub.f32 %v2411, %v2813
    %v2935 = vsub.f32 %v2413, %v2817
    %v2936 = vsub.f32 %v2482, %v2821
    %v2937 = vsub.f32 %v2484, %v2825
    %v2938 = vsub.f32 %v2553, %v2829
    %v2939 = vsub.f32 %v2555, %v2833
    %v2940 = vsub.f32 %v2624, %v2837
    %v2941 = vsub.f32 %v2626, %v2841
    %v2942 = vmul.f32 %v2892, %v2892
    %v2943 = vmul.f32 %v2893, %v2893
    %v2944 = vmul.f32 %v2894, %v2894
    %v2945 = vmul.f32 %v2895, %v2895
    %v2946 = vmul.f32 %v2896, %v2896
    %v2947 = vmul.f32 %v2897, %v2897
    %v2948 = vmul.f32 %v2898, %v2898
    %v2949 = vmul.f32 %v2899, %v2899
    %v2950 = vmul.f32 %v2900, %v2900
    %v2951 = vmul.f32 %v2901, %v2901
    %v2952 = vmul.f32 %v2902, %v2902
    %v2953 = vmul.f32 %v2903, %v2903
    %v2954 = vmul.f32 %v2904, %v2904
    %v2955 = vmul.f32 %v2905, %v2905
    %v2956 = vmul.f32 %v2906, %v2906
    %v2957 = vmul.f32 %v2907, %v2907
    %v2958 = vmul.f32 %v2908, %v2908
    %v2959 = vmul.f32 %v2909, %v2909
    %v2960 = vmul.f32 %v2910, %v2910
    %v2961 = vmul.f32 %v2911, %v2911
    %v2962 = vmul.f32 %v2912, %v2912
    %v2963 = vmul.f32 %v2913, %v2913
    %v2964 = vmul.f32 %v2914, %v2914
    %v2965 = vmul.f32 %v2915, %v2915
    %v2966 = vmul.f32 %v2916, %v2916
    %v2967 = vmul.f32 %v2917, %v2917
    %v2968 = vmul.f32 %v2918, %v2918
    %v2969 = vmul.f32 %v2919, %v2919
    %v2970 = vmul.f32 %v2920, %v2920
    %v2971 = vmul.f32 %v2921, %v2921
    %v2972 = vmul.f32 %v2922, %v2922
    %v2973 = vmul.f32 %v2923, %v2923
    %v2974 = vmul.f32 %v2924, %v2924
    %v2975 = vmul.f32 %v2925, %v2925
    %v2976 = vmul.f32 %v2926, %v2926
    %v2977 = vmul.f32 %v2927, %v2927
    %v2978 = vmul.f32 %v2928, %v2928
    %v2979 = vmul.f32 %v2929, %v2929
    %v2980 = vmul.f32 %v2930, %v2930
    %v2981 = vmul.f32 %v2931, %v2931
    %v2982 = vmul.f32 %v2932, %v2932
    %v2983 = vmul.f32 %v2933, %v2933
    %v2984 = vmul.f32 %v2934, %v2934
    %v2985 = vmul.f32 %v2935, %v2935
    %v2986 = vmul.f32 %v2936, %v2936
    %v2987 = vmul.f32 %v2937, %v2937
    %v2988 = vmul.f32 %v2938, %v2938
    %v2989 = vmul.f32 %v2939, %v2939
    %v2990 = vmul.f32 %v2940, %v2940
    %v2991 = vmul.f32 %v2941, %v2941
    %v2992 = vmul.f32 %v2942, -8.0
    %v2993 = vmul.f32 %v2943, -8.0
    %v2994 = vmul.f32 %v2944, -8.0
    %v2995 = vmul.f32 %v2945, -8.0
    %v2996 = vmul.f32 %v2946, -8.0
    %v2997 = vmul.f32 %v2947, -8.0
    %v2998 = vmul.f32 %v2948, -8.0
    %v2999 = vmul.f32 %v2949, -8.0
    %v3000 = vmul.f32 %v2950, -8.0
    %v3001 = vmul.f32 %v2951, -8.0
    %v3002 = vmul.f32 %v2952, -8.0
    %v3003 = vmul.f32 %v2953, -8.0
    %v3004 = vmul.f32 %v2954, -8.0
    %v3005 = vmul.f32 %v2955, -8.0
    %v3006 = vmul.f32 %v2956, -8.0
    %v3007 = vmul.f32 %v2957, -8.0
    %v3008 = vmul.f32 %v2958, -8.0
    %v3009 = vmul.f32 %v2959, -8.0
    %v3010 = vmul.f32 %v2960, -8.0
    %v3011 = vmul.f32 %v2961, -8.0
    %v3012 = vmul.f32 %v2962, -8.0
    %v3013 = vmul.f32 %v2963, -8.0
    %v3014 = vmul.f32 %v2964, -8.0
    %v3015 = vmul.f32 %v2965, -8.0
    %v3016 = vmul.f32 %v2966, -8.0
    %v3017 = vmul.f32 %v2967, -8.0
    %v3018 = vmul.f32 %v2968, -8.0
    %v3019 = vmul.f32 %v2969, -8.0
    %v3020 = vmul.f32 %v2970, -8.0
    %v3021 = vmul.f32 %v2971, -8.0
    %v3022 = vmul.f32 %v2972, -8.0
    %v3023 = vmul.f32 %v2973, -8.0
    %v3024 = vmul.f32 %v2974, -8.0
    %v3025 = vmul.f32 %v2975, -8.0
    %v3026 = vmul.f32 %v2976, -8.0
    %v3027 = vmul.f32 %v2977, -8.0
    %v3028 = vmul.f32 %v2978, -8.0
    %v3029 = vmul.f32 %v2979, -8.0
    %v3030 = vmul.f32 %v2980, -8.0
    %v3031 = vmul.f32 %v2981, -8.0
    %v3032 = vmul.f32 %v2982, -8.0
    %v3033 = vmul.f32 %v2983, -8.0
    %v3034 = vmul.f32 %v2984, -8.0
    %v3035 = vmul.f32 %v2985, -8.0
    %v3036 = vmul.f32 %v2986, -8.0
    %v3037 = vmul.f32 %v2987, -8.0
    %v3038 = vmul.f32 %v2988, -8.0
    %v3039 = vmul.f32 %v2989, -8.0
    %v3040 = vmul.f32 %v2990, -8.0
    %v3041 = vmul.f32 %v2991, -8.0
    %v3042 = vmul.f32 %v2992, 1.442695
    %v3043 = vpow.pop %v3042
    %v3044 = vmul.f32 %v2993, 1.442695
    %v3045 = vpow.pop %v3044
    %v3046 = vmul.f32 %v2994, 1.442695
    %v3047 = vpow.pop %v3046
    %v3048 = vmul.f32 %v2995, 1.442695
    %v3049 = vpow.pop %v3048
    %v3050 = vmul.f32 %v2996, 1.442695
    %v3051 = vpow.pop %v3050
    %v3052 = vmul.f32 %v2997, 1.442695
    %v3053 = vpow.pop %v3052
    %v3054 = vmul.f32 %v2998, 1.442695
    %v3055 = vpow.pop %v3054
    %v3056 = vmul.f32 %v2999, 1.442695
    %v3057 = vpow.pop %v3056
    %v3058 = vmul.f32 %v3000, 1.442695
    %v3059 = vpow.pop %v3058
    %v3060 = vmul.f32 %v3001, 1.442695
    %v3061 = vpow.pop %v3060
    %v3062 = vmul.f32 %v3002, 1.442695
    %v3063 = vpow.pop %v3062
    %v3064 = vmul.f32 %v3003, 1.442695
    %v3065 = vpow.pop %v3064
    %v3066 = vmul.f32 %v3004, 1.442695
    %v3067 = vpow.pop %v3066
    %v3068 = vmul.f32 %v3005, 1.442695
    %v3069 = vpow.pop %v3068
    %v3070 = vmul.f32 %v3006, 1.442695
    %v3071 = vpow.pop %v3070
    %v3072 = vmul.f32 %v3007, 1.442695
    %v3073 = vpow.pop %v3072
    %v3074 = vmul.f32 %v3008, 1.442695
    %v3075 = vpow.pop %v3074
    %v3076 = vmul.f32 %v3009, 1.442695
    %v3077 = vpow.pop %v3076
    %v3078 = vmul.f32 %v3010, 1.442695
    %v3079 = vpow.pop %v3078
    %v3080 = vmul.f32 %v3011, 1.442695
    %v3081 = vpow.pop %v3080
    %v3082 = vmul.f32 %v3012, 1.442695
    %v3083 = vpow.pop %v3082
    %v3084 = vmul.f32 %v3013, 1.442695
    %v3085 = vpow.pop %v3084
    %v3086 = vmul.f32 %v3014, 1.442695
    %v3087 = vpow.pop %v3086
    %v3088 = vmul.f32 %v3015, 1.442695
    %v3089 = vpow.pop %v3088
    %v3090 = vmul.f32 %v3016, 1.442695
    %v3091 = vpow.pop %v3090
    %v3092 = vmul.f32 %v3017, 1.442695
    %v3093 = vpow.pop %v3092
    %v3094 = vmul.f32 %v3018, 1.442695
    %v3095 = vpow.pop %v3094
    %v3096 = vmul.f32 %v3019, 1.442695
    %v3097 = vpow.pop %v3096
    %v3098 = vmul.f32 %v3020, 1.442695
    %v3099 = vpow.pop %v3098
    %v3100 = vmul.f32 %v3021, 1.442695
    %v3101 = vpow.pop %v3100
    %v3102 = vmul.f32 %v3022, 1.442695
    %v3103 = vpow.pop %v3102
    %v3104 = vmul.f32 %v3023, 1.442695
    %v3105 = vpow.pop %v3104
    %v3106 = vmul.f32 %v3024, 1.442695
    %v3107 = vpow.pop %v3106
    %v3108 = vmul.f32 %v3025, 1.442695
    %v3109 = vpow.pop %v3108
    %v3110 = vmul.f32 %v3026, 1.442695
    %v3111 = vpow.pop %v3110
    %v3112 = vmul.f32 %v3027, 1.442695
    %v3113 = vpow.pop %v3112
    %v3114 = vmul.f32 %v3028, 1.442695
    %v3115 = vpow.pop %v3114
    %v3116 = vmul.f32 %v3029, 1.442695
    %v3117 = vpow.pop %v3116
    %v3118 = vmul.f32 %v3030, 1.442695
    %v3119 = vpow.pop %v3118
    %v3120 = vmul.f32 %v3031, 1.442695
    %v3121 = vpow.pop %v3120
    %v3122 = vmul.f32 %v3032, 1.442695
    %v3123 = vpow.pop %v3122
    %v3124 = vmul.f32 %v3033, 1.442695
    %v3125 = vpow.pop %v3124
    %v3126 = vmul.f32 %v3034, 1.442695
    %v3127 = vpow.pop %v3126
    %v3128 = vmul.f32 %v3035, 1.442695
    %v3129 = vpow.pop %v3128
    %v3130 = vmul.f32 %v3036, 1.442695
    %v3131 = vpow.pop %v3130
    %v3132 = vmul.f32 %v3037, 1.442695
    %v3133 = vpow.pop %v3132
    %v3134 = vmul.f32 %v3038, 1.442695
    %v3135 = vpow.pop %v3134
    %v3136 = vmul.f32 %v3039, 1.442695
    %v3137 = vpow.pop %v3136
    %v3138 = vmul.f32 %v3040, 1.442695
    %v3139 = vpow.pop %v3138
    %v3140 = vmul.f32 %v3041, 1.442695
    %v3141 = vpow.pop %v3140
    %v3192 = vcombine.low %v3043, %v3045
    %v3193 = vcombine.low %v3047, %v3049
    %v3194 = vcombine.low %v3051, %v3053
    %v3195 = vcombine.low %v3055, %v3057
    %v3197 = vunpack.c.l.s4 1966171168
    %v3198 = vunpack.c.0.s8 %v3197
    %v3199 = vlaneseq
    %v3200 = vshrl.u32 %v3199, 7
    %v3201 = vsub.s32 %v3198, %v3200
    %v3202 = vrot.slane %v3192, %v3201
    %v3204 = vunpack.c.l.s4 1966171168
    %v3205 = vunpack.c.0.s8 %v3204
    %v3206 = vlaneseq
    %v3207 = vshrl.u32 %v3206, 7
    %v3208 = vsub.s32 %v3205, %v3207
    %v3209 = vrot.slane %v3193, %v3208
    %v3211 = vunpack.c.l.s4 1966171168
    %v3212 = vunpack.c.0.s8 %v3211
    %v3213 = vlaneseq
    %v3214 = vshrl.u32 %v3213, 7
    %v3215 = vsub.s32 %v3212, %v3214
    %v3216 = vrot.slane %v3194, %v3215
    %v3218 = vunpack.c.l.s4 1966171168
    %v3219 = vunpack.c.0.s8 %v3218
    %v3220 = vlaneseq
    %v3221 = vshrl.u32 %v3220, 7
    %v3222 = vsub.s32 %v3219, %v3221
    %v3223 = vrot.slane %v3195, %v3222
    %v3224 = vcombine.low %v3202, %v3209
    %v3225 = vcombine.low %v3216, %v3223
    %v3227 = vunpack.c.l.s4 1966171168
    %v3228 = vunpack.c.0.s8 %v3227
    %v3229 = vlaneseq
    %v3230 = vshrl.u32 %v3229, 7
    %v3231 = vsub.s32 %v3228, %v3230
    %v3232 = vrot.slane %v3224, %v3231
    %v3234 = vunpack.c.l.s4 1966171168
    %v3235 = vunpack.c.0.s8 %v3234
    %v3236 = vlaneseq
    %v3237 = vshrl.u32 %v3236, 7
    %v3238 = vsub.s32 %v3235, %v3237
    %v3239 = vrot.slane %v3225, %v3238
    %v3240 = vcombine.low %v3232, %v3239
    %v3241 = vcombine.low %v3059, %v3061
    %v3242 = vcombine.low %v3063, %v3065
    %v3243 = vcombine.low %v3067, %v3069
    %v3244 = vcombine.low %v3071, %v3073
    %v3246 = vunpack.c.l.s4 1966171168
    %v3247 = vunpack.c.0.s8 %v3246
    %v3248 = vlaneseq
    %v3249 = vshrl.u32 %v3248, 7
    %v3250 = vsub.s32 %v3247, %v3249
    %v3251 = vrot.slane %v3241, %v3250
    %v3253 = vunpack.c.l.s4 1966171168
    %v3254 = vunpack.c.0.s8 %v3253
    %v3255 = vlaneseq
    %v3256 = vshrl.u32 %v3255, 7
    %v3257 = vsub.s32 %v3254, %v3256
    %v3258 = vrot.slane %v3242, %v3257
    %v3260 = vunpack.c.l.s4 1966171168
    %v3261 = vunpack.c.0.s8 %v3260
    %v3262 = vlaneseq
    %v3263 = vshrl.u32 %v3262, 7
    %v3264 = vsub.s32 %v3261, %v3263
    %v3265 = vrot.slane %v3243, %v3264
    %v3267 = vunpack.c.l.s4 1966171168
    %v3268 = vunpack.c.0.s8 %v3267
    %v3269 = vlaneseq
    %v3270 = vshrl.u32 %v3269, 7
    %v3271 = vsub.s32 %v3268, %v3270
    %v3272 = vrot.slane %v3244, %v3271
    %v3273 = vcombine.low %v3251, %v3258
    %v3274 = vcombine.low %v3265, %v3272
    %v3276 = vunpack.c.l.s4 1966171168
    %v3277 = vunpack.c.0.s8 %v3276
    %v3278 = vlaneseq
    %v3279 = vshrl.u32 %v3278, 7
    %v3280 = vsub.s32 %v3277, %v3279
    %v3281 = vrot.slane %v3273, %v3280
    %v3283 = vunpack.c.l.s4 1966171168
    %v3284 = vunpack.c.0.s8 %v3283
    %v3285 = vlaneseq
    %v3286 = vshrl.u32 %v3285, 7
    %v3287 = vsub.s32 %v3284, %v3286
    %v3288 = vrot.slane %v3274, %v3287
    %v3289 = vcombine.low %v3281, %v3288
    %v3290 = vcombine.low %v3075, %v3077
    %v3291 = vcombine.low %v3079, %v3081
    %v3292 = vcombine.low %v3083, %v3085
    %v3293 = vcombine.low %v3087, %v3089
    %v3295 = vunpack.c.l.s4 1966171168
    %v3296 = vunpack.c.0.s8 %v3295
    %v3297 = vlaneseq
    %v3298 = vshrl.u32 %v3297, 7
    %v3299 = vsub.s32 %v3296, %v3298
    %v3300 = vrot.slane %v3290, %v3299
    %v3302 = vunpack.c.l.s4 1966171168
    %v3303 = vunpack.c.0.s8 %v3302
    %v3304 = vlaneseq
    %v3305 = vshrl.u32 %v3304, 7
    %v3306 = vsub.s32 %v3303, %v3305
    %v3307 = vrot.slane %v3291, %v3306
    %v3309 = vunpack.c.l.s4 1966171168
    %v3310 = vunpack.c.0.s8 %v3309
    %v3311 = vlaneseq
    %v3312 = vshrl.u32 %v3311, 7
    %v3313 = vsub.s32 %v3310, %v3312
    %v3314 = vrot.slane %v3292, %v3313
    %v3316 = vunpack.c.l.s4 1966171168
    %v3317 = vunpack.c.0.s8 %v3316
    %v3318 = vlaneseq
    %v3319 = vshrl.u32 %v3318, 7
    %v3320 = vsub.s32 %v3317, %v3319
    %v3321 = vrot.slane %v3293, %v3320
    %v3322 = vcombine.low %v3300, %v3307
    %v3323 = vcombine.low %v3314, %v3321
    %v3325 = vunpack.c.l.s4 1966171168
    %v3326 = vunpack.c.0.s8 %v3325
    %v3327 = vlaneseq
    %v3328 = vshrl.u32 %v3327, 7
    %v3329 = vsub.s32 %v3326, %v3328
    %v3330 = vrot.slane %v3322, %v3329
    %v3332 = vunpack.c.l.s4 1966171168
    %v3333 = vunpack.c.0.s8 %v3332
    %v3334 = vlaneseq
    %v3335 = vshrl.u32 %v3334, 7
    %v3336 = vsub.s32 %v3333, %v3335
    %v3337 = vrot.slane %v3323, %v3336
    %v3338 = vcombine.low %v3330, %v3337
    %v3339 = vcombine.low %v3091, %v3093
    %v3340 = vcombine.low %v3095, %v3097
    %v3341 = vcombine.low %v3099, %v3101
    %v3342 = vcombine.low %v3103, %v3105
    %v3344 = vunpack.c.l.s4 1966171168
    %v3345 = vunpack.c.0.s8 %v3344
    %v3346 = vlaneseq
    %v3347 = vshrl.u32 %v3346, 7
    %v3348 = vsub.s32 %v3345, %v3347
    %v3349 = vrot.slane %v3339, %v3348
    %v3351 = vunpack.c.l.s4 1966171168
    %v3352 = vunpack.c.0.s8 %v3351
    %v3353 = vlaneseq
    %v3354 = vshrl.u32 %v3353, 7
    %v3355 = vsub.s32 %v3352, %v3354
    %v3356 = vrot.slane %v3340, %v3355
    %v3358 = vunpack.c.l.s4 1966171168
    %v3359 = vunpack.c.0.s8 %v3358
    %v3360 = vlaneseq
    %v3361 = vshrl.u32 %v3360, 7
    %v3362 = vsub.s32 %v3359, %v3361
    %v3363 = vrot.slane %v3341, %v3362
    %v3365 = vunpack.c.l.s4 1966171168
    %v3366 = vunpack.c.0.s8 %v3365
    %v3367 = vlaneseq
    %v3368 = vshrl.u32 %v3367, 7
    %v3369 = vsub.s32 %v3366, %v3368
    %v3370 = vrot.slane %v3342, %v3369
    %v3371 = vcombine.low %v3349, %v3356
    %v3372 = vcombine.low %v3363, %v3370
    %v3374 = vunpack.c.l.s4 1966171168
    %v3375 = vunpack.c.0.s8 %v3374
    %v3376 = vlaneseq
    %v3377 = vshrl.u32 %v3376, 7
    %v3378 = vsub.s32 %v3375, %v3377
    %v3379 = vrot.slane %v3371, %v3378
    %v3381 = vunpack.c.l.s4 1966171168
    %v3382 = vunpack.c.0.s8 %v3381
    %v3383 = vlaneseq
    %v3384 = vshrl.u32 %v3383, 7
    %v3385 = vsub.s32 %v3382, %v3384
    %v3386 = vrot.slane %v3372, %v3385
    %v3387 = vcombine.low %v3379, %v3386
    %v3388 = vcombine.low %v3107, %v3109
    %v3389 = vcombine.low %v3111, %v3113
    %v3390 = vcombine.low %v3115, %v3117
    %v3391 = vcombine.low %v3119, %v3121
    %v3393 = vunpack.c.l.s4 1966171168
    %v3394 = vunpack.c.0.s8 %v3393
    %v3395 = vlaneseq
    %v3396 = vshrl.u32 %v3395, 7
    %v3397 = vsub.s32 %v3394, %v3396
    %v3398 = vrot.slane %v3388, %v3397
    %v3400 = vunpack.c.l.s4 1966171168
    %v3401 = vunpack.c.0.s8 %v3400
    %v3402 = vlaneseq
    %v3403 = vshrl.u32 %v3402, 7
    %v3404 = vsub.s32 %v3401, %v3403
    %v3405 = vrot.slane %v3389, %v3404
    %v3407 = vunpack.c.l.s4 1966171168
    %v3408 = vunpack.c.0.s8 %v3407
    %v3409 = vlaneseq
    %v3410 = vshrl.u32 %v3409, 7
    %v3411 = vsub.s32 %v3408, %v3410
    %v3412 = vrot.slane %v3390, %v3411
    %v3414 = vunpack.c.l.s4 1966171168
    %v3415 = vunpack.c.0.s8 %v3414
    %v3416 = vlaneseq
    %v3417 = vshrl.u32 %v3416, 7
    %v3418 = vsub.s32 %v3415, %v3417
    %v3419 = vrot.slane %v3391, %v3418
    %v3420 = vcombine.low %v3398, %v3405
    %v3421 = vcombine.low %v3412, %v3419
    %v3423 = vunpack.c.l.s4 1966171168
    %v3424 = vunpack.c.0.s8 %v3423
    %v3425 = vlaneseq
    %v3426 = vshrl.u32 %v3425, 7
    %v3427 = vsub.s32 %v3424, %v3426
    %v3428 = vrot.slane %v3420, %v3427
    %v3430 = vunpack.c.l.s4 1966171168
    %v3431 = vunpack.c.0.s8 %v3430
    %v3432 = vlaneseq
    %v3433 = vshrl.u32 %v3432, 7
    %v3434 = vsub.s32 %v3431, %v3433
    %v3435 = vrot.slane %v3421, %v3434
    %v3436 = vcombine.low %v3428, %v3435
    %v3437 = vcombine.low %v3123, %v3125
    %v3438 = vcombine.low %v3127, %v3129
    %v3439 = vcombine.low %v3131, %v3133
    %v3440 = vcombine.low %v3135, %v3137
    %v3442 = vunpack.c.l.s4 1966171168
    %v3443 = vunpack.c.0.s8 %v3442
    %v3444 = vlaneseq
    %v3445 = vshrl.u32 %v3444, 7
    %v3446 = vsub.s32 %v3443, %v3445
    %v3447 = vrot.slane %v3437, %v3446
    %v3449 = vunpack.c.l.s4 1966171168
    %v3450 = vunpack.c.0.s8 %v3449
    %v3451 = vlaneseq
    %v3452 = vshrl.u32 %v3451, 7
    %v3453 = vsub.s32 %v3450, %v3452
    %v3454 = vrot.slane %v3438, %v3453
    %v3456 = vunpack.c.l.s4 1966171168
    %v3457 = vunpack.c.0.s8 %v3456
    %v3458 = vlaneseq
    %v3459 = vshrl.u32 %v3458, 7
    %v3460 = vsub.s32 %v3457, %v3459
    %v3461 = vrot.slane %v3439, %v3460
    %v3463 = vunpack.c.l.s4 1966171168
    %v3464 = vunpack.c.0.s8 %v3463
    %v3465 = vlaneseq
    %v3466 = vshrl.u32 %v3465, 7
    %v3467 = vsub.s32 %v3464, %v3466
    %v3468 = vrot.slane %v3440, %v3467
    %v3469 = vcombine.low %v3447, %v3454
    %v3470 = vcombine.low %v3461, %v3468
    %v3472 = vunpack.c.l.s4 1966171168
    %v3473 = vunpack.c.0.s8 %v3472
    %v3474 = vlaneseq
    %v3475 = vshrl.u32 %v3474, 7
    %v3476 = vsub.s32 %v3473, %v3475
    %v3477 = vrot.slane %v3469, %v3476
    %v3479 = vunpack.c.l.s4 1966171168
    %v3480 = vunpack.c.0.s8 %v3479
    %v3481 = vlaneseq
    %v3482 = vshrl.u32 %v3481, 7
    %v3483 = vsub.s32 %v3480, %v3482
    %v3484 = vrot.slane %v3470, %v3483
    %v3485 = vcombine.low %v3477, %v3484
    %v3486 = vcombine.low %v3139, %v3141
    %v3488 = vunpack.c.l.s4 1966171168
    %v3489 = vunpack.c.0.s8 %v3488
    %v3490 = vlaneseq
    %v3491 = vshrl.u32 %v3490, 7
    %v3492 = vsub.s32 %v3489, %v3491
    %v3493 = vrot.slane %v3486, %v3492
    %v3495 = vunpack.c.l.s4 1966171168
    %v3496 = vunpack.c.0.s8 %v3495
    %v3497 = vlaneseq
    %v3498 = vshrl.u32 %v3497, 7
    %v3499 = vsub.s32 %v3496, %v3498
    %v3500 = vrot.slane %v3493, %v3499
    %3508 = vst [vmem:[#allocation8] sm:$0xff] %v3240
    %3509 = vst [vmem:[#allocation8 + $0x8] sm:$0xff] %v3289
    %3510 = vst [vmem:[#allocation8 + $0x10] sm:$0xff] %v3338
    %3511 = vst [vmem:[#allocation8 + $0x18] sm:$0xff] %v3387
    %3512 = vst [vmem:[#allocation8 + $0x20] sm:$0xff] %v3436
    %3513 = vst [vmem:[#allocation8 + $0x28] sm:$0xff] %v3485
    %v3514 = vlaneseq
    %vm3515 = vcmp.ge.s32.totalorder %v3514, 0
    %vm3516 = vcmp.lt.s32.totalorder %v3514, 256
    %vm3517 = vmand %vm3515, %vm3516
    %3518 = vst.msk [vmem:[#allocation8 + $0x30] sm:$0x3] %vm3517, %v3500
    // Predicated region
    $region26: #{tpu_custom_call.1} parent=1 // pred_check
      _
    $region27: #{tpu_custom_call.1} parent=1 // pred_check_branch
      %3520 = sbr.rel (0) target = $region29
    $region28: #{tpu_custom_call.1} parent=1 // pred_region
      %s3522 = ssub.s32 800, 800
      %3523 = vsyncadd [#allocation4], %s3522
      %s3525 = sshll.u32 [#allocation8], 4
      %s3526 = int_to_ptr.vmem [resolvable:$true] %s3525
      %3528 = dma.vmem_to_hbm [thread:$0]  %s3526, 800, %s3, [#allocation4]
    $region29: #{tpu_custom_call.1} parent=1 // pred_fallthru
      _
    // Predicated region
    $region30: #{tpu_custom_call.1} parent=1 // pred_check
      _
    $region31: #{tpu_custom_call.1} parent=1 // pred_check_branch
      %3530 = sbr.rel (0) target = $region33
    $region32: #{tpu_custom_call.1} parent=1 // pred_region
      %3531 = dma.done [#allocation4], 800
    $region33: #{tpu_custom_call.1} parent=1 // pred_fallthru
      _
    %3532 = vsyncpa [#allocation3], 1
    %3533 = vsyncpa [#allocation6], 1
    %3534 = vsyncpa [#allocation4], 1

</llo_original>
